<compile_context>
chip_gen: v7x
topology: tpu7x:2x2x1
jax: 0.10.0
libtpu: 0.0.40
codegen_flags: <defaults>
</compile_context>

<pallas_src>
import functools

import jax
import jax.numpy as jnp
from jax.experimental import pallas as pl
from jax.experimental.pallas import tpu as pltpu

# ----------------- tiny synthetic BERT config (lane-dense) -----------------
VOCAB = 256          # real model: 30522   (multiple of 128 -> lane-dense logits)
MAX_LEN = 16         # self.max_length
HIDDEN = 128         # real model: 768     (multiple of 128 -> lane-dense hidden)
N_HEADS = 2
HEAD_DIM = HIDDEN // N_HEADS
INTERMEDIATE = 512   # real model: 3072
N_LAYERS = 2         # real model: 12
LN_EPS = 1e-12
DTYPE = jnp.float32
WEIGHT_DTYPE = jnp.bfloat16   # MXU operand dtype (f32 accumulation)


# ----------------- in-kernel helpers (pure value math) -----------------
def _layer_norm(x, g, b):
    mean = jnp.mean(x, axis=-1, keepdims=True)
    var = jnp.mean(jnp.square(x - mean), axis=-1, keepdims=True)
    return (x - mean) * jax.lax.rsqrt(var + LN_EPS) * g + b


def _mm(x_f32, w_low):
    """bf16 MXU matmul with f32 accumulation."""
    return jnp.dot(x_f32.astype(w_low.dtype), w_low,
                   preferred_element_type=jnp.float32)


# ----------------- single fused forward kernel (one batch per grid step) ----
def _bert_forward_kernel(
    ids_ref, bias_ref,
    word_emb_ref, pos_emb_ref, type_emb_ref, emb_ln_g_ref, emb_ln_b_ref,
    qkv_w_ref, qkv_b_ref, o_w_ref, o_b_ref, ln1_g_ref, ln1_b_ref,
    ffn_w1_ref, ffn_b1_ref, ffn_w2_ref, ffn_b2_ref, ln2_g_ref, ln2_b_ref,
    mlm_w_ref, mlm_b_ref,
    mlm_out_ref, hid_out_ref,
    *, seq_len):
    S = seq_len
    H = HIDDEN

    # ---- embeddings: one-hot gather done on the MXU (exact, f32) ----
    ids = ids_ref[...]                                             # (S, 1) int32
    onehot = (jax.lax.broadcasted_iota(jnp.int32, (S, VOCAB), 1) == ids
              ).astype(jnp.float32)                                # (S, VOCAB)
    x = jnp.dot(onehot, word_emb_ref[...],
                preferred_element_type=jnp.float32)                # (S, H)
    x = x + pos_emb_ref[0:S, :] + type_emb_ref[0:1, :]
    x = _layer_norm(x, emb_ln_g_ref[...], emb_ln_b_ref[...])       # (S, H) f32

    attn_bias = bias_ref[0]                                        # (1, S) additive
    scale = 1.0 / (HEAD_DIM ** 0.5)

    for l in range(N_LAYERS):                                      # static unroll
        # ----- fused QKV projection: one MXU push, 3x larger N -----
        qkv = _mm(x, qkv_w_ref[l]) + qkv_b_ref[l]                  # (S, 3H) f32
        q = qkv[:, 0:H]
        k = qkv[:, H:2 * H]
        v = qkv[:, 2 * H:3 * H]

        # ----- per-head attention; head split in-kernel, output proj folded in
        o_w = o_w_ref[l]                                           # (H, H) bf16
        attn_out = jnp.zeros((S, H), jnp.float32)
        for h in range(N_HEADS):
            lo, hi = h * HEAD_DIM, (h + 1) * HEAD_DIM
            qh = q[:, lo:hi].astype(WEIGHT_DTYPE)                  # (S, dH)
            kh = k[:, lo:hi].astype(WEIGHT_DTYPE)
            vh = v[:, lo:hi].astype(WEIGHT_DTYPE)
            # scores = qh @ kh^T  (contract last dims, no explicit transpose)
            s = jax.lax.dot_general(qh, kh, (((1,), (1,)), ((), ())),
                                    preferred_element_type=jnp.float32)
            s = s * scale + attn_bias                              # (S, S)
            s_max = jnp.max(s, axis=-1, keepdims=True)
            p = jnp.exp(s - s_max)
            denom = jnp.maximum(jnp.sum(p, axis=-1, keepdims=True), 1e-30)
            p = p * pl.reciprocal(denom, approx=True)              # EUP, not VALU
            ctx = jnp.dot(p.astype(WEIGHT_DTYPE), vh,
                          preferred_element_type=jnp.float32)      # (S, dH)
            attn_out = attn_out + jnp.dot(ctx.astype(WEIGHT_DTYPE),
                                          o_w[lo:hi, :],
                                          preferred_element_type=jnp.float32)
        attn_out = attn_out + o_b_ref[l]
        x = _layer_norm(attn_out + x, ln1_g_ref[l], ln1_b_ref[l])

        # ----- feed-forward -----
        h1 = _mm(x, ffn_w1_ref[l]) + ffn_b1_ref[l]
        # TODO(synk): HF BERT uses exact erf GELU; tanh approximation kept here.
        h1 = jax.nn.gelu(h1, approximate=True)
        h2 = _mm(h1, ffn_w2_ref[l]) + ffn_b2_ref[l]
        x = _layer_norm(h2 + x, ln2_g_ref[l], ln2_b_ref[l])

    hid_out_ref[...] = x.astype(hid_out_ref.dtype)
    # mlm_logit = cp_MASK_head(last_hidden_state)
    logits = _mm(x, mlm_w_ref[...]) + mlm_b_ref[...]
    mlm_out_ref[...] = logits.astype(mlm_out_ref.dtype)


# ----------------- deterministic parameter init -----------------
def init_params(key):
    keys = iter(jax.random.split(key, 8 + 12 * N_LAYERS))

    def nrm(shape, dtype=jnp.float32):
        return (jax.random.normal(next(keys), shape, jnp.float32) * 0.02).astype(dtype)

    def stack(make):
        return jnp.stack([make() for _ in range(N_LAYERS)], axis=0)

    return {
        "word_emb": nrm((VOCAB, HIDDEN)),               # f32: exact one-hot gather
        "pos_emb": nrm((MAX_LEN, HIDDEN)),
        "type_emb": nrm((2, HIDDEN)),
        "emb_ln_g": jnp.ones((1, HIDDEN), DTYPE),
        "emb_ln_b": jnp.zeros((1, HIDDEN), DTYPE),
        # per-layer weights stacked along a leading layer axis; matmuls in bf16
        "qkv_w": stack(lambda: nrm((HIDDEN, 3 * HIDDEN), WEIGHT_DTYPE)),
        "qkv_b": jnp.zeros((N_LAYERS, 1, 3 * HIDDEN), DTYPE),
        "o_w": stack(lambda: nrm((HIDDEN, HIDDEN), WEIGHT_DTYPE)),
        "o_b": jnp.zeros((N_LAYERS, 1, HIDDEN), DTYPE),
        "ln1_g": jnp.ones((N_LAYERS, 1, HIDDEN), DTYPE),
        "ln1_b": jnp.zeros((N_LAYERS, 1, HIDDEN), DTYPE),
        "ffn_w1": stack(lambda: nrm((HIDDEN, INTERMEDIATE), WEIGHT_DTYPE)),
        "ffn_b1": jnp.zeros((N_LAYERS, 1, INTERMEDIATE), DTYPE),
        "ffn_w2": stack(lambda: nrm((INTERMEDIATE, HIDDEN), WEIGHT_DTYPE)),
        "ffn_b2": jnp.zeros((N_LAYERS, 1, HIDDEN), DTYPE),
        "ln2_g": jnp.ones((N_LAYERS, 1, HIDDEN), DTYPE),
        "ln2_b": jnp.zeros((N_LAYERS, 1, HIDDEN), DTYPE),
        # cp_MASK_head = nn.Linear(hidden, vocab)  (CP_flag branch)
        "mlm_w": nrm((HIDDEN, VOCAB), WEIGHT_DTYPE),
        "mlm_b": jnp.zeros((1, VOCAB), DTYPE),
    }


# ----------------- forward (mirrors BERTSentenceEncoder.forward) -----------
def bert_sentence_encoder_forward(params, word, mask):
    """inputs['word']: (B, S) int32 ids; inputs['mask']: (B, S) {0,1}.
    Returns (mlm_logit (B,S,VOCAB), last_hidden_state (B,S,HIDDEN))."""
    # TODO(synk): Ptuing=True path (inputs_embeds instead of token ids) not wired up.
    B, S = word.shape
    assert S % 8 == 0 and S <= MAX_LEN, "seq length must be multiple of 8 and <= MAX_LEN"

    ids = word.astype(jnp.int32).reshape(B * S, 1)
    attn_bias = ((1.0 - mask.astype(jnp.float32)) * -1e9).reshape(B, 1, S)

    kern = functools.partial(_bert_forward_kernel, seq_len=S)
    full2 = lambda b: (0, 0)
    full3 = lambda b: (0, 0, 0)
    L = N_LAYERS

    in_specs = [
        pl.BlockSpec((S, 1), lambda b: (b, 0)),             # ids (per-batch rows)
        pl.BlockSpec((1, 1, S), lambda b: (b, 0, 0)),       # additive attn bias
        pl.BlockSpec((VOCAB, HIDDEN), full2),               # word_emb
        pl.BlockSpec((MAX_LEN, HIDDEN), full2),             # pos_emb
        pl.BlockSpec((2, HIDDEN), full2),                   # type_emb
        pl.BlockSpec((1, HIDDEN), full2),                   # emb_ln_g
        pl.BlockSpec((1, HIDDEN), full2),                   # emb_ln_b
        pl.BlockSpec((L, HIDDEN, 3 * HIDDEN), full3),       # qkv_w
        pl.BlockSpec((L, 1, 3 * HIDDEN), full3),            # qkv_b
        pl.BlockSpec((L, HIDDEN, HIDDEN), full3),           # o_w
        pl.BlockSpec((L, 1, HIDDEN), full3),                # o_b
        pl.BlockSpec((L, 1, HIDDEN), full3),                # ln1_g
        pl.BlockSpec((L, 1, HIDDEN), full3),                # ln1_b
        pl.BlockSpec((L, HIDDEN, INTERMEDIATE), full3),     # ffn_w1
        pl.BlockSpec((L, 1, INTERMEDIATE), full3),          # ffn_b1
        pl.BlockSpec((L, INTERMEDIATE, HIDDEN), full3),     # ffn_w2
        pl.BlockSpec((L, 1, HIDDEN), full3),                # ffn_b2
        pl.BlockSpec((L, 1, HIDDEN), full3),                # ln2_g
        pl.BlockSpec((L, 1, HIDDEN), full3),                # ln2_b
        pl.BlockSpec((HIDDEN, VOCAB), full2),               # mlm_w
        pl.BlockSpec((1, VOCAB), full2),                    # mlm_b
    ]
    out_specs = [
        pl.BlockSpec((S, VOCAB), lambda b: (b, 0)),
        pl.BlockSpec((S, HIDDEN), lambda b: (b, 0)),
    ]
    out_shape = [
        jax.ShapeDtypeStruct((B * S, VOCAB), DTYPE),
        jax.ShapeDtypeStruct((B * S, HIDDEN), DTYPE),
    ]

    mlm_flat, hid_flat = pl.pallas_call(
        kern,
        out_shape=out_shape,
        grid=(B,),
        in_specs=in_specs,
        out_specs=out_specs,
        compiler_params=pltpu.CompilerParams(
            dimension_semantics=("parallel",)),   # 2 TCs on v7x each take a batch
    )(ids, attn_bias,
      params["word_emb"], params["pos_emb"], params["type_emb"],
      params["emb_ln_g"], params["emb_ln_b"],
      params["qkv_w"], params["qkv_b"], params["o_w"], params["o_b"],
      params["ln1_g"], params["ln1_b"],
      params["ffn_w1"], params["ffn_b1"], params["ffn_w2"], params["ffn_b2"],
      params["ln2_g"], params["ln2_b"],
      params["mlm_w"], params["mlm_b"])

    return mlm_flat.reshape(B, S, VOCAB), hid_flat.reshape(B, S, HIDDEN)


if __name__ == "__main__":
    key = jax.random.PRNGKey(0)
    k_param, k_word = jax.random.split(key)

    params = init_params(k_param)

    B, S = 2, 8
    word = jax.random.randint(k_word, (B, S), 0, VOCAB, dtype=jnp.int32)
    mask = jnp.ones((B, S), dtype=jnp.int32).at[1, 6:].set(0)   # pad last 2 tokens of sample 1

    fwd = jax.jit(bert_sentence_encoder_forward)
    mlm_logit, last_hidden = fwd(params, word, mask)
    jax.block_until_ready((mlm_logit, last_hidden))

    assert mlm_logit.shape == (B, S, VOCAB)
    assert last_hidden.shape == (B, S, HIDDEN)
    assert bool(jnp.all(jnp.isfinite(mlm_logit)))
    assert bool(jnp.all(jnp.isfinite(last_hidden)))
    print("KERNEL_OK")
</pallas_src>

<mosaic_0001>
module attributes {stable_mosaic.version = 11 : i64} {
  func.func @_bert_forward_kernel(%arg0: i32, %arg1: memref<8x1xi32, #tpu.memory_space<vmem>>, %arg2: memref<1x1x8xf32, #tpu.memory_space<vmem>>, %arg3: memref<256x128xf32, #tpu.memory_space<vmem>>, %arg4: memref<16x128xf32, #tpu.memory_space<vmem>>, %arg5: memref<2x128xf32, #tpu.memory_space<vmem>>, %arg6: memref<1x128xf32, #tpu.memory_space<vmem>>, %arg7: memref<1x128xf32, #tpu.memory_space<vmem>>, %arg8: memref<2x128x384xbf16, #tpu.memory_space<vmem>>, %arg9: memref<2x1x384xf32, #tpu.memory_space<vmem>>, %arg10: memref<2x128x128xbf16, #tpu.memory_space<vmem>>, %arg11: memref<2x1x128xf32, #tpu.memory_space<vmem>>, %arg12: memref<2x1x128xf32, #tpu.memory_space<vmem>>, %arg13: memref<2x1x128xf32, #tpu.memory_space<vmem>>, %arg14: memref<2x128x512xbf16, #tpu.memory_space<vmem>>, %arg15: memref<2x1x512xf32, #tpu.memory_space<vmem>>, %arg16: memref<2x512x128xbf16, #tpu.memory_space<vmem>>, %arg17: memref<2x1x128xf32, #tpu.memory_space<vmem>>, %arg18: memref<2x1x128xf32, #tpu.memory_space<vmem>>, %arg19: memref<2x1x128xf32, #tpu.memory_space<vmem>>, %arg20: memref<128x256xbf16, #tpu.memory_space<vmem>>, %arg21: memref<1x256xf32, #tpu.memory_space<vmem>>, %arg22: memref<8x256xf32, #tpu.memory_space<vmem>>, %arg23: memref<8x128xf32, #tpu.memory_space<vmem>>) attributes {dimension_semantics = [#tpu.dimension_semantics<parallel>], iteration_bounds = array<i64: 2>, scalar_prefetch = 0 : i64, scratch_operands = 0 : i64, tpu.core_type = #tpu.core_type<tc>, window_params = [{transform_indices = @transform_0, window_bounds = array<i64: 8, 1>}, {transform_indices = @transform_1, window_bounds = array<i64: 1, 1, 8>}, {pipeline_mode = #tpu.pipeline_mode<synchronous>, transform_indices = @transform_2, window_bounds = array<i64: 256, 128>}, {pipeline_mode = #tpu.pipeline_mode<synchronous>, transform_indices = @transform_3, window_bounds = array<i64: 16, 128>}, {pipeline_mode = #tpu.pipeline_mode<synchronous>, transform_indices = @transform_4, window_bounds = array<i64: 2, 128>}, {pipeline_mode = #tpu.pipeline_mode<synchronous>, transform_indices = @transform_5, window_bounds = array<i64: 1, 128>}, {pipeline_mode = #tpu.pipeline_mode<synchronous>, transform_indices = @transform_6, window_bounds = array<i64: 1, 128>}, {pipeline_mode = #tpu.pipeline_mode<synchronous>, transform_indices = @transform_7, window_bounds = array<i64: 2, 128, 384>}, {pipeline_mode = #tpu.pipeline_mode<synchronous>, transform_indices = @transform_8, window_bounds = array<i64: 2, 1, 384>}, {pipeline_mode = #tpu.pipeline_mode<synchronous>, transform_indices = @transform_9, window_bounds = array<i64: 2, 128, 128>}, {pipeline_mode = #tpu.pipeline_mode<synchronous>, transform_indices = @transform_10, window_bounds = array<i64: 2, 1, 128>}, {pipeline_mode = #tpu.pipeline_mode<synchronous>, transform_indices = @transform_11, window_bounds = array<i64: 2, 1, 128>}, {pipeline_mode = #tpu.pipeline_mode<synchronous>, transform_indices = @transform_12, window_bounds = array<i64: 2, 1, 128>}, {pipeline_mode = #tpu.pipeline_mode<synchronous>, transform_indices = @transform_13, window_bounds = array<i64: 2, 128, 512>}, {pipeline_mode = #tpu.pipeline_mode<synchronous>, transform_indices = @transform_14, window_bounds = array<i64: 2, 1, 512>}, {pipeline_mode = #tpu.pipeline_mode<synchronous>, transform_indices = @transform_15, window_bounds = array<i64: 2, 512, 128>}, {pipeline_mode = #tpu.pipeline_mode<synchronous>, transform_indices = @transform_16, window_bounds = array<i64: 2, 1, 128>}, {pipeline_mode = #tpu.pipeline_mode<synchronous>, transform_indices = @transform_17, window_bounds = array<i64: 2, 1, 128>}, {pipeline_mode = #tpu.pipeline_mode<synchronous>, transform_indices = @transform_18, window_bounds = array<i64: 2, 1, 128>}, {pipeline_mode = #tpu.pipeline_mode<synchronous>, transform_indices = @transform_19, window_bounds = array<i64: 128, 256>}, {pipeline_mode = #tpu.pipeline_mode<synchronous>, transform_indices = @transform_20, window_bounds = array<i64: 1, 256>}, {transform_indices = @transform_21, window_bounds = array<i64: 8, 256>}, {transform_indices = @transform_22, window_bounds = array<i64: 8, 128>}]} {
    %c0 = arith.constant 0 : index
    %c0_0 = arith.constant 0 : index
    %0 = vector.load %arg1[%c0, %c0_0] : memref<8x1xi32, #tpu.memory_space<vmem>>, vector<8x1xi32>
    %1 = tpu.iota {dimensions = array<i32: 1>} : vector<8x256xi32>
    %2 = vector.broadcast %0 : vector<8x1xi32> to vector<8x256xi32>
    %3 = arith.cmpi eq, %1, %2 : vector<8x256xi32>
    %4 = arith.extui %3 : vector<8x256xi1> to vector<8x256xi32>
    %5 = arith.sitofp %4 : vector<8x256xi32> to vector<8x256xf32>
    %c0_1 = arith.constant 0 : index
    %c0_2 = arith.constant 0 : index
    %6 = vector.load %arg3[%c0_1, %c0_2] : memref<256x128xf32, #tpu.memory_space<vmem>>, vector<256x128xf32>
    %cst = arith.constant dense<0.000000e+00> : vector<8x128xf32>
    %7 = tpu.matmul %5, %6, %cst {dimension_numbers = #tpu.dot_dimension_numbers<[1], [0], [0], [1], [0, 0, 1, 1], [], []>} : vector<8x256xf32>, vector<256x128xf32>, vector<8x128xf32> -> vector<8x128xf32>
    %c0_3 = arith.constant 0 : index
    %c0_4 = arith.constant 0 : index
    %8 = vector.load %arg4[%c0_3, %c0_4] : memref<16x128xf32, #tpu.memory_space<vmem>>, vector<8x128xf32>
    %9 = arith.addf %7, %8 : vector<8x128xf32>
    %c0_5 = arith.constant 0 : index
    %c0_6 = arith.constant 0 : index
    %10 = vector.load %arg5[%c0_5, %c0_6] : memref<2x128xf32, #tpu.memory_space<vmem>>, vector<1x128xf32>
    %11 = vector.broadcast %10 : vector<1x128xf32> to vector<8x128xf32>
    %12 = arith.addf %9, %11 : vector<8x128xf32>
    %c0_7 = arith.constant 0 : index
    %c0_8 = arith.constant 0 : index
    %13 = vector.load %arg6[%c0_7, %c0_8] : memref<1x128xf32, #tpu.memory_space<vmem>>, vector<1x128xf32>
    %c0_9 = arith.constant 0 : index
    %c0_10 = arith.constant 0 : index
    %14 = vector.load %arg7[%c0_9, %c0_10] : memref<1x128xf32, #tpu.memory_space<vmem>>, vector<1x128xf32>
    %cst_11 = arith.constant dense<0.000000e+00> : vector<8xf32>
    %15 = vector.multi_reduction <add>, %12, %cst_11 [1] : vector<8x128xf32> to vector<8xf32>
    %16 = vector.shape_cast %15 : vector<8xf32> to vector<8x1xf32>
    %cst_12 = arith.constant 1.280000e+02 : f32
    %17 = vector.broadcast %cst_12 : f32 to vector<8x1xf32>
    %18 = arith.divf %16, %17 : vector<8x1xf32>
    %19 = vector.broadcast %18 : vector<8x1xf32> to vector<8x128xf32>
    %20 = arith.subf %12, %19 : vector<8x128xf32>
    %21 = arith.mulf %20, %20 : vector<8x128xf32>
    %cst_13 = arith.constant dense<0.000000e+00> : vector<8xf32>
    %22 = vector.multi_reduction <add>, %21, %cst_13 [1] : vector<8x128xf32> to vector<8xf32>
    %23 = vector.shape_cast %22 : vector<8xf32> to vector<8x1xf32>
    %cst_14 = arith.constant 1.280000e+02 : f32
    %24 = vector.broadcast %cst_14 : f32 to vector<8x1xf32>
    %25 = arith.divf %23, %24 : vector<8x1xf32>
    %26 = vector.broadcast %18 : vector<8x1xf32> to vector<8x128xf32>
    %27 = arith.subf %12, %26 : vector<8x128xf32>
    %cst_15 = arith.constant 9.99999996E-13 : f32
    %28 = vector.broadcast %cst_15 : f32 to vector<8x1xf32>
    %29 = arith.addf %25, %28 : vector<8x1xf32>
    %30 = math.rsqrt %29 : vector<8x1xf32>
    %31 = vector.broadcast %30 : vector<8x1xf32> to vector<8x128xf32>
    %32 = arith.mulf %27, %31 : vector<8x128xf32>
    %33 = vector.broadcast %13 : vector<1x128xf32> to vector<8x128xf32>
    %34 = arith.mulf %32, %33 : vector<8x128xf32>
    %35 = vector.broadcast %14 : vector<1x128xf32> to vector<8x128xf32>
    %36 = arith.addf %34, %35 : vector<8x128xf32>
    %c0_16 = arith.constant 0 : index
    %c0_17 = arith.constant 0 : index
    %c0_18 = arith.constant 0 : index
    %37 = vector.load %arg2[%c0_16, %c0_17, %c0_18] : memref<1x1x8xf32, #tpu.memory_space<vmem>>, vector<1x1x8xf32>
    %38 = vector.shape_cast %37 : vector<1x1x8xf32> to vector<1x8xf32>
    %c0_19 = arith.constant 0 : index
    %c0_20 = arith.constant 0 : index
    %c0_21 = arith.constant 0 : index
    %39 = vector.load %arg8[%c0_19, %c0_20, %c0_21] : memref<2x128x384xbf16, #tpu.memory_space<vmem>>, vector<1x128x384xbf16>
    %40 = vector.shape_cast %39 : vector<1x128x384xbf16> to vector<128x384xbf16>
    %41 = arith.truncf %36 : vector<8x128xf32> to vector<8x128xbf16>
    %cst_22 = arith.constant dense<0.000000e+00> : vector<8x384xf32>
    %42 = tpu.matmul %41, %40, %cst_22 {dimension_numbers = #tpu.dot_dimension_numbers<[1], [0], [0], [1], [0, 0, 1, 1], [], []>} : vector<8x128xbf16>, vector<128x384xbf16>, vector<8x384xf32> -> vector<8x384xf32>
    %c0_23 = arith.constant 0 : index
    %c0_24 = arith.constant 0 : index
    %c0_25 = arith.constant 0 : index
    %43 = vector.load %arg9[%c0_23, %c0_24, %c0_25] : memref<2x1x384xf32, #tpu.memory_space<vmem>>, vector<1x1x384xf32>
    %44 = vector.shape_cast %43 : vector<1x1x384xf32> to vector<1x384xf32>
    %45 = vector.broadcast %44 : vector<1x384xf32> to vector<8x384xf32>
    %46 = arith.addf %42, %45 : vector<8x384xf32>
    %47 = vector.extract_strided_slice %46 {offsets = [0, 0], sizes = [8, 128], strides = [1, 1]} : vector<8x384xf32> to vector<8x128xf32>
    %48 = vector.extract_strided_slice %46 {offsets = [0, 128], sizes = [8, 128], strides = [1, 1]} : vector<8x384xf32> to vector<8x128xf32>
    %49 = vector.extract_strided_slice %46 {offsets = [0, 256], sizes = [8, 128], strides = [1, 1]} : vector<8x384xf32> to vector<8x128xf32>
    %c0_26 = arith.constant 0 : index
    %c0_27 = arith.constant 0 : index
    %c0_28 = arith.constant 0 : index
    %50 = vector.load %arg10[%c0_26, %c0_27, %c0_28] : memref<2x128x128xbf16, #tpu.memory_space<vmem>>, vector<1x128x128xbf16>
    %51 = vector.shape_cast %50 : vector<1x128x128xbf16> to vector<128x128xbf16>
    %cst_29 = arith.constant 0.000000e+00 : f32
    %52 = vector.broadcast %cst_29 : f32 to vector<8x128xf32>
    %53 = vector.extract_strided_slice %47 {offsets = [0, 0], sizes = [8, 64], strides = [1, 1]} : vector<8x128xf32> to vector<8x64xf32>
    %54 = arith.truncf %53 : vector<8x64xf32> to vector<8x64xbf16>
    %55 = vector.extract_strided_slice %48 {offsets = [0, 0], sizes = [8, 64], strides = [1, 1]} : vector<8x128xf32> to vector<8x64xf32>
    %56 = arith.truncf %55 : vector<8x64xf32> to vector<8x64xbf16>
    %57 = vector.extract_strided_slice %49 {offsets = [0, 0], sizes = [8, 64], strides = [1, 1]} : vector<8x128xf32> to vector<8x64xf32>
    %58 = arith.truncf %57 : vector<8x64xf32> to vector<8x64xbf16>
    %cst_30 = arith.constant dense<0.000000e+00> : vector<8x8xf32>
    %59 = tpu.matmul %54, %56, %cst_30 {dimension_numbers = #tpu.dot_dimension_numbers<[1], [1], [0], [0], [0, 0, 1, 0], [], []>} : vector<8x64xbf16>, vector<8x64xbf16>, vector<8x8xf32> -> vector<8x8xf32>
    %cst_31 = arith.constant 1.250000e-01 : f32
    %60 = vector.broadcast %cst_31 : f32 to vector<8x8xf32>
    %61 = arith.mulf %59, %60 : vector<8x8xf32>
    %62 = vector.broadcast %38 : vector<1x8xf32> to vector<8x8xf32>
    %63 = arith.addf %61, %62 : vector<8x8xf32>
    %cst_32 = arith.constant dense<0xFF800000> : vector<8xf32>
    %64 = vector.multi_reduction <maximumf>, %63, %cst_32 [1] : vector<8x8xf32> to vector<8xf32>
    %65 = vector.shape_cast %64 : vector<8xf32> to vector<8x1xf32>
    %66 = vector.broadcast %65 : vector<8x1xf32> to vector<8x8xf32>
    %67 = arith.subf %63, %66 : vector<8x8xf32>
    %68 = math.exp %67 : vector<8x8xf32>
    %cst_33 = arith.constant dense<0.000000e+00> : vector<8xf32>
    %69 = vector.multi_reduction <add>, %68, %cst_33 [1] : vector<8x8xf32> to vector<8xf32>
    %70 = vector.shape_cast %69 : vector<8xf32> to vector<8x1xf32>
    %cst_34 = arith.constant 1.000000e-30 : f32
    %71 = vector.broadcast %cst_34 : f32 to vector<8x1xf32>
    %72 = arith.maximumf %70, %71 : vector<8x1xf32>
    %73 = tpu.reciprocal %72 {approx = true} : vector<8x1xf32> -> vector<8x1xf32>
    %74 = vector.broadcast %73 : vector<8x1xf32> to vector<8x8xf32>
    %75 = arith.mulf %68, %74 : vector<8x8xf32>
    %76 = arith.truncf %75 : vector<8x8xf32> to vector<8x8xbf16>
    %cst_35 = arith.constant dense<0.000000e+00> : vector<8x64xf32>
    %77 = tpu.matmul %76, %58, %cst_35 {dimension_numbers = #tpu.dot_dimension_numbers<[1], [0], [0], [1], [0, 0, 1, 1], [], []>} : vector<8x8xbf16>, vector<8x64xbf16>, vector<8x64xf32> -> vector<8x64xf32>
    %78 = arith.truncf %77 : vector<8x64xf32> to vector<8x64xbf16>
    %79 = vector.extract_strided_slice %51 {offsets = [0, 0], sizes = [64, 128], strides = [1, 1]} : vector<128x128xbf16> to vector<64x128xbf16>
    %cst_36 = arith.constant dense<0.000000e+00> : vector<8x128xf32>
    %80 = tpu.matmul %78, %79, %cst_36 {dimension_numbers = #tpu.dot_dimension_numbers<[1], [0], [0], [1], [0, 0, 1, 1], [], []>} : vector<8x64xbf16>, vector<64x128xbf16>, vector<8x128xf32> -> vector<8x128xf32>
    %81 = arith.addf %52, %80 : vector<8x128xf32>
    %82 = vector.extract_strided_slice %47 {offsets = [0, 64], sizes = [8, 64], strides = [1, 1]} : vector<8x128xf32> to vector<8x64xf32>
    %83 = arith.truncf %82 : vector<8x64xf32> to vector<8x64xbf16>
    %84 = vector.extract_strided_slice %48 {offsets = [0, 64], sizes = [8, 64], strides = [1, 1]} : vector<8x128xf32> to vector<8x64xf32>
    %85 = arith.truncf %84 : vector<8x64xf32> to vector<8x64xbf16>
    %86 = vector.extract_strided_slice %49 {offsets = [0, 64], sizes = [8, 64], strides = [1, 1]} : vector<8x128xf32> to vector<8x64xf32>
    %87 = arith.truncf %86 : vector<8x64xf32> to vector<8x64xbf16>
    %cst_37 = arith.constant dense<0.000000e+00> : vector<8x8xf32>
    %88 = tpu.matmul %83, %85, %cst_37 {dimension_numbers = #tpu.dot_dimension_numbers<[1], [1], [0], [0], [0, 0, 1, 0], [], []>} : vector<8x64xbf16>, vector<8x64xbf16>, vector<8x8xf32> -> vector<8x8xf32>
    %cst_38 = arith.constant 1.250000e-01 : f32
    %89 = vector.broadcast %cst_38 : f32 to vector<8x8xf32>
    %90 = arith.mulf %88, %89 : vector<8x8xf32>
    %91 = vector.broadcast %38 : vector<1x8xf32> to vector<8x8xf32>
    %92 = arith.addf %90, %91 : vector<8x8xf32>
    %cst_39 = arith.constant dense<0xFF800000> : vector<8xf32>
    %93 = vector.multi_reduction <maximumf>, %92, %cst_39 [1] : vector<8x8xf32> to vector<8xf32>
    %94 = vector.shape_cast %93 : vector<8xf32> to vector<8x1xf32>
    %95 = vector.broadcast %94 : vector<8x1xf32> to vector<8x8xf32>
    %96 = arith.subf %92, %95 : vector<8x8xf32>
    %97 = math.exp %96 : vector<8x8xf32>
    %cst_40 = arith.constant dense<0.000000e+00> : vector<8xf32>
    %98 = vector.multi_reduction <add>, %97, %cst_40 [1] : vector<8x8xf32> to vector<8xf32>
    %99 = vector.shape_cast %98 : vector<8xf32> to vector<8x1xf32>
    %cst_41 = arith.constant 1.000000e-30 : f32
    %100 = vector.broadcast %cst_41 : f32 to vector<8x1xf32>
    %101 = arith.maximumf %99, %100 : vector<8x1xf32>
    %102 = tpu.reciprocal %101 {approx = true} : vector<8x1xf32> -> vector<8x1xf32>
    %103 = vector.broadcast %102 : vector<8x1xf32> to vector<8x8xf32>
    %104 = arith.mulf %97, %103 : vector<8x8xf32>
    %105 = arith.truncf %104 : vector<8x8xf32> to vector<8x8xbf16>
    %cst_42 = arith.constant dense<0.000000e+00> : vector<8x64xf32>
    %106 = tpu.matmul %105, %87, %cst_42 {dimension_numbers = #tpu.dot_dimension_numbers<[1], [0], [0], [1], [0, 0, 1, 1], [], []>} : vector<8x8xbf16>, vector<8x64xbf16>, vector<8x64xf32> -> vector<8x64xf32>
    %107 = arith.truncf %106 : vector<8x64xf32> to vector<8x64xbf16>
    %108 = vector.extract_strided_slice %51 {offsets = [64, 0], sizes = [64, 128], strides = [1, 1]} : vector<128x128xbf16> to vector<64x128xbf16>
    %cst_43 = arith.constant dense<0.000000e+00> : vector<8x128xf32>
    %109 = tpu.matmul %107, %108, %cst_43 {dimension_numbers = #tpu.dot_dimension_numbers<[1], [0], [0], [1], [0, 0, 1, 1], [], []>} : vector<8x64xbf16>, vector<64x128xbf16>, vector<8x128xf32> -> vector<8x128xf32>
    %110 = arith.addf %81, %109 : vector<8x128xf32>
    %c0_44 = arith.constant 0 : index
    %c0_45 = arith.constant 0 : index
    %c0_46 = arith.constant 0 : index
    %111 = vector.load %arg11[%c0_44, %c0_45, %c0_46] : memref<2x1x128xf32, #tpu.memory_space<vmem>>, vector<1x1x128xf32>
    %112 = vector.shape_cast %111 : vector<1x1x128xf32> to vector<1x128xf32>
    %113 = vector.broadcast %112 : vector<1x128xf32> to vector<8x128xf32>
    %114 = arith.addf %110, %113 : vector<8x128xf32>
    %115 = arith.addf %114, %36 : vector<8x128xf32>
    %c0_47 = arith.constant 0 : index
    %c0_48 = arith.constant 0 : index
    %c0_49 = arith.constant 0 : index
    %116 = vector.load %arg12[%c0_47, %c0_48, %c0_49] : memref<2x1x128xf32, #tpu.memory_space<vmem>>, vector<1x1x128xf32>
    %117 = vector.shape_cast %116 : vector<1x1x128xf32> to vector<1x128xf32>
    %c0_50 = arith.constant 0 : index
    %c0_51 = arith.constant 0 : index
    %c0_52 = arith.constant 0 : index
    %118 = vector.load %arg13[%c0_50, %c0_51, %c0_52] : memref<2x1x128xf32, #tpu.memory_space<vmem>>, vector<1x1x128xf32>
    %119 = vector.shape_cast %118 : vector<1x1x128xf32> to vector<1x128xf32>
    %cst_53 = arith.constant dense<0.000000e+00> : vector<8xf32>
    %120 = vector.multi_reduction <add>, %115, %cst_53 [1] : vector<8x128xf32> to vector<8xf32>
    %121 = vector.shape_cast %120 : vector<8xf32> to vector<8x1xf32>
    %cst_54 = arith.constant 1.280000e+02 : f32
    %122 = vector.broadcast %cst_54 : f32 to vector<8x1xf32>
    %123 = arith.divf %121, %122 : vector<8x1xf32>
    %124 = vector.broadcast %123 : vector<8x1xf32> to vector<8x128xf32>
    %125 = arith.subf %115, %124 : vector<8x128xf32>
    %126 = arith.mulf %125, %125 : vector<8x128xf32>
    %cst_55 = arith.constant dense<0.000000e+00> : vector<8xf32>
    %127 = vector.multi_reduction <add>, %126, %cst_55 [1] : vector<8x128xf32> to vector<8xf32>
    %128 = vector.shape_cast %127 : vector<8xf32> to vector<8x1xf32>
    %cst_56 = arith.constant 1.280000e+02 : f32
    %129 = vector.broadcast %cst_56 : f32 to vector<8x1xf32>
    %130 = arith.divf %128, %129 : vector<8x1xf32>
    %131 = vector.broadcast %123 : vector<8x1xf32> to vector<8x128xf32>
    %132 = arith.subf %115, %131 : vector<8x128xf32>
    %cst_57 = arith.constant 9.99999996E-13 : f32
    %133 = vector.broadcast %cst_57 : f32 to vector<8x1xf32>
    %134 = arith.addf %130, %133 : vector<8x1xf32>
    %135 = math.rsqrt %134 : vector<8x1xf32>
    %136 = vector.broadcast %135 : vector<8x1xf32> to vector<8x128xf32>
    %137 = arith.mulf %132, %136 : vector<8x128xf32>
    %138 = vector.broadcast %117 : vector<1x128xf32> to vector<8x128xf32>
    %139 = arith.mulf %137, %138 : vector<8x128xf32>
    %140 = vector.broadcast %119 : vector<1x128xf32> to vector<8x128xf32>
    %141 = arith.addf %139, %140 : vector<8x128xf32>
    %c0_58 = arith.constant 0 : index
    %c0_59 = arith.constant 0 : index
    %c0_60 = arith.constant 0 : index
    %142 = vector.load %arg14[%c0_58, %c0_59, %c0_60] : memref<2x128x512xbf16, #tpu.memory_space<vmem>>, vector<1x128x512xbf16>
    %143 = vector.shape_cast %142 : vector<1x128x512xbf16> to vector<128x512xbf16>
    %144 = arith.truncf %141 : vector<8x128xf32> to vector<8x128xbf16>
    %cst_61 = arith.constant dense<0.000000e+00> : vector<8x512xf32>
    %145 = tpu.matmul %144, %143, %cst_61 {dimension_numbers = #tpu.dot_dimension_numbers<[1], [0], [0], [1], [0, 0, 1, 1], [], []>} : vector<8x128xbf16>, vector<128x512xbf16>, vector<8x512xf32> -> vector<8x512xf32>
    %c0_62 = arith.constant 0 : index
    %c0_63 = arith.constant 0 : index
    %c0_64 = arith.constant 0 : index
    %146 = vector.load %arg15[%c0_62, %c0_63, %c0_64] : memref<2x1x512xf32, #tpu.memory_space<vmem>>, vector<1x1x512xf32>
    %147 = vector.shape_cast %146 : vector<1x1x512xf32> to vector<1x512xf32>
    %148 = vector.broadcast %147 : vector<1x512xf32> to vector<8x512xf32>
    %149 = arith.addf %145, %148 : vector<8x512xf32>
    %150 = arith.mulf %149, %149 : vector<8x512xf32>
    %151 = arith.mulf %149, %150 : vector<8x512xf32>
    %cst_65 = arith.constant 4.471500e-02 : f32
    %152 = vector.broadcast %cst_65 : f32 to vector<8x512xf32>
    %153 = arith.mulf %152, %151 : vector<8x512xf32>
    %154 = arith.addf %149, %153 : vector<8x512xf32>
    %cst_66 = arith.constant 0.797884583 : f32
    %155 = vector.broadcast %cst_66 : f32 to vector<8x512xf32>
    %156 = arith.mulf %155, %154 : vector<8x512xf32>
    %157 = math.tanh %156 : vector<8x512xf32>
    %cst_67 = arith.constant 1.000000e+00 : f32
    %158 = vector.broadcast %cst_67 : f32 to vector<8x512xf32>
    %159 = arith.addf %158, %157 : vector<8x512xf32>
    %cst_68 = arith.constant 5.000000e-01 : f32
    %160 = vector.broadcast %cst_68 : f32 to vector<8x512xf32>
    %161 = arith.mulf %160, %159 : vector<8x512xf32>
    %162 = arith.mulf %149, %161 : vector<8x512xf32>
    %c0_69 = arith.constant 0 : index
    %c0_70 = arith.constant 0 : index
    %c0_71 = arith.constant 0 : index
    %163 = vector.load %arg16[%c0_69, %c0_70, %c0_71] : memref<2x512x128xbf16, #tpu.memory_space<vmem>>, vector<1x512x128xbf16>
    %164 = vector.shape_cast %163 : vector<1x512x128xbf16> to vector<512x128xbf16>
    %165 = arith.truncf %162 : vector<8x512xf32> to vector<8x512xbf16>
    %cst_72 = arith.constant dense<0.000000e+00> : vector<8x128xf32>
    %166 = tpu.matmul %165, %164, %cst_72 {dimension_numbers = #tpu.dot_dimension_numbers<[1], [0], [0], [1], [0, 0, 1, 1], [], []>} : vector<8x512xbf16>, vector<512x128xbf16>, vector<8x128xf32> -> vector<8x128xf32>
    %c0_73 = arith.constant 0 : index
    %c0_74 = arith.constant 0 : index
    %c0_75 = arith.constant 0 : index
    %167 = vector.load %arg17[%c0_73, %c0_74, %c0_75] : memref<2x1x128xf32, #tpu.memory_space<vmem>>, vector<1x1x128xf32>
    %168 = vector.shape_cast %167 : vector<1x1x128xf32> to vector<1x128xf32>
    %169 = vector.broadcast %168 : vector<1x128xf32> to vector<8x128xf32>
    %170 = arith.addf %166, %169 : vector<8x128xf32>
    %171 = arith.addf %170, %141 : vector<8x128xf32>
    %c0_76 = arith.constant 0 : index
    %c0_77 = arith.constant 0 : index
    %c0_78 = arith.constant 0 : index
    %172 = vector.load %arg18[%c0_76, %c0_77, %c0_78] : memref<2x1x128xf32, #tpu.memory_space<vmem>>, vector<1x1x128xf32>
    %173 = vector.shape_cast %172 : vector<1x1x128xf32> to vector<1x128xf32>
    %c0_79 = arith.constant 0 : index
    %c0_80 = arith.constant 0 : index
    %c0_81 = arith.constant 0 : index
    %174 = vector.load %arg19[%c0_79, %c0_80, %c0_81] : memref<2x1x128xf32, #tpu.memory_space<vmem>>, vector<1x1x128xf32>
    %175 = vector.shape_cast %174 : vector<1x1x128xf32> to vector<1x128xf32>
    %cst_82 = arith.constant dense<0.000000e+00> : vector<8xf32>
    %176 = vector.multi_reduction <add>, %171, %cst_82 [1] : vector<8x128xf32> to vector<8xf32>
    %177 = vector.shape_cast %176 : vector<8xf32> to vector<8x1xf32>
    %cst_83 = arith.constant 1.280000e+02 : f32
    %178 = vector.broadcast %cst_83 : f32 to vector<8x1xf32>
    %179 = arith.divf %177, %178 : vector<8x1xf32>
    %180 = vector.broadcast %179 : vector<8x1xf32> to vector<8x128xf32>
    %181 = arith.subf %171, %180 : vector<8x128xf32>
    %182 = arith.mulf %181, %181 : vector<8x128xf32>
    %cst_84 = arith.constant dense<0.000000e+00> : vector<8xf32>
    %183 = vector.multi_reduction <add>, %182, %cst_84 [1] : vector<8x128xf32> to vector<8xf32>
    %184 = vector.shape_cast %183 : vector<8xf32> to vector<8x1xf32>
    %cst_85 = arith.constant 1.280000e+02 : f32
    %185 = vector.broadcast %cst_85 : f32 to vector<8x1xf32>
    %186 = arith.divf %184, %185 : vector<8x1xf32>
    %187 = vector.broadcast %179 : vector<8x1xf32> to vector<8x128xf32>
    %188 = arith.subf %171, %187 : vector<8x128xf32>
    %cst_86 = arith.constant 9.99999996E-13 : f32
    %189 = vector.broadcast %cst_86 : f32 to vector<8x1xf32>
    %190 = arith.addf %186, %189 : vector<8x1xf32>
    %191 = math.rsqrt %190 : vector<8x1xf32>
    %192 = vector.broadcast %191 : vector<8x1xf32> to vector<8x128xf32>
    %193 = arith.mulf %188, %192 : vector<8x128xf32>
    %194 = vector.broadcast %173 : vector<1x128xf32> to vector<8x128xf32>
    %195 = arith.mulf %193, %194 : vector<8x128xf32>
    %196 = vector.broadcast %175 : vector<1x128xf32> to vector<8x128xf32>
    %197 = arith.addf %195, %196 : vector<8x128xf32>
    %c1 = arith.constant 1 : index
    %c0_87 = arith.constant 0 : index
    %c0_88 = arith.constant 0 : index
    %198 = vector.load %arg8[%c1, %c0_87, %c0_88] : memref<2x128x384xbf16, #tpu.memory_space<vmem>>, vector<1x128x384xbf16>
    %199 = vector.shape_cast %198 : vector<1x128x384xbf16> to vector<128x384xbf16>
    %200 = arith.truncf %197 : vector<8x128xf32> to vector<8x128xbf16>
    %cst_89 = arith.constant dense<0.000000e+00> : vector<8x384xf32>
    %201 = tpu.matmul %200, %199, %cst_89 {dimension_numbers = #tpu.dot_dimension_numbers<[1], [0], [0], [1], [0, 0, 1, 1], [], []>} : vector<8x128xbf16>, vector<128x384xbf16>, vector<8x384xf32> -> vector<8x384xf32>
    %c1_90 = arith.constant 1 : index
    %c0_91 = arith.constant 0 : index
    %c0_92 = arith.constant 0 : index
    %202 = vector.load %arg9[%c1_90, %c0_91, %c0_92] : memref<2x1x384xf32, #tpu.memory_space<vmem>>, vector<1x1x384xf32>
    %203 = vector.shape_cast %202 : vector<1x1x384xf32> to vector<1x384xf32>
    %204 = vector.broadcast %203 : vector<1x384xf32> to vector<8x384xf32>
    %205 = arith.addf %201, %204 : vector<8x384xf32>
    %206 = vector.extract_strided_slice %205 {offsets = [0, 0], sizes = [8, 128], strides = [1, 1]} : vector<8x384xf32> to vector<8x128xf32>
    %207 = vector.extract_strided_slice %205 {offsets = [0, 128], sizes = [8, 128], strides = [1, 1]} : vector<8x384xf32> to vector<8x128xf32>
    %208 = vector.extract_strided_slice %205 {offsets = [0, 256], sizes = [8, 128], strides = [1, 1]} : vector<8x384xf32> to vector<8x128xf32>
    %c1_93 = arith.constant 1 : index
    %c0_94 = arith.constant 0 : index
    %c0_95 = arith.constant 0 : index
    %209 = vector.load %arg10[%c1_93, %c0_94, %c0_95] : memref<2x128x128xbf16, #tpu.memory_space<vmem>>, vector<1x128x128xbf16>
    %210 = vector.shape_cast %209 : vector<1x128x128xbf16> to vector<128x128xbf16>
    %cst_96 = arith.constant 0.000000e+00 : f32
    %211 = vector.broadcast %cst_96 : f32 to vector<8x128xf32>
    %212 = vector.extract_strided_slice %206 {offsets = [0, 0], sizes = [8, 64], strides = [1, 1]} : vector<8x128xf32> to vector<8x64xf32>
    %213 = arith.truncf %212 : vector<8x64xf32> to vector<8x64xbf16>
    %214 = vector.extract_strided_slice %207 {offsets = [0, 0], sizes = [8, 64], strides = [1, 1]} : vector<8x128xf32> to vector<8x64xf32>
    %215 = arith.truncf %214 : vector<8x64xf32> to vector<8x64xbf16>
    %216 = vector.extract_strided_slice %208 {offsets = [0, 0], sizes = [8, 64], strides = [1, 1]} : vector<8x128xf32> to vector<8x64xf32>
    %217 = arith.truncf %216 : vector<8x64xf32> to vector<8x64xbf16>
    %cst_97 = arith.constant dense<0.000000e+00> : vector<8x8xf32>
    %218 = tpu.matmul %213, %215, %cst_97 {dimension_numbers = #tpu.dot_dimension_numbers<[1], [1], [0], [0], [0, 0, 1, 0], [], []>} : vector<8x64xbf16>, vector<8x64xbf16>, vector<8x8xf32> -> vector<8x8xf32>
    %cst_98 = arith.constant 1.250000e-01 : f32
    %219 = vector.broadcast %cst_98 : f32 to vector<8x8xf32>
    %220 = arith.mulf %218, %219 : vector<8x8xf32>
    %221 = vector.broadcast %38 : vector<1x8xf32> to vector<8x8xf32>
    %222 = arith.addf %220, %221 : vector<8x8xf32>
    %cst_99 = arith.constant dense<0xFF800000> : vector<8xf32>
    %223 = vector.multi_reduction <maximumf>, %222, %cst_99 [1] : vector<8x8xf32> to vector<8xf32>
    %224 = vector.shape_cast %223 : vector<8xf32> to vector<8x1xf32>
    %225 = vector.broadcast %224 : vector<8x1xf32> to vector<8x8xf32>
    %226 = arith.subf %222, %225 : vector<8x8xf32>
    %227 = math.exp %226 : vector<8x8xf32>
    %cst_100 = arith.constant dense<0.000000e+00> : vector<8xf32>
    %228 = vector.multi_reduction <add>, %227, %cst_100 [1] : vector<8x8xf32> to vector<8xf32>
    %229 = vector.shape_cast %228 : vector<8xf32> to vector<8x1xf32>
    %cst_101 = arith.constant 1.000000e-30 : f32
    %230 = vector.broadcast %cst_101 : f32 to vector<8x1xf32>
    %231 = arith.maximumf %229, %230 : vector<8x1xf32>
    %232 = tpu.reciprocal %231 {approx = true} : vector<8x1xf32> -> vector<8x1xf32>
    %233 = vector.broadcast %232 : vector<8x1xf32> to vector<8x8xf32>
    %234 = arith.mulf %227, %233 : vector<8x8xf32>
    %235 = arith.truncf %234 : vector<8x8xf32> to vector<8x8xbf16>
    %cst_102 = arith.constant dense<0.000000e+00> : vector<8x64xf32>
    %236 = tpu.matmul %235, %217, %cst_102 {dimension_numbers = #tpu.dot_dimension_numbers<[1], [0], [0], [1], [0, 0, 1, 1], [], []>} : vector<8x8xbf16>, vector<8x64xbf16>, vector<8x64xf32> -> vector<8x64xf32>
    %237 = arith.truncf %236 : vector<8x64xf32> to vector<8x64xbf16>
    %238 = vector.extract_strided_slice %210 {offsets = [0, 0], sizes = [64, 128], strides = [1, 1]} : vector<128x128xbf16> to vector<64x128xbf16>
    %cst_103 = arith.constant dense<0.000000e+00> : vector<8x128xf32>
    %239 = tpu.matmul %237, %238, %cst_103 {dimension_numbers = #tpu.dot_dimension_numbers<[1], [0], [0], [1], [0, 0, 1, 1], [], []>} : vector<8x64xbf16>, vector<64x128xbf16>, vector<8x128xf32> -> vector<8x128xf32>
    %240 = arith.addf %211, %239 : vector<8x128xf32>
    %241 = vector.extract_strided_slice %206 {offsets = [0, 64], sizes = [8, 64], strides = [1, 1]} : vector<8x128xf32> to vector<8x64xf32>
    %242 = arith.truncf %241 : vector<8x64xf32> to vector<8x64xbf16>
    %243 = vector.extract_strided_slice %207 {offsets = [0, 64], sizes = [8, 64], strides = [1, 1]} : vector<8x128xf32> to vector<8x64xf32>
    %244 = arith.truncf %243 : vector<8x64xf32> to vector<8x64xbf16>
    %245 = vector.extract_strided_slice %208 {offsets = [0, 64], sizes = [8, 64], strides = [1, 1]} : vector<8x128xf32> to vector<8x64xf32>
    %246 = arith.truncf %245 : vector<8x64xf32> to vector<8x64xbf16>
    %cst_104 = arith.constant dense<0.000000e+00> : vector<8x8xf32>
    %247 = tpu.matmul %242, %244, %cst_104 {dimension_numbers = #tpu.dot_dimension_numbers<[1], [1], [0], [0], [0, 0, 1, 0], [], []>} : vector<8x64xbf16>, vector<8x64xbf16>, vector<8x8xf32> -> vector<8x8xf32>
    %cst_105 = arith.constant 1.250000e-01 : f32
    %248 = vector.broadcast %cst_105 : f32 to vector<8x8xf32>
    %249 = arith.mulf %247, %248 : vector<8x8xf32>
    %250 = vector.broadcast %38 : vector<1x8xf32> to vector<8x8xf32>
    %251 = arith.addf %249, %250 : vector<8x8xf32>
    %cst_106 = arith.constant dense<0xFF800000> : vector<8xf32>
    %252 = vector.multi_reduction <maximumf>, %251, %cst_106 [1] : vector<8x8xf32> to vector<8xf32>
    %253 = vector.shape_cast %252 : vector<8xf32> to vector<8x1xf32>
    %254 = vector.broadcast %253 : vector<8x1xf32> to vector<8x8xf32>
    %255 = arith.subf %251, %254 : vector<8x8xf32>
    %256 = math.exp %255 : vector<8x8xf32>
    %cst_107 = arith.constant dense<0.000000e+00> : vector<8xf32>
    %257 = vector.multi_reduction <add>, %256, %cst_107 [1] : vector<8x8xf32> to vector<8xf32>
    %258 = vector.shape_cast %257 : vector<8xf32> to vector<8x1xf32>
    %cst_108 = arith.constant 1.000000e-30 : f32
    %259 = vector.broadcast %cst_108 : f32 to vector<8x1xf32>
    %260 = arith.maximumf %258, %259 : vector<8x1xf32>
    %261 = tpu.reciprocal %260 {approx = true} : vector<8x1xf32> -> vector<8x1xf32>
    %262 = vector.broadcast %261 : vector<8x1xf32> to vector<8x8xf32>
    %263 = arith.mulf %256, %262 : vector<8x8xf32>
    %264 = arith.truncf %263 : vector<8x8xf32> to vector<8x8xbf16>
    %cst_109 = arith.constant dense<0.000000e+00> : vector<8x64xf32>
    %265 = tpu.matmul %264, %246, %cst_109 {dimension_numbers = #tpu.dot_dimension_numbers<[1], [0], [0], [1], [0, 0, 1, 1], [], []>} : vector<8x8xbf16>, vector<8x64xbf16>, vector<8x64xf32> -> vector<8x64xf32>
    %266 = arith.truncf %265 : vector<8x64xf32> to vector<8x64xbf16>
    %267 = vector.extract_strided_slice %210 {offsets = [64, 0], sizes = [64, 128], strides = [1, 1]} : vector<128x128xbf16> to vector<64x128xbf16>
    %cst_110 = arith.constant dense<0.000000e+00> : vector<8x128xf32>
    %268 = tpu.matmul %266, %267, %cst_110 {dimension_numbers = #tpu.dot_dimension_numbers<[1], [0], [0], [1], [0, 0, 1, 1], [], []>} : vector<8x64xbf16>, vector<64x128xbf16>, vector<8x128xf32> -> vector<8x128xf32>
    %269 = arith.addf %240, %268 : vector<8x128xf32>
    %c1_111 = arith.constant 1 : index
    %c0_112 = arith.constant 0 : index
    %c0_113 = arith.constant 0 : index
    %270 = vector.load %arg11[%c1_111, %c0_112, %c0_113] : memref<2x1x128xf32, #tpu.memory_space<vmem>>, vector<1x1x128xf32>
    %271 = vector.shape_cast %270 : vector<1x1x128xf32> to vector<1x128xf32>
    %272 = vector.broadcast %271 : vector<1x128xf32> to vector<8x128xf32>
    %273 = arith.addf %269, %272 : vector<8x128xf32>
    %274 = arith.addf %273, %197 : vector<8x128xf32>
    %c1_114 = arith.constant 1 : index
    %c0_115 = arith.constant 0 : index
    %c0_116 = arith.constant 0 : index
    %275 = vector.load %arg12[%c1_114, %c0_115, %c0_116] : memref<2x1x128xf32, #tpu.memory_space<vmem>>, vector<1x1x128xf32>
    %276 = vector.shape_cast %275 : vector<1x1x128xf32> to vector<1x128xf32>
    %c1_117 = arith.constant 1 : index
    %c0_118 = arith.constant 0 : index
    %c0_119 = arith.constant 0 : index
    %277 = vector.load %arg13[%c1_117, %c0_118, %c0_119] : memref<2x1x128xf32, #tpu.memory_space<vmem>>, vector<1x1x128xf32>
    %278 = vector.shape_cast %277 : vector<1x1x128xf32> to vector<1x128xf32>
    %cst_120 = arith.constant dense<0.000000e+00> : vector<8xf32>
    %279 = vector.multi_reduction <add>, %274, %cst_120 [1] : vector<8x128xf32> to vector<8xf32>
    %280 = vector.shape_cast %279 : vector<8xf32> to vector<8x1xf32>
    %cst_121 = arith.constant 1.280000e+02 : f32
    %281 = vector.broadcast %cst_121 : f32 to vector<8x1xf32>
    %282 = arith.divf %280, %281 : vector<8x1xf32>
    %283 = vector.broadcast %282 : vector<8x1xf32> to vector<8x128xf32>
    %284 = arith.subf %274, %283 : vector<8x128xf32>
    %285 = arith.mulf %284, %284 : vector<8x128xf32>
    %cst_122 = arith.constant dense<0.000000e+00> : vector<8xf32>
    %286 = vector.multi_reduction <add>, %285, %cst_122 [1] : vector<8x128xf32> to vector<8xf32>
    %287 = vector.shape_cast %286 : vector<8xf32> to vector<8x1xf32>
    %cst_123 = arith.constant 1.280000e+02 : f32
    %288 = vector.broadcast %cst_123 : f32 to vector<8x1xf32>
    %289 = arith.divf %287, %288 : vector<8x1xf32>
    %290 = vector.broadcast %282 : vector<8x1xf32> to vector<8x128xf32>
    %291 = arith.subf %274, %290 : vector<8x128xf32>
    %cst_124 = arith.constant 9.99999996E-13 : f32
    %292 = vector.broadcast %cst_124 : f32 to vector<8x1xf32>
    %293 = arith.addf %289, %292 : vector<8x1xf32>
    %294 = math.rsqrt %293 : vector<8x1xf32>
    %295 = vector.broadcast %294 : vector<8x1xf32> to vector<8x128xf32>
    %296 = arith.mulf %291, %295 : vector<8x128xf32>
    %297 = vector.broadcast %276 : vector<1x128xf32> to vector<8x128xf32>
    %298 = arith.mulf %296, %297 : vector<8x128xf32>
    %299 = vector.broadcast %278 : vector<1x128xf32> to vector<8x128xf32>
    %300 = arith.addf %298, %299 : vector<8x128xf32>
    %c1_125 = arith.constant 1 : index
    %c0_126 = arith.constant 0 : index
    %c0_127 = arith.constant 0 : index
    %301 = vector.load %arg14[%c1_125, %c0_126, %c0_127] : memref<2x128x512xbf16, #tpu.memory_space<vmem>>, vector<1x128x512xbf16>
    %302 = vector.shape_cast %301 : vector<1x128x512xbf16> to vector<128x512xbf16>
    %303 = arith.truncf %300 : vector<8x128xf32> to vector<8x128xbf16>
    %cst_128 = arith.constant dense<0.000000e+00> : vector<8x512xf32>
    %304 = tpu.matmul %303, %302, %cst_128 {dimension_numbers = #tpu.dot_dimension_numbers<[1], [0], [0], [1], [0, 0, 1, 1], [], []>} : vector<8x128xbf16>, vector<128x512xbf16>, vector<8x512xf32> -> vector<8x512xf32>
    %c1_129 = arith.constant 1 : index
    %c0_130 = arith.constant 0 : index
    %c0_131 = arith.constant 0 : index
    %305 = vector.load %arg15[%c1_129, %c0_130, %c0_131] : memref<2x1x512xf32, #tpu.memory_space<vmem>>, vector<1x1x512xf32>
    %306 = vector.shape_cast %305 : vector<1x1x512xf32> to vector<1x512xf32>
    %307 = vector.broadcast %306 : vector<1x512xf32> to vector<8x512xf32>
    %308 = arith.addf %304, %307 : vector<8x512xf32>
    %309 = arith.mulf %308, %308 : vector<8x512xf32>
    %310 = arith.mulf %308, %309 : vector<8x512xf32>
    %cst_132 = arith.constant 4.471500e-02 : f32
    %311 = vector.broadcast %cst_132 : f32 to vector<8x512xf32>
    %312 = arith.mulf %311, %310 : vector<8x512xf32>
    %313 = arith.addf %308, %312 : vector<8x512xf32>
    %cst_133 = arith.constant 0.797884583 : f32
    %314 = vector.broadcast %cst_133 : f32 to vector<8x512xf32>
    %315 = arith.mulf %314, %313 : vector<8x512xf32>
    %316 = math.tanh %315 : vector<8x512xf32>
    %cst_134 = arith.constant 1.000000e+00 : f32
    %317 = vector.broadcast %cst_134 : f32 to vector<8x512xf32>
    %318 = arith.addf %317, %316 : vector<8x512xf32>
    %cst_135 = arith.constant 5.000000e-01 : f32
    %319 = vector.broadcast %cst_135 : f32 to vector<8x512xf32>
    %320 = arith.mulf %319, %318 : vector<8x512xf32>
    %321 = arith.mulf %308, %320 : vector<8x512xf32>
    %c1_136 = arith.constant 1 : index
    %c0_137 = arith.constant 0 : index
    %c0_138 = arith.constant 0 : index
    %322 = vector.load %arg16[%c1_136, %c0_137, %c0_138] : memref<2x512x128xbf16, #tpu.memory_space<vmem>>, vector<1x512x128xbf16>
    %323 = vector.shape_cast %322 : vector<1x512x128xbf16> to vector<512x128xbf16>
    %324 = arith.truncf %321 : vector<8x512xf32> to vector<8x512xbf16>
    %cst_139 = arith.constant dense<0.000000e+00> : vector<8x128xf32>
    %325 = tpu.matmul %324, %323, %cst_139 {dimension_numbers = #tpu.dot_dimension_numbers<[1], [0], [0], [1], [0, 0, 1, 1], [], []>} : vector<8x512xbf16>, vector<512x128xbf16>, vector<8x128xf32> -> vector<8x128xf32>
    %c1_140 = arith.constant 1 : index
    %c0_141 = arith.constant 0 : index
    %c0_142 = arith.constant 0 : index
    %326 = vector.load %arg17[%c1_140, %c0_141, %c0_142] : memref<2x1x128xf32, #tpu.memory_space<vmem>>, vector<1x1x128xf32>
    %327 = vector.shape_cast %326 : vector<1x1x128xf32> to vector<1x128xf32>
    %328 = vector.broadcast %327 : vector<1x128xf32> to vector<8x128xf32>
    %329 = arith.addf %325, %328 : vector<8x128xf32>
    %330 = arith.addf %329, %300 : vector<8x128xf32>
    %c1_143 = arith.constant 1 : index
    %c0_144 = arith.constant 0 : index
    %c0_145 = arith.constant 0 : index
    %331 = vector.load %arg18[%c1_143, %c0_144, %c0_145] : memref<2x1x128xf32, #tpu.memory_space<vmem>>, vector<1x1x128xf32>
    %332 = vector.shape_cast %331 : vector<1x1x128xf32> to vector<1x128xf32>
    %c1_146 = arith.constant 1 : index
    %c0_147 = arith.constant 0 : index
    %c0_148 = arith.constant 0 : index
    %333 = vector.load %arg19[%c1_146, %c0_147, %c0_148] : memref<2x1x128xf32, #tpu.memory_space<vmem>>, vector<1x1x128xf32>
    %334 = vector.shape_cast %333 : vector<1x1x128xf32> to vector<1x128xf32>
    %cst_149 = arith.constant dense<0.000000e+00> : vector<8xf32>
    %335 = vector.multi_reduction <add>, %330, %cst_149 [1] : vector<8x128xf32> to vector<8xf32>
    %336 = vector.shape_cast %335 : vector<8xf32> to vector<8x1xf32>
    %cst_150 = arith.constant 1.280000e+02 : f32
    %337 = vector.broadcast %cst_150 : f32 to vector<8x1xf32>
    %338 = arith.divf %336, %337 : vector<8x1xf32>
    %339 = vector.broadcast %338 : vector<8x1xf32> to vector<8x128xf32>
    %340 = arith.subf %330, %339 : vector<8x128xf32>
    %341 = arith.mulf %340, %340 : vector<8x128xf32>
    %cst_151 = arith.constant dense<0.000000e+00> : vector<8xf32>
    %342 = vector.multi_reduction <add>, %341, %cst_151 [1] : vector<8x128xf32> to vector<8xf32>
    %343 = vector.shape_cast %342 : vector<8xf32> to vector<8x1xf32>
    %cst_152 = arith.constant 1.280000e+02 : f32
    %344 = vector.broadcast %cst_152 : f32 to vector<8x1xf32>
    %345 = arith.divf %343, %344 : vector<8x1xf32>
    %346 = vector.broadcast %338 : vector<8x1xf32> to vector<8x128xf32>
    %347 = arith.subf %330, %346 : vector<8x128xf32>
    %cst_153 = arith.constant 9.99999996E-13 : f32
    %348 = vector.broadcast %cst_153 : f32 to vector<8x1xf32>
    %349 = arith.addf %345, %348 : vector<8x1xf32>
    %350 = math.rsqrt %349 : vector<8x1xf32>
    %351 = vector.broadcast %350 : vector<8x1xf32> to vector<8x128xf32>
    %352 = arith.mulf %347, %351 : vector<8x128xf32>
    %353 = vector.broadcast %332 : vector<1x128xf32> to vector<8x128xf32>
    %354 = arith.mulf %352, %353 : vector<8x128xf32>
    %355 = vector.broadcast %334 : vector<1x128xf32> to vector<8x128xf32>
    %356 = arith.addf %354, %355 : vector<8x128xf32>
    %c0_154 = arith.constant 0 : index
    %c0_155 = arith.constant 0 : index
    %357 = vector.load %arg23[%c0_154, %c0_155] : memref<8x128xf32, #tpu.memory_space<vmem>>, vector<8x128xf32>
    tpu.vector_store %arg23[%c0_154, %c0_155], %356 {strides = array<i32>} : memref<8x128xf32, #tpu.memory_space<vmem>>, vector<8x128xf32>,
    %c0_156 = arith.constant 0 : index
    %c0_157 = arith.constant 0 : index
    %358 = vector.load %arg20[%c0_156, %c0_157] : memref<128x256xbf16, #tpu.memory_space<vmem>>, vector<128x256xbf16>
    %359 = arith.truncf %356 : vector<8x128xf32> to vector<8x128xbf16>
    %cst_158 = arith.constant dense<0.000000e+00> : vector<8x256xf32>
    %360 = tpu.matmul %359, %358, %cst_158 {dimension_numbers = #tpu.dot_dimension_numbers<[1], [0], [0], [1], [0, 0, 1, 1], [], []>} : vector<8x128xbf16>, vector<128x256xbf16>, vector<8x256xf32> -> vector<8x256xf32>
    %c0_159 = arith.constant 0 : index
    %c0_160 = arith.constant 0 : index
    %361 = vector.load %arg21[%c0_159, %c0_160] : memref<1x256xf32, #tpu.memory_space<vmem>>, vector<1x256xf32>
    %362 = vector.broadcast %361 : vector<1x256xf32> to vector<8x256xf32>
    %363 = arith.addf %360, %362 : vector<8x256xf32>
    %c0_161 = arith.constant 0 : index
    %c0_162 = arith.constant 0 : index
    %364 = vector.load %arg22[%c0_161, %c0_162] : memref<8x256xf32, #tpu.memory_space<vmem>>, vector<8x256xf32>
    tpu.vector_store %arg22[%c0_161, %c0_162], %363 {strides = array<i32>} : memref<8x256xf32, #tpu.memory_space<vmem>>, vector<8x256xf32>,
    return
  }
  func.func @transform_0(%arg0: i32) -> (i32, i32) {
    %c0_i32 = arith.constant 0 : i32
    %c0_i32_0 = arith.constant 0 : i32
    return %arg0, %c0_i32 : i32, i32
  }
  func.func @transform_1(%arg0: i32) -> (i32, i32, i32) {
    %c0_i32 = arith.constant 0 : i32
    %c0_i32_0 = arith.constant 0 : i32
    %c0_i32_1 = arith.constant 0 : i32
    return %arg0, %c0_i32, %c0_i32_0 : i32, i32, i32
  }
  func.func @transform_2(%arg0: i32) -> (i32, i32) {
    %c0_i32 = arith.constant 0 : i32
    %c0_i32_0 = arith.constant 0 : i32
    %c0_i32_1 = arith.constant 0 : i32
    return %c0_i32, %c0_i32_0 : i32, i32
  }
  func.func @transform_3(%arg0: i32) -> (i32, i32) {
    %c0_i32 = arith.constant 0 : i32
    %c0_i32_0 = arith.constant 0 : i32
    %c0_i32_1 = arith.constant 0 : i32
    return %c0_i32, %c0_i32_0 : i32, i32
  }
  func.func @transform_4(%arg0: i32) -> (i32, i32) {
    %c0_i32 = arith.constant 0 : i32
    %c0_i32_0 = arith.constant 0 : i32
    %c0_i32_1 = arith.constant 0 : i32
    return %c0_i32, %c0_i32_0 : i32, i32
  }
  func.func @transform_5(%arg0: i32) -> (i32, i32) {
    %c0_i32 = arith.constant 0 : i32
    %c0_i32_0 = arith.constant 0 : i32
    %c0_i32_1 = arith.constant 0 : i32
    return %c0_i32, %c0_i32_0 : i32, i32
  }
  func.func @transform_6(%arg0: i32) -> (i32, i32) {
    %c0_i32 = arith.constant 0 : i32
    %c0_i32_0 = arith.constant 0 : i32
    %c0_i32_1 = arith.constant 0 : i32
    return %c0_i32, %c0_i32_0 : i32, i32
  }
  func.func @transform_7(%arg0: i32) -> (i32, i32, i32) {
    %c0_i32 = arith.constant 0 : i32
    %c0_i32_0 = arith.constant 0 : i32
    %c0_i32_1 = arith.constant 0 : i32
    %c0_i32_2 = arith.constant 0 : i32
    return %c0_i32, %c0_i32_0, %c0_i32_1 : i32, i32, i32
  }
  func.func @transform_8(%arg0: i32) -> (i32, i32, i32) {
    %c0_i32 = arith.constant 0 : i32
    %c0_i32_0 = arith.constant 0 : i32
    %c0_i32_1 = arith.constant 0 : i32
    %c0_i32_2 = arith.constant 0 : i32
    return %c0_i32, %c0_i32_0, %c0_i32_1 : i32, i32, i32
  }
  func.func @transform_9(%arg0: i32) -> (i32, i32, i32) {
    %c0_i32 = arith.constant 0 : i32
    %c0_i32_0 = arith.constant 0 : i32
    %c0_i32_1 = arith.constant 0 : i32
    %c0_i32_2 = arith.constant 0 : i32
    return %c0_i32, %c0_i32_0, %c0_i32_1 : i32, i32, i32
  }
  func.func @transform_10(%arg0: i32) -> (i32, i32, i32) {
    %c0_i32 = arith.constant 0 : i32
    %c0_i32_0 = arith.constant 0 : i32
    %c0_i32_1 = arith.constant 0 : i32
    %c0_i32_2 = arith.constant 0 : i32
    return %c0_i32, %c0_i32_0, %c0_i32_1 : i32, i32, i32
  }
  func.func @transform_11(%arg0: i32) -> (i32, i32, i32) {
    %c0_i32 = arith.constant 0 : i32
    %c0_i32_0 = arith.constant 0 : i32
    %c0_i32_1 = arith.constant 0 : i32
    %c0_i32_2 = arith.constant 0 : i32
    return %c0_i32, %c0_i32_0, %c0_i32_1 : i32, i32, i32
  }
  func.func @transform_12(%arg0: i32) -> (i32, i32, i32) {
    %c0_i32 = arith.constant 0 : i32
    %c0_i32_0 = arith.constant 0 : i32
    %c0_i32_1 = arith.constant 0 : i32
    %c0_i32_2 = arith.constant 0 : i32
    return %c0_i32, %c0_i32_0, %c0_i32_1 : i32, i32, i32
  }
  func.func @transform_13(%arg0: i32) -> (i32, i32, i32) {
    %c0_i32 = arith.constant 0 : i32
    %c0_i32_0 = arith.constant 0 : i32
    %c0_i32_1 = arith.constant 0 : i32
    %c0_i32_2 = arith.constant 0 : i32
    return %c0_i32, %c0_i32_0, %c0_i32_1 : i32, i32, i32
  }
  func.func @transform_14(%arg0: i32) -> (i32, i32, i32) {
    %c0_i32 = arith.constant 0 : i32
    %c0_i32_0 = arith.constant 0 : i32
    %c0_i32_1 = arith.constant 0 : i32
    %c0_i32_2 = arith.constant 0 : i32
    return %c0_i32, %c0_i32_0, %c0_i32_1 : i32, i32, i32
  }
  func.func @transform_15(%arg0: i32) -> (i32, i32, i32) {
    %c0_i32 = arith.constant 0 : i32
    %c0_i32_0 = arith.constant 0 : i32
    %c0_i32_1 = arith.constant 0 : i32
    %c0_i32_2 = arith.constant 0 : i32
    return %c0_i32, %c0_i32_0, %c0_i32_1 : i32, i32, i32
  }
  func.func @transform_16(%arg0: i32) -> (i32, i32, i32) {
    %c0_i32 = arith.constant 0 : i32
    %c0_i32_0 = arith.constant 0 : i32
    %c0_i32_1 = arith.constant 0 : i32
    %c0_i32_2 = arith.constant 0 : i32
    return %c0_i32, %c0_i32_0, %c0_i32_1 : i32, i32, i32
  }
  func.func @transform_17(%arg0: i32) -> (i32, i32, i32) {
    %c0_i32 = arith.constant 0 : i32
    %c0_i32_0 = arith.constant 0 : i32
    %c0_i32_1 = arith.constant 0 : i32
    %c0_i32_2 = arith.constant 0 : i32
    return %c0_i32, %c0_i32_0, %c0_i32_1 : i32, i32, i32
  }
  func.func @transform_18(%arg0: i32) -> (i32, i32, i32) {
    %c0_i32 = arith.constant 0 : i32
    %c0_i32_0 = arith.constant 0 : i32
    %c0_i32_1 = arith.constant 0 : i32
    %c0_i32_2 = arith.constant 0 : i32
    return %c0_i32, %c0_i32_0, %c0_i32_1 : i32, i32, i32
  }
  func.func @transform_19(%arg0: i32) -> (i32, i32) {
    %c0_i32 = arith.constant 0 : i32
    %c0_i32_0 = arith.constant 0 : i32
    %c0_i32_1 = arith.constant 0 : i32
    return %c0_i32, %c0_i32_0 : i32, i32
  }
  func.func @transform_20(%arg0: i32) -> (i32, i32) {
    %c0_i32 = arith.constant 0 : i32
    %c0_i32_0 = arith.constant 0 : i32
    %c0_i32_1 = arith.constant 0 : i32
    return %c0_i32, %c0_i32_0 : i32, i32
  }
  func.func @transform_21(%arg0: i32) -> (i32, i32) {
    %c0_i32 = arith.constant 0 : i32
    %c0_i32_0 = arith.constant 0 : i32
    return %arg0, %c0_i32 : i32, i32
  }
  func.func @transform_22(%arg0: i32) -> (i32, i32) {
    %c0_i32 = arith.constant 0 : i32
    %c0_i32_0 = arith.constant 0 : i32
    return %arg0, %c0_i32 : i32, i32
  }
}

</mosaic_0001>

<llo_original>
// kernel: bert_sentence_encoder_forward.1
$region0: #{bert_sentence_encoder_forward.1}
  #allocation0 [shape = 'u32[]', space=smem, size = 0x4, offset = 0x4, fixed_abs, tag = 'smem constant byte address 0x4 - core index']
  #allocation1 [shape = 'u32[144,128]{1,0:T(1,128)}', space=vmem, size = 0x12000, scoped, tag = 'internal scratch']
  %s0 = inlined_call_operand.vmem [shape: s32[16,1], index: 0, kind: input, shape index: {}]
  %s1 = inlined_call_operand.vmem [shape: f32[2,1,8], index: 1, kind: input, shape index: {}]
  %s2 = inlined_call_operand.hbm [shape: f32[256,128], index: 2, kind: input, shape index: {}]
  %s3 = inlined_call_operand.vmem [shape: f32[16,128], index: 3, kind: input, shape index: {}]
  %s4 = inlined_call_operand.vmem [shape: f32[2,128], index: 4, kind: input, shape index: {}]
  %s5 = inlined_call_operand.hbm [shape: f32[1,128], index: 5, kind: input, shape index: {}]
  %s6 = inlined_call_operand.hbm [shape: f32[1,128], index: 6, kind: input, shape index: {}]
  %s7 = inlined_call_operand.hbm [shape: bf16[2,128,384], index: 7, kind: input, shape index: {}]
  %s8 = inlined_call_operand.vmem [shape: f32[2,1,384], index: 8, kind: input, shape index: {}]
  %s9 = inlined_call_operand.hbm [shape: bf16[2,128,128], index: 9, kind: input, shape index: {}]
  %s10 = inlined_call_operand.vmem [shape: f32[2,1,128], index: 10, kind: input, shape index: {}]
  %s11 = inlined_call_operand.vmem [shape: f32[2,1,128], index: 11, kind: input, shape index: {}]
  %s12 = inlined_call_operand.vmem [shape: f32[2,1,128], index: 12, kind: input, shape index: {}]
  %s13 = inlined_call_operand.hbm [shape: bf16[2,128,512], index: 13, kind: input, shape index: {}]
  %s14 = inlined_call_operand.vmem [shape: f32[2,1,512], index: 14, kind: input, shape index: {}]
  %s15 = inlined_call_operand.hbm [shape: bf16[2,512,128], index: 15, kind: input, shape index: {}]
  %s16 = inlined_call_operand.hbm [shape: f32[2,1,128], index: 16, kind: input, shape index: {}]
  %s17 = inlined_call_operand.vmem [shape: f32[2,1,128], index: 17, kind: input, shape index: {}]
  %s18 = inlined_call_operand.vmem [shape: f32[2,1,128], index: 18, kind: input, shape index: {}]
  %s19 = inlined_call_operand.hbm [shape: bf16[128,256], index: 19, kind: input, shape index: {}]
  %s20 = inlined_call_operand.vmem [shape: f32[1,256], index: 20, kind: input, shape index: {}]
  %s21 = inlined_call_operand.hbm [shape: f32[16,256], index: 21, kind: output, shape index: {0}]
  %s22 = inlined_call_operand.hbm [shape: f32[16,128], index: 22, kind: output, shape index: {1}]
  %23 = xla_tuple %s21, %s22
  %s24 = sld [smem:[#allocation0]]
  $region161: #{bert_sentence_encoder_forward.1} parent=0
    _
  %s26 = ssub.s32 1, %s24
  %s27 = scalar_select 0, %s26, %s24
  $region1: #{bert_sentence_encoder_forward.1} parent=0
    #allocation2 [shape = 'u8[131072]{0}', space=vmem, size = 0x20000, scoped, tag = 'input window, operand 2, single buffered']
    #allocation3 [shape = 's32[2]{0}', space=sflag, size = 0x8, scoped, tag = 'scoped memory for bert_sentence_encoder_forward.1']
    #allocation4 [shape = 's32[2]{0}', space=sflag, size = 0x8, scoped, tag = 'scoped memory for bert_sentence_encoder_forward.1']
    #allocation5 [shape = 'u8[512]{0}', space=vmem, size = 0x400, scoped, tag = 'input window, operand 5, single buffered']
    #allocation6 [shape = 's32[1]{0}', space=sflag, size = 0x4, scoped, tag = 'scoped memory for bert_sentence_encoder_forward.1']
    #allocation7 [shape = 'u8[512]{0}', space=vmem, size = 0x400, scoped, tag = 'input window, operand 6, single buffered']
    #allocation8 [shape = 'u8[196608]{0}', space=vmem, size = 0x30000, scoped, tag = 'input window, operand 7, single buffered']
    #allocation9 [shape = 's32[1]{0}', space=sflag, size = 0x4, scoped, tag = 'scoped memory for bert_sentence_encoder_forward.1']
    #allocation10 [shape = 'u8[65536]{0}', space=vmem, size = 0x10000, scoped, tag = 'input window, operand 9, single buffered']
    #allocation11 [shape = 'u8[262144]{0}', space=vmem, size = 0x40000, scoped, tag = 'input window, operand 13, single buffered']
    #allocation12 [shape = 's32[1]{0}', space=sflag, size = 0x4, scoped, tag = 'scoped memory for bert_sentence_encoder_forward.1']
    #allocation13 [shape = 'u8[262144]{0}', space=vmem, size = 0x40000, scoped, tag = 'input window, operand 15, single buffered']
    #allocation14 [shape = 'u8[1024]{0}', space=vmem, size = 0x400, scoped, tag = 'input window, operand 16, single buffered']
    #allocation15 [shape = 's32[1]{0}', space=sflag, size = 0x4, scoped, tag = 'scoped memory for bert_sentence_encoder_forward.1']
    #allocation16 [shape = 'u8[65536]{0}', space=vmem, size = 0x10000, scoped, tag = 'input window, operand 19, single buffered']
    #allocation17 [shape = 'u8[16384]{0}', space=vmem, size = 0x4000, scoped, tag = 'output window, operand 0']
    #allocation18 [shape = 'u8[8192]{0}', space=vmem, size = 0x2000, scoped, tag = 'output window, operand 1']
    #allocation19 [shape = 's32[2]{0}', space=sflag, size = 0x8, scoped, tag = 'scoped memory for bert_sentence_encoder_forward.1']
    %28 = vsyncpa [#allocation3], 0
    %29 = vsyncpa [#allocation6], 0
    %30 = vsyncpa [#allocation9], 0
    %31 = vsyncpa [#allocation12], 0
    %32 = vsyncpa [#allocation15], 0
    %33 = vsyncpa [#allocation4], 0
    %s34 = scalar_lea.sflag [#allocation4], 1
    %35 = vsyncpa %s34, 0
    %36 = vsyncpa [#allocation19], 0
    %s37 = scalar_lea.sflag [#allocation19], 1
    %38 = vsyncpa %s37, 0
    loop: start=0, step=1, limit=4
    $region2: #{bert_sentence_encoder_forward.1} parent=1 // loop_pre_header
      _
    $region3: #{bert_sentence_encoder_forward.1} parent=1 // loop_header
      %s40 = sphi 0, %s44
      %p41 = scmp.ge.s32.totalorder %s40, 4
      %s50 = sphi 0, %s52
      %s53 = sphi 0, %s50
      %s54 = sphi 0, %s53
      %s70 = sphi 0, %s54
      %s76 = sphi 0, %s78
      %s79 = sphi 0, %s76
      %s80 = sphi 0, %s79
      %s96 = sphi 0, %s80
      %s100 = sphi 0, %s100
      %s102 = sphi 0, %s100
      %s103 = sphi 0, %s102
      %s117 = sphi 0, %s103
      %s121 = sphi 0, %s121
      %s123 = sphi 0, %s121
      %s124 = sphi 0, %s123
      %s138 = sphi 0, %s124
      %s142 = sphi 0, %s142
      %s144 = sphi 0, %s142
      %s145 = sphi 0, %s144
      %s159 = sphi 0, %s145
      %s163 = sphi 0, %s163
      %s165 = sphi 0, %s163
      %s166 = sphi 0, %s165
      %s180 = sphi 0, %s166
      %s184 = sphi 0, %s184
      %s186 = sphi 0, %s184
      %s187 = sphi 0, %s186
      %s201 = sphi 0, %s187
      %s205 = sphi 0, %s205
      %s207 = sphi 0, %s205
      %s208 = sphi 0, %s207
      %s222 = sphi 0, %s208
      %s226 = sphi 0, %s226
      %s228 = sphi 0, %s226
      %s229 = sphi 0, %s228
      %s243 = sphi 0, %s229
      %s247 = sphi 0, %s247
      %s249 = sphi 0, %s247
      %s250 = sphi 0, %s249
      %s264 = sphi 0, %s250
      %s268 = sphi 0, %s268
      %s270 = sphi 0, %s268
      %s271 = sphi 0, %s270
      %s285 = sphi 0, %s271
      %s289 = sphi 0, %s289
      %s291 = sphi 0, %s289
      %s292 = sphi 0, %s291
      %s306 = sphi 0, %s292
      %s310 = sphi 0, %s310
      %s312 = sphi 0, %s310
      %s313 = sphi 0, %s312
      %s327 = sphi 0, %s313
      %s331 = sphi 0, %s331
      %s333 = sphi 0, %s331
      %s334 = sphi 0, %s333
      %s348 = sphi 0, %s334
      %s352 = sphi 0, %s352
      %s354 = sphi 0, %s352
      %s355 = sphi 0, %s354
      %s369 = sphi 0, %s355
      %s373 = sphi 0, %s373
      %s375 = sphi 0, %s373
      %s376 = sphi 0, %s375
      %s390 = sphi 0, %s376
      %s394 = sphi 0, %s394
      %s396 = sphi 0, %s394
      %s397 = sphi 0, %s396
      %s411 = sphi 0, %s397
      %s415 = sphi 0, %s415
      %s417 = sphi 0, %s415
      %s418 = sphi 0, %s417
      %s432 = sphi 0, %s418
      %s436 = sphi 0, %s436
      %s438 = sphi 0, %s436
      %s439 = sphi 0, %s438
      %s453 = sphi 0, %s439
      %s457 = sphi 0, %s457
      %s459 = sphi 0, %s457
      %s460 = sphi 0, %s459
      %s474 = sphi 0, %s460
      %s478 = sphi 0, %s478
      %s480 = sphi 0, %s478
      %s481 = sphi 0, %s480
      %s495 = sphi 0, %s481
      %s501 = sphi 0, %s503
      %s504 = sphi 0, %s501
      %s505 = sphi 0, %s504
      %s521 = sphi 0, %s505
      %s527 = sphi 0, %s529
      %s530 = sphi 0, %s527
      %s531 = sphi 0, %s530
      %s547 = sphi 0, %s531
    $region4: #{bert_sentence_encoder_forward.1} parent=1 // loop_header_branch
      %43 = sbr.rel (%p41) target = $region8
    $region5: #{bert_sentence_encoder_forward.1} parent=1 // loop_body
      %s45 = ssub.s32 %s40, 1
      %s46 = ssub.s32 %s40, 2
      %s47 = sadd.s32 %s40, 1
      %s48 = ssub.s32 %s40, %s47
      %p49 = scmp.eq.s32.totalorder %s48, 0
      %s51 = sadd.s32 %s50, 1
      %s52 = scalar_select %p49, %s50, %s51
      %p55 = pneg %p49
      %p56 = scmp.eq.s32.totalorder %s40, 1
      %p57 = por %p55, %p56
      %p58 = scmp.ne.s32.totalorder %s50, %s53
      %p59 = scmp.eq.s32.totalorder %s40, 0
      %p60 = por %p58, %p59
      %p61 = scmp.ne.s32.totalorder %s50, %s53
      %p62 = scmp.eq.s32.totalorder %s45, 1
      %p63 = por %p61, %p62
      %p64 = scmp.ne.s32.totalorder %s53, %s54
      %p65 = scmp.eq.s32.totalorder %s45, 0
      %p66 = por %p64, %p65
      %p67 = scmp.ne.s32.totalorder %s53, %s54
      %p68 = scmp.eq.s32.totalorder %s46, 1
      %p69 = por %p67, %p68
      %p71 = scmp.ne.s32.totalorder %s54, %s70
      %p72 = scmp.eq.s32.totalorder %s46, 0
      %p73 = por %p71, %p72
      %s74 = ssub.s32 %s40, %s47
      %p75 = scmp.eq.s32.totalorder %s74, 0
      %s77 = sadd.s32 %s76, 1
      %s78 = scalar_select %p75, %s76, %s77
      %p81 = pneg %p75
      %p82 = scmp.eq.s32.totalorder %s40, 1
      %p83 = por %p81, %p82
      %p84 = scmp.ne.s32.totalorder %s76, %s79
      %p85 = scmp.eq.s32.totalorder %s40, 0
      %p86 = por %p84, %p85
      %p87 = scmp.ne.s32.totalorder %s76, %s79
      %p88 = scmp.eq.s32.totalorder %s45, 1
      %p89 = por %p87, %p88
      %p90 = scmp.ne.s32.totalorder %s79, %s80
      %p91 = scmp.eq.s32.totalorder %s45, 0
      %p92 = por %p90, %p91
      %p93 = scmp.ne.s32.totalorder %s79, %s80
      %p94 = scmp.eq.s32.totalorder %s46, 1
      %p95 = por %p93, %p94
      %p97 = scmp.ne.s32.totalorder %s80, %s96
      %p98 = scmp.eq.s32.totalorder %s46, 0
      %p99 = por %p97, %p98
      %s101 = sadd.s32 %s100, 1
      %p104 = scmp.eq.s32.totalorder %s40, 1
      %p105 = scmp.ne.s32.totalorder %s100, %s102
      %p106 = scmp.eq.s32.totalorder %s40, 0
      %p107 = por %p105, %p106
      %p108 = scmp.ne.s32.totalorder %s100, %s102
      %p109 = scmp.eq.s32.totalorder %s45, 1
      %p110 = por %p108, %p109
      %p111 = scmp.ne.s32.totalorder %s102, %s103
      %p112 = scmp.eq.s32.totalorder %s45, 0
      %p113 = por %p111, %p112
      %p114 = scmp.ne.s32.totalorder %s102, %s103
      %p115 = scmp.eq.s32.totalorder %s46, 1
      %p116 = por %p114, %p115
      %p118 = scmp.ne.s32.totalorder %s103, %s117
      %p119 = scmp.eq.s32.totalorder %s46, 0
      %p120 = por %p118, %p119
      %s122 = sadd.s32 %s121, 1
      %p125 = scmp.eq.s32.totalorder %s40, 1
      %p126 = scmp.ne.s32.totalorder %s121, %s123
      %p127 = scmp.eq.s32.totalorder %s40, 0
      %p128 = por %p126, %p127
      %p129 = scmp.ne.s32.totalorder %s121, %s123
      %p130 = scmp.eq.s32.totalorder %s45, 1
      %p131 = por %p129, %p130
      %p132 = scmp.ne.s32.totalorder %s123, %s124
      %p133 = scmp.eq.s32.totalorder %s45, 0
      %p134 = por %p132, %p133
      %p135 = scmp.ne.s32.totalorder %s123, %s124
      %p136 = scmp.eq.s32.totalorder %s46, 1
      %p137 = por %p135, %p136
      %p139 = scmp.ne.s32.totalorder %s124, %s138
      %p140 = scmp.eq.s32.totalorder %s46, 0
      %p141 = por %p139, %p140
      %s143 = sadd.s32 %s142, 1
      %p146 = scmp.eq.s32.totalorder %s40, 1
      %p147 = scmp.ne.s32.totalorder %s142, %s144
      %p148 = scmp.eq.s32.totalorder %s40, 0
      %p149 = por %p147, %p148
      %p150 = scmp.ne.s32.totalorder %s142, %s144
      %p151 = scmp.eq.s32.totalorder %s45, 1
      %p152 = por %p150, %p151
      %p153 = scmp.ne.s32.totalorder %s144, %s145
      %p154 = scmp.eq.s32.totalorder %s45, 0
      %p155 = por %p153, %p154
      %p156 = scmp.ne.s32.totalorder %s144, %s145
      %p157 = scmp.eq.s32.totalorder %s46, 1
      %p158 = por %p156, %p157
      %p160 = scmp.ne.s32.totalorder %s145, %s159
      %p161 = scmp.eq.s32.totalorder %s46, 0
      %p162 = por %p160, %p161
      %s164 = sadd.s32 %s163, 1
      %p167 = scmp.eq.s32.totalorder %s40, 1
      %p168 = scmp.ne.s32.totalorder %s163, %s165
      %p169 = scmp.eq.s32.totalorder %s40, 0
      %p170 = por %p168, %p169
      %p171 = scmp.ne.s32.totalorder %s163, %s165
      %p172 = scmp.eq.s32.totalorder %s45, 1
      %p173 = por %p171, %p172
      %p174 = scmp.ne.s32.totalorder %s165, %s166
      %p175 = scmp.eq.s32.totalorder %s45, 0
      %p176 = por %p174, %p175
      %p177 = scmp.ne.s32.totalorder %s165, %s166
      %p178 = scmp.eq.s32.totalorder %s46, 1
      %p179 = por %p177, %p178
      %p181 = scmp.ne.s32.totalorder %s166, %s180
      %p182 = scmp.eq.s32.totalorder %s46, 0
      %p183 = por %p181, %p182
      %s185 = sadd.s32 %s184, 1
      %p188 = scmp.eq.s32.totalorder %s40, 1
      %p189 = scmp.ne.s32.totalorder %s184, %s186
      %p190 = scmp.eq.s32.totalorder %s40, 0
      %p191 = por %p189, %p190
      %p192 = scmp.ne.s32.totalorder %s184, %s186
      %p193 = scmp.eq.s32.totalorder %s45, 1
      %p194 = por %p192, %p193
      %p195 = scmp.ne.s32.totalorder %s186, %s187
      %p196 = scmp.eq.s32.totalorder %s45, 0
      %p197 = por %p195, %p196
      %p198 = scmp.ne.s32.totalorder %s186, %s187
      %p199 = scmp.eq.s32.totalorder %s46, 1
      %p200 = por %p198, %p199
      %p202 = scmp.ne.s32.totalorder %s187, %s201
      %p203 = scmp.eq.s32.totalorder %s46, 0
      %p204 = por %p202, %p203
      %s206 = sadd.s32 %s205, 1
      %p209 = scmp.eq.s32.totalorder %s40, 1
      %p210 = scmp.ne.s32.totalorder %s205, %s207
      %p211 = scmp.eq.s32.totalorder %s40, 0
      %p212 = por %p210, %p211
      %p213 = scmp.ne.s32.totalorder %s205, %s207
      %p214 = scmp.eq.s32.totalorder %s45, 1
      %p215 = por %p213, %p214
      %p216 = scmp.ne.s32.totalorder %s207, %s208
      %p217 = scmp.eq.s32.totalorder %s45, 0
      %p218 = por %p216, %p217
      %p219 = scmp.ne.s32.totalorder %s207, %s208
      %p220 = scmp.eq.s32.totalorder %s46, 1
      %p221 = por %p219, %p220
      %p223 = scmp.ne.s32.totalorder %s208, %s222
      %p224 = scmp.eq.s32.totalorder %s46, 0
      %p225 = por %p223, %p224
      %s227 = sadd.s32 %s226, 1
      %p230 = scmp.eq.s32.totalorder %s40, 1
      %p231 = scmp.ne.s32.totalorder %s226, %s228
      %p232 = scmp.eq.s32.totalorder %s40, 0
      %p233 = por %p231, %p232
      %p234 = scmp.ne.s32.totalorder %s226, %s228
      %p235 = scmp.eq.s32.totalorder %s45, 1
      %p236 = por %p234, %p235
      %p237 = scmp.ne.s32.totalorder %s228, %s229
      %p238 = scmp.eq.s32.totalorder %s45, 0
      %p239 = por %p237, %p238
      %p240 = scmp.ne.s32.totalorder %s228, %s229
      %p241 = scmp.eq.s32.totalorder %s46, 1
      %p242 = por %p240, %p241
      %p244 = scmp.ne.s32.totalorder %s229, %s243
      %p245 = scmp.eq.s32.totalorder %s46, 0
      %p246 = por %p244, %p245
      %s248 = sadd.s32 %s247, 1
      %p251 = scmp.eq.s32.totalorder %s40, 1
      %p252 = scmp.ne.s32.totalorder %s247, %s249
      %p253 = scmp.eq.s32.totalorder %s40, 0
      %p254 = por %p252, %p253
      %p255 = scmp.ne.s32.totalorder %s247, %s249
      %p256 = scmp.eq.s32.totalorder %s45, 1
      %p257 = por %p255, %p256
      %p258 = scmp.ne.s32.totalorder %s249, %s250
      %p259 = scmp.eq.s32.totalorder %s45, 0
      %p260 = por %p258, %p259
      %p261 = scmp.ne.s32.totalorder %s249, %s250
      %p262 = scmp.eq.s32.totalorder %s46, 1
      %p263 = por %p261, %p262
      %p265 = scmp.ne.s32.totalorder %s250, %s264
      %p266 = scmp.eq.s32.totalorder %s46, 0
      %p267 = por %p265, %p266
      %s269 = sadd.s32 %s268, 1
      %p272 = scmp.eq.s32.totalorder %s40, 1
      %p273 = scmp.ne.s32.totalorder %s268, %s270
      %p274 = scmp.eq.s32.totalorder %s40, 0
      %p275 = por %p273, %p274
      %p276 = scmp.ne.s32.totalorder %s268, %s270
      %p277 = scmp.eq.s32.totalorder %s45, 1
      %p278 = por %p276, %p277
      %p279 = scmp.ne.s32.totalorder %s270, %s271
      %p280 = scmp.eq.s32.totalorder %s45, 0
      %p281 = por %p279, %p280
      %p282 = scmp.ne.s32.totalorder %s270, %s271
      %p283 = scmp.eq.s32.totalorder %s46, 1
      %p284 = por %p282, %p283
      %p286 = scmp.ne.s32.totalorder %s271, %s285
      %p287 = scmp.eq.s32.totalorder %s46, 0
      %p288 = por %p286, %p287
      %s290 = sadd.s32 %s289, 1
      %p293 = scmp.eq.s32.totalorder %s40, 1
      %p294 = scmp.ne.s32.totalorder %s289, %s291
      %p295 = scmp.eq.s32.totalorder %s40, 0
      %p296 = por %p294, %p295
      %p297 = scmp.ne.s32.totalorder %s289, %s291
      %p298 = scmp.eq.s32.totalorder %s45, 1
      %p299 = por %p297, %p298
      %p300 = scmp.ne.s32.totalorder %s291, %s292
      %p301 = scmp.eq.s32.totalorder %s45, 0
      %p302 = por %p300, %p301
      %p303 = scmp.ne.s32.totalorder %s291, %s292
      %p304 = scmp.eq.s32.totalorder %s46, 1
      %p305 = por %p303, %p304
      %p307 = scmp.ne.s32.totalorder %s292, %s306
      %p308 = scmp.eq.s32.totalorder %s46, 0
      %p309 = por %p307, %p308
      %s311 = sadd.s32 %s310, 1
      %p314 = scmp.eq.s32.totalorder %s40, 1
      %p315 = scmp.ne.s32.totalorder %s310, %s312
      %p316 = scmp.eq.s32.totalorder %s40, 0
      %p317 = por %p315, %p316
      %p318 = scmp.ne.s32.totalorder %s310, %s312
      %p319 = scmp.eq.s32.totalorder %s45, 1
      %p320 = por %p318, %p319
      %p321 = scmp.ne.s32.totalorder %s312, %s313
      %p322 = scmp.eq.s32.totalorder %s45, 0
      %p323 = por %p321, %p322
      %p324 = scmp.ne.s32.totalorder %s312, %s313
      %p325 = scmp.eq.s32.totalorder %s46, 1
      %p326 = por %p324, %p325
      %p328 = scmp.ne.s32.totalorder %s313, %s327
      %p329 = scmp.eq.s32.totalorder %s46, 0
      %p330 = por %p328, %p329
      %s332 = sadd.s32 %s331, 1
      %p335 = scmp.eq.s32.totalorder %s40, 1
      %p336 = scmp.ne.s32.totalorder %s331, %s333
      %p337 = scmp.eq.s32.totalorder %s40, 0
      %p338 = por %p336, %p337
      %p339 = scmp.ne.s32.totalorder %s331, %s333
      %p340 = scmp.eq.s32.totalorder %s45, 1
      %p341 = por %p339, %p340
      %p342 = scmp.ne.s32.totalorder %s333, %s334
      %p343 = scmp.eq.s32.totalorder %s45, 0
      %p344 = por %p342, %p343
      %p345 = scmp.ne.s32.totalorder %s333, %s334
      %p346 = scmp.eq.s32.totalorder %s46, 1
      %p347 = por %p345, %p346
      %p349 = scmp.ne.s32.totalorder %s334, %s348
      %p350 = scmp.eq.s32.totalorder %s46, 0
      %p351 = por %p349, %p350
      %s353 = sadd.s32 %s352, 1
      %p356 = scmp.eq.s32.totalorder %s40, 1
      %p357 = scmp.ne.s32.totalorder %s352, %s354
      %p358 = scmp.eq.s32.totalorder %s40, 0
      %p359 = por %p357, %p358
      %p360 = scmp.ne.s32.totalorder %s352, %s354
      %p361 = scmp.eq.s32.totalorder %s45, 1
      %p362 = por %p360, %p361
      %p363 = scmp.ne.s32.totalorder %s354, %s355
      %p364 = scmp.eq.s32.totalorder %s45, 0
      %p365 = por %p363, %p364
      %p366 = scmp.ne.s32.totalorder %s354, %s355
      %p367 = scmp.eq.s32.totalorder %s46, 1
      %p368 = por %p366, %p367
      %p370 = scmp.ne.s32.totalorder %s355, %s369
      %p371 = scmp.eq.s32.totalorder %s46, 0
      %p372 = por %p370, %p371
      %s374 = sadd.s32 %s373, 1
      %p377 = scmp.eq.s32.totalorder %s40, 1
      %p378 = scmp.ne.s32.totalorder %s373, %s375
      %p379 = scmp.eq.s32.totalorder %s40, 0
      %p380 = por %p378, %p379
      %p381 = scmp.ne.s32.totalorder %s373, %s375
      %p382 = scmp.eq.s32.totalorder %s45, 1
      %p383 = por %p381, %p382
      %p384 = scmp.ne.s32.totalorder %s375, %s376
      %p385 = scmp.eq.s32.totalorder %s45, 0
      %p386 = por %p384, %p385
      %p387 = scmp.ne.s32.totalorder %s375, %s376
      %p388 = scmp.eq.s32.totalorder %s46, 1
      %p389 = por %p387, %p388
      %p391 = scmp.ne.s32.totalorder %s376, %s390
      %p392 = scmp.eq.s32.totalorder %s46, 0
      %p393 = por %p391, %p392
      %s395 = sadd.s32 %s394, 1
      %p398 = scmp.eq.s32.totalorder %s40, 1
      %p399 = scmp.ne.s32.totalorder %s394, %s396
      %p400 = scmp.eq.s32.totalorder %s40, 0
      %p401 = por %p399, %p400
      %p402 = scmp.ne.s32.totalorder %s394, %s396
      %p403 = scmp.eq.s32.totalorder %s45, 1
      %p404 = por %p402, %p403
      %p405 = scmp.ne.s32.totalorder %s396, %s397
      %p406 = scmp.eq.s32.totalorder %s45, 0
      %p407 = por %p405, %p406
      %p408 = scmp.ne.s32.totalorder %s396, %s397
      %p409 = scmp.eq.s32.totalorder %s46, 1
      %p410 = por %p408, %p409
      %p412 = scmp.ne.s32.totalorder %s397, %s411
      %p413 = scmp.eq.s32.totalorder %s46, 0
      %p414 = por %p412, %p413
      %s416 = sadd.s32 %s415, 1
      %p419 = scmp.eq.s32.totalorder %s40, 1
      %p420 = scmp.ne.s32.totalorder %s415, %s417
      %p421 = scmp.eq.s32.totalorder %s40, 0
      %p422 = por %p420, %p421
      %p423 = scmp.ne.s32.totalorder %s415, %s417
      %p424 = scmp.eq.s32.totalorder %s45, 1
      %p425 = por %p423, %p424
      %p426 = scmp.ne.s32.totalorder %s417, %s418
      %p427 = scmp.eq.s32.totalorder %s45, 0
      %p428 = por %p426, %p427
      %p429 = scmp.ne.s32.totalorder %s417, %s418
      %p430 = scmp.eq.s32.totalorder %s46, 1
      %p431 = por %p429, %p430
      %p433 = scmp.ne.s32.totalorder %s418, %s432
      %p434 = scmp.eq.s32.totalorder %s46, 0
      %p435 = por %p433, %p434
      %s437 = sadd.s32 %s436, 1
      %p440 = scmp.eq.s32.totalorder %s40, 1
      %p441 = scmp.ne.s32.totalorder %s436, %s438
      %p442 = scmp.eq.s32.totalorder %s40, 0
      %p443 = por %p441, %p442
      %p444 = scmp.ne.s32.totalorder %s436, %s438
      %p445 = scmp.eq.s32.totalorder %s45, 1
      %p446 = por %p444, %p445
      %p447 = scmp.ne.s32.totalorder %s438, %s439
      %p448 = scmp.eq.s32.totalorder %s45, 0
      %p449 = por %p447, %p448
      %p450 = scmp.ne.s32.totalorder %s438, %s439
      %p451 = scmp.eq.s32.totalorder %s46, 1
      %p452 = por %p450, %p451
      %p454 = scmp.ne.s32.totalorder %s439, %s453
      %p455 = scmp.eq.s32.totalorder %s46, 0
      %p456 = por %p454, %p455
      %s458 = sadd.s32 %s457, 1
      %p461 = scmp.eq.s32.totalorder %s40, 1
      %p462 = scmp.ne.s32.totalorder %s457, %s459
      %p463 = scmp.eq.s32.totalorder %s40, 0
      %p464 = por %p462, %p463
      %p465 = scmp.ne.s32.totalorder %s457, %s459
      %p466 = scmp.eq.s32.totalorder %s45, 1
      %p467 = por %p465, %p466
      %p468 = scmp.ne.s32.totalorder %s459, %s460
      %p469 = scmp.eq.s32.totalorder %s45, 0
      %p470 = por %p468, %p469
      %p471 = scmp.ne.s32.totalorder %s459, %s460
      %p472 = scmp.eq.s32.totalorder %s46, 1
      %p473 = por %p471, %p472
      %p475 = scmp.ne.s32.totalorder %s460, %s474
      %p476 = scmp.eq.s32.totalorder %s46, 0
      %p477 = por %p475, %p476
      %s479 = sadd.s32 %s478, 1
      %p482 = scmp.eq.s32.totalorder %s40, 1
      %p483 = scmp.ne.s32.totalorder %s478, %s480
      %p484 = scmp.eq.s32.totalorder %s40, 0
      %p485 = por %p483, %p484
      %p486 = scmp.ne.s32.totalorder %s478, %s480
      %p487 = scmp.eq.s32.totalorder %s45, 1
      %p488 = por %p486, %p487
      %p489 = scmp.ne.s32.totalorder %s480, %s481
      %p490 = scmp.eq.s32.totalorder %s45, 0
      %p491 = por %p489, %p490
      %p492 = scmp.ne.s32.totalorder %s480, %s481
      %p493 = scmp.eq.s32.totalorder %s46, 1
      %p494 = por %p492, %p493
      %p496 = scmp.ne.s32.totalorder %s481, %s495
      %p497 = scmp.eq.s32.totalorder %s46, 0
      %p498 = por %p496, %p497
      %s499 = ssub.s32 %s40, %s47
      %p500 = scmp.eq.s32.totalorder %s499, 0
      %s502 = sadd.s32 %s501, 1
      %s503 = scalar_select %p500, %s501, %s502
      %p506 = pneg %p500
      %p507 = scmp.eq.s32.totalorder %s40, 1
      %p508 = por %p506, %p507
      %p509 = scmp.ne.s32.totalorder %s501, %s504
      %p510 = scmp.eq.s32.totalorder %s40, 0
      %p511 = por %p509, %p510
      %p512 = scmp.ne.s32.totalorder %s501, %s504
      %p513 = scmp.eq.s32.totalorder %s45, 1
      %p514 = por %p512, %p513
      %p515 = scmp.ne.s32.totalorder %s504, %s505
      %p516 = scmp.eq.s32.totalorder %s45, 0
      %p517 = por %p515, %p516
      %p518 = scmp.ne.s32.totalorder %s504, %s505
      %p519 = scmp.eq.s32.totalorder %s46, 1
      %p520 = por %p518, %p519
      %p522 = scmp.ne.s32.totalorder %s505, %s521
      %p523 = scmp.eq.s32.totalorder %s46, 0
      %p524 = por %p522, %p523
      %s525 = ssub.s32 %s40, %s47
      %p526 = scmp.eq.s32.totalorder %s525, 0
      %s528 = sadd.s32 %s527, 1
      %s529 = scalar_select %p526, %s527, %s528
      %p532 = pneg %p526
      %p533 = scmp.eq.s32.totalorder %s40, 1
      %p534 = por %p532, %p533
      %p535 = scmp.ne.s32.totalorder %s527, %s530
      %p536 = scmp.eq.s32.totalorder %s40, 0
      %p537 = por %p535, %p536
      %p538 = scmp.ne.s32.totalorder %s527, %s530
      %p539 = scmp.eq.s32.totalorder %s45, 1
      %p540 = por %p538, %p539
      %p541 = scmp.ne.s32.totalorder %s530, %s531
      %p542 = scmp.eq.s32.totalorder %s45, 0
      %p543 = por %p541, %p542
      %p544 = scmp.ne.s32.totalorder %s530, %s531
      %p545 = scmp.eq.s32.totalorder %s46, 1
      %p546 = por %p544, %p545
      %p548 = scmp.ne.s32.totalorder %s531, %s547
      %p549 = scmp.eq.s32.totalorder %s46, 0
      %p550 = por %p548, %p549
      %p551 = scmp.le.s32.totalorder 1, %s40
      %p552 = scmp.lt.s32.totalorder %s40, 3
      %p553 = pnand %p551, %p552
      %p554 = pneg %p553
      // Predicated region
      $region9: #{bert_sentence_encoder_forward.1} parent=5 // pred_check
        _
      $region10: #{bert_sentence_encoder_forward.1} parent=5 // pred_check_branch
        %556 = sbr.rel (%p553) target = $region12
      $region11: #{bert_sentence_encoder_forward.1} parent=5 // pred_region
        %s557 = ssub.s32 %s40, 1
        // Predicated region
        $region13: #{bert_sentence_encoder_forward.1} parent=11 // pred_check
          %p558 = pneg %p113
        $region14: #{bert_sentence_encoder_forward.1} parent=11 // pred_check_branch
          %560 = sbr.rel (%p558) target = $region16
        $region15: #{bert_sentence_encoder_forward.1} parent=11 // pred_region
          %s562 = ssub.s32 4096, 4096
          %563 = vsyncadd [#allocation3], %s562
          %s564 = sshll.u32 [#allocation2], 4
          %s565 = int_to_ptr.vmem [resolvable:$true] %s564
          %570 = dma.hbm_to_vmem [thread:$0]  %s2, 4096, %s565, [#allocation3], 128, 128, 8
        $region16: #{bert_sentence_encoder_forward.1} parent=11 // pred_fallthru
          _
        // Predicated region
        $region17: #{bert_sentence_encoder_forward.1} parent=11 // pred_check
          %p571 = pneg %p134
        $region18: #{bert_sentence_encoder_forward.1} parent=11 // pred_check_branch
          %573 = sbr.rel (%p571) target = $region20
        $region19: #{bert_sentence_encoder_forward.1} parent=11 // pred_region
          _
        $region20: #{bert_sentence_encoder_forward.1} parent=11 // pred_fallthru
          _
        // Predicated region
        $region21: #{bert_sentence_encoder_forward.1} parent=11 // pred_check
          %p574 = pneg %p155
        $region22: #{bert_sentence_encoder_forward.1} parent=11 // pred_check_branch
          %576 = sbr.rel (%p574) target = $region24
        $region23: #{bert_sentence_encoder_forward.1} parent=11 // pred_region
          _
        $region24: #{bert_sentence_encoder_forward.1} parent=11 // pred_fallthru
          _
        // Predicated region
        $region25: #{bert_sentence_encoder_forward.1} parent=11 // pred_check
          %p577 = pneg %p176
        $region26: #{bert_sentence_encoder_forward.1} parent=11 // pred_check_branch
          %579 = sbr.rel (%p577) target = $region28
        $region27: #{bert_sentence_encoder_forward.1} parent=11 // pred_region
          %s581 = ssub.s32 16, 16
          %582 = vsyncadd [#allocation6], %s581
          %s584 = sshll.u32 [#allocation5], 4
          %s585 = int_to_ptr.vmem [resolvable:$true] %s584
          %587 = dma.hbm_to_vmem [thread:$0]  %s5, 16, %s585, [#allocation6]
        $region28: #{bert_sentence_encoder_forward.1} parent=11 // pred_fallthru
          _
        // Predicated region
        $region29: #{bert_sentence_encoder_forward.1} parent=11 // pred_check
          %p588 = pneg %p197
        $region30: #{bert_sentence_encoder_forward.1} parent=11 // pred_check_branch
          %590 = sbr.rel (%p588) target = $region32
        $region31: #{bert_sentence_encoder_forward.1} parent=11 // pred_region
          %s592 = ssub.s32 16, 16
          %593 = vsyncadd [#allocation6], %s592
          %s595 = sshll.u32 [#allocation7], 4
          %s596 = int_to_ptr.vmem [resolvable:$true] %s595
          %598 = dma.hbm_to_vmem [thread:$0]  %s6, 16, %s596, [#allocation6]
        $region32: #{bert_sentence_encoder_forward.1} parent=11 // pred_fallthru
          _
        // Predicated region
        $region33: #{bert_sentence_encoder_forward.1} parent=11 // pred_check
          %p599 = pneg %p218
        $region34: #{bert_sentence_encoder_forward.1} parent=11 // pred_check_branch
          %601 = sbr.rel (%p599) target = $region36
        $region35: #{bert_sentence_encoder_forward.1} parent=11 // pred_region
          %s603 = ssub.s32 6144, 6144
          %604 = vsyncadd [#allocation9], %s603
          %s605 = sshll.u32 [#allocation8], 4
          %s606 = int_to_ptr.vmem [resolvable:$true] %s605
          %611 = dma.hbm_to_vmem [thread:$0]  %s7, 6144, %s606, [#allocation9], 192, 192, 12
        $region36: #{bert_sentence_encoder_forward.1} parent=11 // pred_fallthru
          _
        // Predicated region
        $region37: #{bert_sentence_encoder_forward.1} parent=11 // pred_check
          %p612 = pneg %p239
        $region38: #{bert_sentence_encoder_forward.1} parent=11 // pred_check_branch
          %614 = sbr.rel (%p612) target = $region40
        $region39: #{bert_sentence_encoder_forward.1} parent=11 // pred_region
          _
        $region40: #{bert_sentence_encoder_forward.1} parent=11 // pred_fallthru
          _
        // Predicated region
        $region41: #{bert_sentence_encoder_forward.1} parent=11 // pred_check
          %p615 = pneg %p260
        $region42: #{bert_sentence_encoder_forward.1} parent=11 // pred_check_branch
          %617 = sbr.rel (%p615) target = $region44
        $region43: #{bert_sentence_encoder_forward.1} parent=11 // pred_region
          %s619 = ssub.s32 2048, 2048
          %620 = vsyncadd [#allocation9], %s619
          %s621 = sshll.u32 [#allocation10], 4
          %s622 = int_to_ptr.vmem [resolvable:$true] %s621
          %627 = dma.hbm_to_vmem [thread:$0]  %s9, 2048, %s622, [#allocation9], 64, 64, 4
        $region44: #{bert_sentence_encoder_forward.1} parent=11 // pred_fallthru
          _
        // Predicated region
        $region45: #{bert_sentence_encoder_forward.1} parent=11 // pred_check
          %p628 = pneg %p281
        $region46: #{bert_sentence_encoder_forward.1} parent=11 // pred_check_branch
          %630 = sbr.rel (%p628) target = $region48
        $region47: #{bert_sentence_encoder_forward.1} parent=11 // pred_region
          _
        $region48: #{bert_sentence_encoder_forward.1} parent=11 // pred_fallthru
          _
        // Predicated region
        $region49: #{bert_sentence_encoder_forward.1} parent=11 // pred_check
          %p631 = pneg %p302
        $region50: #{bert_sentence_encoder_forward.1} parent=11 // pred_check_branch
          %633 = sbr.rel (%p631) target = $region52
        $region51: #{bert_sentence_encoder_forward.1} parent=11 // pred_region
          _
        $region52: #{bert_sentence_encoder_forward.1} parent=11 // pred_fallthru
          _
        // Predicated region
        $region53: #{bert_sentence_encoder_forward.1} parent=11 // pred_check
          %p634 = pneg %p323
        $region54: #{bert_sentence_encoder_forward.1} parent=11 // pred_check_branch
          %636 = sbr.rel (%p634) target = $region56
        $region55: #{bert_sentence_encoder_forward.1} parent=11 // pred_region
          _
        $region56: #{bert_sentence_encoder_forward.1} parent=11 // pred_fallthru
          _
        // Predicated region
        $region57: #{bert_sentence_encoder_forward.1} parent=11 // pred_check
          %p637 = pneg %p344
        $region58: #{bert_sentence_encoder_forward.1} parent=11 // pred_check_branch
          %639 = sbr.rel (%p637) target = $region60
        $region59: #{bert_sentence_encoder_forward.1} parent=11 // pred_region
          %s641 = ssub.s32 8192, 8192
          %642 = vsyncadd [#allocation12], %s641
          %s643 = sshll.u32 [#allocation11], 4
          %s644 = int_to_ptr.vmem [resolvable:$true] %s643
          %649 = dma.hbm_to_vmem [thread:$0]  %s13, 8192, %s644, [#allocation12], 256, 256, 16
        $region60: #{bert_sentence_encoder_forward.1} parent=11 // pred_fallthru
          _
        // Predicated region
        $region61: #{bert_sentence_encoder_forward.1} parent=11 // pred_check
          %p650 = pneg %p365
        $region62: #{bert_sentence_encoder_forward.1} parent=11 // pred_check_branch
          %652 = sbr.rel (%p650) target = $region64
        $region63: #{bert_sentence_encoder_forward.1} parent=11 // pred_region
          _
        $region64: #{bert_sentence_encoder_forward.1} parent=11 // pred_fallthru
          _
        // Predicated region
        $region65: #{bert_sentence_encoder_forward.1} parent=11 // pred_check
          %p653 = pneg %p386
        $region66: #{bert_sentence_encoder_forward.1} parent=11 // pred_check_branch
          %655 = sbr.rel (%p653) target = $region68
        $region67: #{bert_sentence_encoder_forward.1} parent=11 // pred_region
          %s657 = ssub.s32 8192, 8192
          %658 = vsyncadd [#allocation12], %s657
          %s659 = sshll.u32 [#allocation13], 4
          %s660 = int_to_ptr.vmem [resolvable:$true] %s659
          %665 = dma.hbm_to_vmem [thread:$0]  %s15, 8192, %s660, [#allocation12], 64, 64, 4
        $region68: #{bert_sentence_encoder_forward.1} parent=11 // pred_fallthru
          _
        // Predicated region
        $region69: #{bert_sentence_encoder_forward.1} parent=11 // pred_check
          %p666 = pneg %p407
        $region70: #{bert_sentence_encoder_forward.1} parent=11 // pred_check_branch
          %668 = sbr.rel (%p666) target = $region72
        $region71: #{bert_sentence_encoder_forward.1} parent=11 // pred_region
          %s670 = ssub.s32 32, 32
          %671 = vsyncadd [#allocation15], %s670
          %s672 = sshll.u32 [#allocation14], 4
          %s673 = int_to_ptr.vmem [resolvable:$true] %s672
          %678 = dma.hbm_to_vmem [thread:$0]  %s16, 32, %s673, [#allocation15], 16, 16, 1
        $region72: #{bert_sentence_encoder_forward.1} parent=11 // pred_fallthru
          _
        // Predicated region
        $region73: #{bert_sentence_encoder_forward.1} parent=11 // pred_check
          %p679 = pneg %p428
        $region74: #{bert_sentence_encoder_forward.1} parent=11 // pred_check_branch
          %681 = sbr.rel (%p679) target = $region76
        $region75: #{bert_sentence_encoder_forward.1} parent=11 // pred_region
          _
        $region76: #{bert_sentence_encoder_forward.1} parent=11 // pred_fallthru
          _
        // Predicated region
        $region77: #{bert_sentence_encoder_forward.1} parent=11 // pred_check
          %p682 = pneg %p449
        $region78: #{bert_sentence_encoder_forward.1} parent=11 // pred_check_branch
          %684 = sbr.rel (%p682) target = $region80
        $region79: #{bert_sentence_encoder_forward.1} parent=11 // pred_region
          _
        $region80: #{bert_sentence_encoder_forward.1} parent=11 // pred_fallthru
          _
        // Predicated region
        $region81: #{bert_sentence_encoder_forward.1} parent=11 // pred_check
          %p685 = pneg %p470
        $region82: #{bert_sentence_encoder_forward.1} parent=11 // pred_check_branch
          %687 = sbr.rel (%p685) target = $region84
        $region83: #{bert_sentence_encoder_forward.1} parent=11 // pred_region
          %s689 = ssub.s32 2048, 2048
          %690 = vsyncadd [#allocation15], %s689
          %s691 = sshll.u32 [#allocation16], 4
          %s692 = int_to_ptr.vmem [resolvable:$true] %s691
          %697 = dma.hbm_to_vmem [thread:$0]  %s19, 2048, %s692, [#allocation15], 128, 128, 8
        $region84: #{bert_sentence_encoder_forward.1} parent=11 // pred_fallthru
          _
        // Predicated region
        $region85: #{bert_sentence_encoder_forward.1} parent=11 // pred_check
          %p698 = pneg %p491
        $region86: #{bert_sentence_encoder_forward.1} parent=11 // pred_check_branch
          %700 = sbr.rel (%p698) target = $region88
        $region87: #{bert_sentence_encoder_forward.1} parent=11 // pred_region
          _
        $region88: #{bert_sentence_encoder_forward.1} parent=11 // pred_fallthru
          _
      $region12: #{bert_sentence_encoder_forward.1} parent=5 // pred_fallthru
        _
      %p701 = scmp.lt.s32.totalorder %s40, 2
      // Predicated region
      $region89: #{bert_sentence_encoder_forward.1} parent=5 // pred_check
        %p702 = pneg %p701
      $region90: #{bert_sentence_encoder_forward.1} parent=5 // pred_check_branch
        %704 = sbr.rel (%p702) target = $region92
      $region91: #{bert_sentence_encoder_forward.1} parent=5 // pred_region
        // Predicated region
        $region93: #{bert_sentence_encoder_forward.1} parent=91 // pred_check
          %p705 = pneg %p60
        $region94: #{bert_sentence_encoder_forward.1} parent=91 // pred_check_branch
          %707 = sbr.rel (%p705) target = $region96
        $region95: #{bert_sentence_encoder_forward.1} parent=91 // pred_region
          %p708 = scmp.lt.s32.totalorder %s40, 1
          %s709 = scalar_select %p708, %s40, 1
          %s710 = smul.addr %s709, 8
          %s711 = scalar_lea.vmem %s0, %s710
        $region96: #{bert_sentence_encoder_forward.1} parent=91 // pred_fallthru
          _
        // Predicated region
        $region97: #{bert_sentence_encoder_forward.1} parent=91 // pred_check
          %p712 = pneg %p86
        $region98: #{bert_sentence_encoder_forward.1} parent=91 // pred_check_branch
          %714 = sbr.rel (%p712) target = $region100
        $region99: #{bert_sentence_encoder_forward.1} parent=91 // pred_region
          %p715 = scmp.lt.s32.totalorder %s40, 1
          %s716 = scalar_select %p715, %s40, 1
          %s717 = scalar_lea.vmem %s1, %s716
        $region100: #{bert_sentence_encoder_forward.1} parent=91 // pred_fallthru
          _
      $region92: #{bert_sentence_encoder_forward.1} parent=5 // pred_fallthru
        _
      %p718 = scmp.le.s32.totalorder 1, %s40
      %p719 = scmp.lt.s32.totalorder %s40, 3
      %p720 = pnand %p718, %p719
      %p721 = pneg %p720
      // Predicated region
      $region101: #{bert_sentence_encoder_forward.1} parent=5 // pred_check
        _
      $region102: #{bert_sentence_encoder_forward.1} parent=5 // pred_check_branch
        %723 = sbr.rel (%p720) target = $region104
      $region103: #{bert_sentence_encoder_forward.1} parent=5 // pred_region
        %s724 = ssub.s32 %s40, 1
        // Predicated region
        $region105: #{bert_sentence_encoder_forward.1} parent=103 // pred_check
          %p725 = pneg %p113
        $region106: #{bert_sentence_encoder_forward.1} parent=103 // pred_check_branch
          %727 = sbr.rel (%p725) target = $region108
        $region107: #{bert_sentence_encoder_forward.1} parent=103 // pred_region
          %728 = dma.done [#allocation3], 4096
        $region108: #{bert_sentence_encoder_forward.1} parent=103 // pred_fallthru
          _
        // Predicated region
        $region109: #{bert_sentence_encoder_forward.1} parent=103 // pred_check
          %p729 = pneg %p176
        $region110: #{bert_sentence_encoder_forward.1} parent=103 // pred_check_branch
          %731 = sbr.rel (%p729) target = $region112
        $region111: #{bert_sentence_encoder_forward.1} parent=103 // pred_region
          %732 = dma.done [#allocation6], 16
        $region112: #{bert_sentence_encoder_forward.1} parent=103 // pred_fallthru
          _
        // Predicated region
        $region113: #{bert_sentence_encoder_forward.1} parent=103 // pred_check
          %p733 = pneg %p197
        $region114: #{bert_sentence_encoder_forward.1} parent=103 // pred_check_branch
          %735 = sbr.rel (%p733) target = $region116
        $region115: #{bert_sentence_encoder_forward.1} parent=103 // pred_region
          %736 = dma.done [#allocation6], 16
        $region116: #{bert_sentence_encoder_forward.1} parent=103 // pred_fallthru
          _
        // Predicated region
        $region117: #{bert_sentence_encoder_forward.1} parent=103 // pred_check
          %p737 = pneg %p218
        $region118: #{bert_sentence_encoder_forward.1} parent=103 // pred_check_branch
          %739 = sbr.rel (%p737) target = $region120
        $region119: #{bert_sentence_encoder_forward.1} parent=103 // pred_region
          %740 = dma.done [#allocation9], 6144
        $region120: #{bert_sentence_encoder_forward.1} parent=103 // pred_fallthru
          _
        // Predicated region
        $region121: #{bert_sentence_encoder_forward.1} parent=103 // pred_check
          %p741 = pneg %p260
        $region122: #{bert_sentence_encoder_forward.1} parent=103 // pred_check_branch
          %743 = sbr.rel (%p741) target = $region124
        $region123: #{bert_sentence_encoder_forward.1} parent=103 // pred_region
          %744 = dma.done [#allocation9], 2048
        $region124: #{bert_sentence_encoder_forward.1} parent=103 // pred_fallthru
          _
        // Predicated region
        $region125: #{bert_sentence_encoder_forward.1} parent=103 // pred_check
          %p745 = pneg %p344
        $region126: #{bert_sentence_encoder_forward.1} parent=103 // pred_check_branch
          %747 = sbr.rel (%p745) target = $region128
        $region127: #{bert_sentence_encoder_forward.1} parent=103 // pred_region
          %748 = dma.done [#allocation12], 8192
        $region128: #{bert_sentence_encoder_forward.1} parent=103 // pred_fallthru
          _
        // Predicated region
        $region129: #{bert_sentence_encoder_forward.1} parent=103 // pred_check
          %p749 = pneg %p386
        $region130: #{bert_sentence_encoder_forward.1} parent=103 // pred_check_branch
          %751 = sbr.rel (%p749) target = $region132
        $region131: #{bert_sentence_encoder_forward.1} parent=103 // pred_region
          %752 = dma.done [#allocation12], 8192
        $region132: #{bert_sentence_encoder_forward.1} parent=103 // pred_fallthru
          _
        // Predicated region
        $region133: #{bert_sentence_encoder_forward.1} parent=103 // pred_check
          %p753 = pneg %p407
        $region134: #{bert_sentence_encoder_forward.1} parent=103 // pred_check_branch
          %755 = sbr.rel (%p753) target = $region136
        $region135: #{bert_sentence_encoder_forward.1} parent=103 // pred_region
          %756 = dma.done [#allocation15], 32
        $region136: #{bert_sentence_encoder_forward.1} parent=103 // pred_fallthru
          _
        // Predicated region
        $region137: #{bert_sentence_encoder_forward.1} parent=103 // pred_check
          %p757 = pneg %p470
        $region138: #{bert_sentence_encoder_forward.1} parent=103 // pred_check_branch
          %759 = sbr.rel (%p757) target = $region140
        $region139: #{bert_sentence_encoder_forward.1} parent=103 // pred_region
          %760 = dma.done [#allocation15], 2048
        $region140: #{bert_sentence_encoder_forward.1} parent=103 // pred_fallthru
          _
        %p761 = scmp.lt.s32.totalorder %s45, 1
        %s762 = scalar_select %p761, %s45, 1
        %s763 = smul.addr %s762, 8
        %s764 = scalar_lea.vmem %s0, %s763
        %p765 = pneg %p66
        %p766 = pneg %p63
        %p767 = scmp.lt.s32.totalorder %s45, 1
        %s768 = scalar_select %p767, %s45, 1
        %s769 = scalar_lea.vmem %s1, %s768
        %p770 = pneg %p92
        %p771 = pneg %p89
        %p772 = pneg %p113
        %p773 = pneg %p110
        %p774 = pneg %p134
        %p775 = pneg %p131
        %p776 = pneg %p155
        %p777 = pneg %p152
        %p778 = pneg %p176
        %p779 = pneg %p173
        %p780 = pneg %p197
        %p781 = pneg %p194
        %p782 = pneg %p218
        %p783 = pneg %p215
        %p784 = pneg %p239
        %p785 = pneg %p236
        %p786 = pneg %p260
        %p787 = pneg %p257
        %p788 = pneg %p281
        %p789 = pneg %p278
        %p790 = pneg %p302
        %p791 = pneg %p299
        %p792 = pneg %p323
        %p793 = pneg %p320
        %p794 = pneg %p344
        %p795 = pneg %p341
        %p796 = pneg %p365
        %p797 = pneg %p362
        %p798 = pneg %p386
        %p799 = pneg %p383
        %p800 = pneg %p407
        %p801 = pneg %p404
        %p802 = pneg %p428
        %p803 = pneg %p425
        %p804 = pneg %p449
        %p805 = pneg %p446
        %p806 = pneg %p470
        %p807 = pneg %p467
        %p808 = pneg %p491
        %p809 = pneg %p488
        %p810 = pneg %p517
        %p811 = pneg %p514
        %s812 = sand.u32 %s504, 1
        %s813 = scalar_lea.sflag [#allocation4], %s812
        %s814 = sand.u32 %s504, 1
        %s815 = smul.addr %s814, 16
        %s816 = scalar_lea.vmem [#allocation17], %s815
        %p817 = pneg %p543
        %p818 = pneg %p540
        %s819 = sand.u32 %s530, 1
        %s820 = scalar_lea.sflag [#allocation19], %s819
        %s821 = sand.u32 %s530, 1
        %s822 = smul.addr %s821, 8
        %s823 = scalar_lea.vmem [#allocation18], %s822
        %p824 = scmp.lt.s32.totalorder %s45, 1
        %s825 = scalar_select %p824, %s45, 1
        %s826 = smul.addr %s825, 8
        %s827 = scalar_lea.vmem %s0, %s826
        %p828 = scmp.lt.s32.totalorder %s45, 1
        %s829 = scalar_select %p828, %s45, 1
        %s830 = scalar_lea.vmem %s1, %s829
        %v832 = vld [vmem:[%s827] sm:$0xff]
        %v833 = vlaneseq
        %v834 = vand.u32 %v833, 127
        %v835 = vadd.s32 %v834, 128
        %836 = vset.pattern.permute.xlu0 0
        %837 = vperm.xlu0 %836, %v832
        %v838 = vpop.permute.xlu0 %837
        %vm839 = vcmp.eq.s32.totalorder %v834, %v838
        %vm840 = vcmp.eq.s32.totalorder %v835, %v838
        %v841 = vsel %vm839, 1, 0
        %v842 = vsel %vm840, 1, 0
        %v843 = vcvt.s32.f32 %v841
        %v844 = vcvt.s32.f32 %v842
        %v845 = vld [vmem:[#allocation2] sm:$0xff]
        %v846 = vld [vmem:[#allocation2 + $0x8] sm:$0xff]
        %v847 = vld [vmem:[#allocation2 + $0x10] sm:$0xff]
        %v848 = vld [vmem:[#allocation2 + $0x18] sm:$0xff]
        %v849 = vld [vmem:[#allocation2 + $0x20] sm:$0xff]
        %v850 = vld [vmem:[#allocation2 + $0x28] sm:$0xff]
        %v851 = vld [vmem:[#allocation2 + $0x30] sm:$0xff]
        %v852 = vld [vmem:[#allocation2 + $0x38] sm:$0xff]
        %v853 = vld [vmem:[#allocation2 + $0x40] sm:$0xff]
        %v854 = vld [vmem:[#allocation2 + $0x48] sm:$0xff]
        %v855 = vld [vmem:[#allocation2 + $0x50] sm:$0xff]
        %v856 = vld [vmem:[#allocation2 + $0x58] sm:$0xff]
        %v857 = vld [vmem:[#allocation2 + $0x60] sm:$0xff]
        %v858 = vld [vmem:[#allocation2 + $0x68] sm:$0xff]
        %v859 = vld [vmem:[#allocation2 + $0x70] sm:$0xff]
        %v860 = vld [vmem:[#allocation2 + $0x78] sm:$0xff]
        %v861 = vld [vmem:[#allocation2 + $0x80] sm:$0xff]
        %v862 = vld [vmem:[#allocation2 + $0x88] sm:$0xff]
        %v863 = vld [vmem:[#allocation2 + $0x90] sm:$0xff]
        %v864 = vld [vmem:[#allocation2 + $0x98] sm:$0xff]
        %v865 = vld [vmem:[#allocation2 + $0xa0] sm:$0xff]
        %v866 = vld [vmem:[#allocation2 + $0xa8] sm:$0xff]
        %v867 = vld [vmem:[#allocation2 + $0xb0] sm:$0xff]
        %v868 = vld [vmem:[#allocation2 + $0xb8] sm:$0xff]
        %v869 = vld [vmem:[#allocation2 + $0xc0] sm:$0xff]
        %v870 = vld [vmem:[#allocation2 + $0xc8] sm:$0xff]
        %v871 = vld [vmem:[#allocation2 + $0xd0] sm:$0xff]
        %v872 = vld [vmem:[#allocation2 + $0xd8] sm:$0xff]
        %v873 = vld [vmem:[#allocation2 + $0xe0] sm:$0xff]
        %v874 = vld [vmem:[#allocation2 + $0xe8] sm:$0xff]
        %v875 = vld [vmem:[#allocation2 + $0xf0] sm:$0xff]
        %v876 = vld [vmem:[#allocation2 + $0xf8] sm:$0xff]
        %v877 = vld [vmem:[%s3] sm:$0xff]
        %878 = vmatprep.subr.mxu0 0.0
        %879 = vmatpush1.msra.mxu0 %v845
        %880 = vmatprep.subr.mxu0 0.0
        %881 = vmatpush1.msra.mxu0 %v846
        %882 = vmatprep.subr.mxu0 0.0
        %883 = vmatpush1.msra.mxu0 %v847
        %884 = vmatprep.subr.mxu0 0.0
        %885 = vmatpush1.msra.mxu0 %v848
        %886 = vmatprep.subr.mxu0 0.0
        %887 = vmatpush1.msra.mxu0 %v849
        %888 = vmatprep.subr.mxu0 0.0
        %889 = vmatpush1.msra.mxu0 %v850
        %890 = vmatprep.subr.mxu0 0.0
        %891 = vmatpush1.msra.mxu0 %v851
        %892 = vmatprep.subr.mxu0 0.0
        %893 = vmatpush1.msra.mxu0 %v852
        %894 = vmatprep.subr.mxu0 0.0
        %895 = vmatpush1.msra.mxu0 %v853
        %896 = vmatprep.subr.mxu0 0.0
        %897 = vmatpush1.msra.mxu0 %v854
        %898 = vmatprep.subr.mxu0 0.0
        %899 = vmatpush1.msra.mxu0 %v855
        %900 = vmatprep.subr.mxu0 0.0
        %901 = vmatpush1.msra.mxu0 %v856
        %902 = vmatprep.subr.mxu0 0.0
        %903 = vmatpush1.msra.mxu0 %v857
        %904 = vmatprep.subr.mxu0 0.0
        %905 = vmatpush1.msra.mxu0 %v858
        %906 = vmatprep.subr.mxu0 0.0
        %907 = vmatpush1.msra.mxu0 %v859
        %908 = vmatprep.subr.mxu0 0.0
        %909 = vmatpush1.msra.mxu0 %v860
        %910 = vmatprep.subr.mxu0 0.0
        %911 = vmatpush1.msra.mxu0 %v861
        %912 = vmatprep.subr.mxu0 0.0
        %913 = vmatpush1.msra.mxu0 %v862
        %914 = vmatprep.subr.mxu0 0.0
        %915 = vmatpush1.msra.mxu0 %v863
        %916 = vmatprep.subr.mxu0 0.0
        %917 = vmatpush1.msra.mxu0 %v864
        %918 = vmatprep.subr.mxu0 0.0
        %919 = vmatpush1.msra.mxu0 %v865
        %920 = vmatprep.subr.mxu0 0.0
        %921 = vmatpush1.msra.mxu0 %v866
        %922 = vmatprep.subr.mxu0 0.0
        %923 = vmatpush1.msra.mxu0 %v867
        %924 = vmatprep.subr.mxu0 0.0
        %925 = vmatpush1.msra.mxu0 %v868
        %926 = vmatprep.subr.mxu0 0.0
        %927 = vmatpush1.msra.mxu0 %v869
        %928 = vmatprep.subr.mxu0 0.0
        %929 = vmatpush1.msra.mxu0 %v870
        %930 = vmatprep.subr.mxu0 0.0
        %931 = vmatpush1.msra.mxu0 %v871
        %932 = vmatprep.subr.mxu0 0.0
        %933 = vmatpush1.msra.mxu0 %v872
        %934 = vmatprep.subr.mxu0 0.0
        %935 = vmatpush1.msra.mxu0 %v873
        %936 = vmatprep.subr.mxu0 0.0
        %937 = vmatpush1.msra.mxu0 %v874
        %938 = vmatprep.subr.mxu0 0.0
        %939 = vmatpush1.msra.mxu0 %v875
        %940 = vmatprep.subr.mxu0 0.0
        %941 = vmatpush1.msra.mxu0 %v876
        %942 = vmatprep.mubr.f32.mxu0 %v844
        %943 = vmatmul.mubr.f32.gmra.mrb[0].mxu0 %v843
        %v944 = vpop.f32.mrb[0].mxu0
        %v945 = vadd.f32 %v877, %v944
        %v946 = vpop.f32.mrb[0].mxu0
        %947 = vdwg.mxu0
        %v948 = vld [vmem:[%s4] sm:$0x1]
        %v949 = vlaneseq
        %v950 = vshrl.u32 %v949, 7
        %v951 = vsub.s32 0, %v950
        %v952 = vrot.slane %v948, %v951
        %v953 = vadd.f32 %v945, %v952
        %v954 = vld [vmem:[#allocation5] sm:$0x1]
        %v955 = vld [vmem:[#allocation7] sm:$0x1]
        %956 = vadd.xlane.f32.xlu0 %v953
        %v957 = vpop.xlane.xlu0 %956
        %v958 = vrcp.pop 128.0
        %v959 = vmul.f32 %v957, %v958
        %v960 = vsub.f32 %v953, %v959
        %v961 = vmul.f32 %v960, %v960
        %962 = vadd.xlane.f32.xlu0 %v961
        %v963 = vpop.xlane.xlu0 %962
        %v964 = vmul.f32 %v963, %v958
        %v965 = vadd.f32 %v964, 1e-12
        %v966 = vrsqrt.pop %v965
        %v967 = vmul.f32 %v960, %v966
        %v969 = vlaneseq
        %v970 = vshrl.u32 %v969, 7
        %v971 = vsub.s32 0, %v970
        %v972 = vrot.slane %v954, %v971
        %v974 = vmul.f32 %v967, %v972
        %v976 = vlaneseq
        %v977 = vshrl.u32 %v976, 7
        %v978 = vsub.s32 0, %v977
        %v979 = vrot.slane %v955, %v978
        %v981 = vadd.f32 %v974, %v979
        %v982 = vld [vmem:[%s830] sm:$0x1]
        %v983 = vld [vmem:[#allocation8] sm:$0xff]
        %v984 = vld [vmem:[#allocation8 + $0x8] sm:$0xf]
        %v985 = vld [vmem:[#allocation8 + $0xc] sm:$0xff]
        %v986 = vld [vmem:[#allocation8 + $0x14] sm:$0xf]
        %v987 = vld [vmem:[#allocation8 + $0x18] sm:$0xff]
        %v988 = vld [vmem:[#allocation8 + $0x20] sm:$0xf]
        %v989 = vld [vmem:[#allocation8 + $0x24] sm:$0xff]
        %v990 = vld [vmem:[#allocation8 + $0x2c] sm:$0xf]
        %v991 = vld [vmem:[#allocation8 + $0x30] sm:$0xff]
        %v992 = vld [vmem:[#allocation8 + $0x38] sm:$0xf]
        %v993 = vld [vmem:[#allocation8 + $0x3c] sm:$0xff]
        %v994 = vld [vmem:[#allocation8 + $0x44] sm:$0xf]
        %v995 = vld [vmem:[#allocation8 + $0x48] sm:$0xff]
        %v996 = vld [vmem:[#allocation8 + $0x50] sm:$0xf]
        %v997 = vld [vmem:[#allocation8 + $0x54] sm:$0xff]
        %v998 = vld [vmem:[#allocation8 + $0x5c] sm:$0xf]
        %v999 = vld [vmem:[#allocation8 + $0x60] sm:$0xff]
        %v1000 = vld [vmem:[#allocation8 + $0x68] sm:$0xf]
        %v1001 = vld [vmem:[#allocation8 + $0x6c] sm:$0xff]
        %v1002 = vld [vmem:[#allocation8 + $0x74] sm:$0xf]
        %v1003 = vld [vmem:[#allocation8 + $0x78] sm:$0xff]
        %v1004 = vld [vmem:[#allocation8 + $0x80] sm:$0xf]
        %v1005 = vld [vmem:[#allocation8 + $0x84] sm:$0xff]
        %v1006 = vld [vmem:[#allocation8 + $0x8c] sm:$0xf]
        %v1007 = vld [vmem:[#allocation8 + $0x90] sm:$0xff]
        %v1008 = vld [vmem:[#allocation8 + $0x98] sm:$0xf]
        %v1009 = vld [vmem:[#allocation8 + $0x9c] sm:$0xff]
        %v1010 = vld [vmem:[#allocation8 + $0xa4] sm:$0xf]
        %v1011 = vld [vmem:[#allocation8 + $0xa8] sm:$0xff]
        %v1012 = vld [vmem:[#allocation8 + $0xb0] sm:$0xf]
        %v1013 = vld [vmem:[#allocation8 + $0xb4] sm:$0xff]
        %v1014 = vld [vmem:[#allocation8 + $0xbc] sm:$0xf]
        %v1015 = vpack.c.bf16 %v981, %v981
        %v1016 = vld [vmem:[%s8] sm:$0x7]
        %v1018 = vlaneseq
        %v1019 = vshrl.u32 %v1018, 7
        %v1020 = vsub.s32 0, %v1019
        %v1021 = vrot.slane %v1016, %v1020
        %v1022 = vlaneseq
        %v1023 = vshrl.u32 %v1022, 7
        %v1024 = vsub.s32 1, %v1023
        %v1025 = vrot.slane %v1016, %v1024
        %v1026 = vlaneseq
        %v1027 = vshrl.u32 %v1026, 7
        %v1028 = vsub.s32 2, %v1027
        %v1029 = vrot.slane %v1016, %v1028
        %v1065 = vunpack.c.l.b16 %v983
        %v1066 = vunpack.c.h.b16 %v983
        %v1067 = vunpack.c.l.b16 %v984
        %v1068 = vunpack.c.l.b16 %v985
        %v1069 = vunpack.c.h.b16 %v985
        %v1070 = vunpack.c.l.b16 %v986
        %v1071 = vunpack.c.l.b16 %v987
        %v1072 = vunpack.c.h.b16 %v987
        %v1073 = vunpack.c.l.b16 %v988
        %v1074 = vunpack.c.l.b16 %v989
        %v1075 = vunpack.c.h.b16 %v989
        %v1076 = vunpack.c.l.b16 %v990
        %v1077 = vunpack.c.l.b16 %v991
        %v1078 = vunpack.c.h.b16 %v991
        %v1079 = vunpack.c.l.b16 %v992
        %v1080 = vunpack.c.l.b16 %v993
        %v1081 = vunpack.c.h.b16 %v993
        %v1082 = vunpack.c.l.b16 %v994
        %v1083 = vunpack.c.l.b16 %v995
        %v1084 = vunpack.c.h.b16 %v995
        %v1085 = vunpack.c.l.b16 %v996
        %v1086 = vunpack.c.l.b16 %v997
        %v1087 = vunpack.c.h.b16 %v997
        %v1088 = vunpack.c.l.b16 %v998
        %v1089 = vunpack.c.l.b16 %v999
        %v1090 = vunpack.c.h.b16 %v999
        %v1091 = vunpack.c.l.b16 %v1000
        %v1092 = vunpack.c.l.b16 %v1001
        %v1093 = vunpack.c.h.b16 %v1001
        %v1094 = vunpack.c.l.b16 %v1002
        %v1095 = vunpack.c.l.b16 %v1003
        %v1096 = vunpack.c.h.b16 %v1003
        %v1097 = vunpack.c.l.b16 %v1004
        %v1098 = vunpack.c.l.b16 %v1005
        %v1099 = vunpack.c.h.b16 %v1005
        %v1100 = vunpack.c.l.b16 %v1006
        %v1101 = vunpack.c.l.b16 %v1007
        %v1102 = vunpack.c.h.b16 %v1007
        %v1103 = vunpack.c.l.b16 %v1008
        %v1104 = vunpack.c.l.b16 %v1009
        %v1105 = vunpack.c.h.b16 %v1009
        %v1106 = vunpack.c.l.b16 %v1010
        %v1107 = vunpack.c.l.b16 %v1011
        %v1108 = vunpack.c.h.b16 %v1011
        %v1109 = vunpack.c.l.b16 %v1012
        %v1110 = vunpack.c.l.b16 %v1013
        %v1111 = vunpack.c.h.b16 %v1013
        %v1112 = vunpack.c.l.b16 %v1014
        %v1113 = vpack.c.b16 %v1068, %v1065
        %v1114 = vpack.c.b16 %v1069, %v1066
        %v1115 = vpack.c.b16 %v1070, %v1067
        %v1116 = vpack.c.b16 %v1074, %v1071
        %v1117 = vpack.c.b16 %v1075, %v1072
        %v1118 = vpack.c.b16 %v1076, %v1073
        %v1119 = vpack.c.b16 %v1080, %v1077
        %v1120 = vpack.c.b16 %v1081, %v1078
        %v1121 = vpack.c.b16 %v1082, %v1079
        %v1122 = vpack.c.b16 %v1086, %v1083
        %v1123 = vpack.c.b16 %v1087, %v1084
        %v1124 = vpack.c.b16 %v1088, %v1085
        %v1125 = vpack.c.b16 %v1092, %v1089
        %v1126 = vpack.c.b16 %v1093, %v1090
        %v1127 = vpack.c.b16 %v1094, %v1091
        %v1128 = vpack.c.b16 %v1098, %v1095
        %v1129 = vpack.c.b16 %v1099, %v1096
        %v1130 = vpack.c.b16 %v1100, %v1097
        %v1131 = vpack.c.b16 %v1104, %v1101
        %v1132 = vpack.c.b16 %v1105, %v1102
        %v1133 = vpack.c.b16 %v1106, %v1103
        %v1134 = vpack.c.b16 %v1110, %v1107
        %v1135 = vpack.c.b16 %v1111, %v1108
        %v1136 = vpack.c.b16 %v1112, %v1109
        %1161 = vmatprep.subr.bf16.mxu0 %v1114
        %1162 = vmatpush1.bf16.msra.mxu0 %v1113
        %1163 = vmatprep.subr.bf16.mxu0 %v1117
        %1164 = vmatpush1.bf16.msra.mxu0 %v1116
        %1165 = vmatprep.subr.bf16.mxu0 %v1120
        %1166 = vmatpush1.bf16.msra.mxu0 %v1119
        %1167 = vmatprep.subr.bf16.mxu0 %v1123
        %1168 = vmatpush1.bf16.msra.mxu0 %v1122
        %1169 = vmatprep.subr.bf16.mxu0 %v1126
        %1170 = vmatpush1.bf16.msra.mxu0 %v1125
        %1171 = vmatprep.subr.bf16.mxu0 %v1129
        %1172 = vmatpush1.bf16.msra.mxu0 %v1128
        %1173 = vmatprep.subr.bf16.mxu0 %v1132
        %1174 = vmatpush1.bf16.msra.mxu0 %v1131
        %1175 = vmatprep.subr.bf16.mxu0 %v1135
        %1176 = vmatpush1.bf16.msra.mxu0 %v1134
        %1177 = vmatprep.subr.bf16.mxu0 0
        %1178 = vmatpush1.bf16.msra.mxu0 0
        %1179 = vmatprep.subr.bf16.mxu0 0
        %1180 = vmatpush1.bf16.msra.mxu0 0
        %1181 = vmatprep.subr.bf16.mxu0 0
        %1182 = vmatpush1.bf16.msra.mxu0 0
        %1183 = vmatprep.subr.bf16.mxu0 0
        %1184 = vmatpush1.bf16.msra.mxu0 0
        %1185 = vmatprep.subr.bf16.mxu0 0
        %1186 = vmatpush1.bf16.msra.mxu0 0
        %1187 = vmatprep.subr.bf16.mxu0 0
        %1188 = vmatpush1.bf16.msra.mxu0 0
        %1189 = vmatprep.subr.bf16.mxu0 0
        %1190 = vmatpush1.bf16.msra.mxu0 0
        %1191 = vmatprep.subr.bf16.mxu0 0
        %1192 = vmatpush1.bf16.msra.mxu0 0
        %1193 = vmatprep.mubr.bf16.mxu0 0
        %1194 = vmatmul.mubr.bf16.gmra.mrb[0].mxu0 %v1015
        %v1195 = vpop.f32.mrb[0].mxu0
        %v1196 = vadd.f32 %v1021, %v1195
        %v1197 = vpop.f32.mrb[0].mxu0
        %v1198 = vadd.f32 %v1025, %v1197
        %v1199 = vpop.f32.mrb[0].mxu0
        %v1200 = vpop.f32.mrb[0].mxu0
        %1201 = vdwg.mxu0
        %1202 = vmatprep.subr.bf16.mxu0 0
        %1203 = vmatpush1.bf16.msra.mxu0 %v1115
        %1204 = vmatprep.subr.bf16.mxu0 0
        %1205 = vmatpush1.bf16.msra.mxu0 %v1118
        %1206 = vmatprep.subr.bf16.mxu0 0
        %1207 = vmatpush1.bf16.msra.mxu0 %v1121
        %1208 = vmatprep.subr.bf16.mxu0 0
        %1209 = vmatpush1.bf16.msra.mxu0 %v1124
        %1210 = vmatprep.subr.bf16.mxu0 0
        %1211 = vmatpush1.bf16.msra.mxu0 %v1127
        %1212 = vmatprep.subr.bf16.mxu0 0
        %1213 = vmatpush1.bf16.msra.mxu0 %v1130
        %1214 = vmatprep.subr.bf16.mxu0 0
        %1215 = vmatpush1.bf16.msra.mxu0 %v1133
        %1216 = vmatprep.subr.bf16.mxu0 0
        %1217 = vmatpush1.bf16.msra.mxu0 %v1136
        %1218 = vmatprep.subr.bf16.mxu0 0
        %1219 = vmatpush1.bf16.msra.mxu0 0
        %1220 = vmatprep.subr.bf16.mxu0 0
        %1221 = vmatpush1.bf16.msra.mxu0 0
        %1222 = vmatprep.subr.bf16.mxu0 0
        %1223 = vmatpush1.bf16.msra.mxu0 0
        %1224 = vmatprep.subr.bf16.mxu0 0
        %1225 = vmatpush1.bf16.msra.mxu0 0
        %1226 = vmatprep.subr.bf16.mxu0 0
        %1227 = vmatpush1.bf16.msra.mxu0 0
        %1228 = vmatprep.subr.bf16.mxu0 0
        %1229 = vmatpush1.bf16.msra.mxu0 0
        %1230 = vmatprep.subr.bf16.mxu0 0
        %1231 = vmatpush1.bf16.msra.mxu0 0
        %1232 = vmatprep.subr.bf16.mxu0 0
        %1233 = vmatpush1.bf16.msra.mxu0 0
        %1234 = vmatprep.mubr.bf16.mxu0 0
        %1235 = vmatmul.mubr.bf16.gmra.mrb[0].mxu0 %v1015
        %v1236 = vpop.f32.mrb[0].mxu0
        %v1237 = vadd.f32 %v1029, %v1236
        %v1238 = vpop.f32.mrb[0].mxu0
        %v1239 = vpop.f32.mrb[0].mxu0
        %v1240 = vpop.f32.mrb[0].mxu0
        %1241 = vdwg.mxu0
        %v1242 = vld [vmem:[#allocation10] sm:$0xf]
        %v1243 = vld [vmem:[#allocation10 + $0x4] sm:$0xf]
        %v1244 = vld [vmem:[#allocation10 + $0x8] sm:$0xf]
        %v1245 = vld [vmem:[#allocation10 + $0xc] sm:$0xf]
        %v1246 = vld [vmem:[#allocation10 + $0x10] sm:$0xf]
        %v1247 = vld [vmem:[#allocation10 + $0x14] sm:$0xf]
        %v1248 = vld [vmem:[#allocation10 + $0x18] sm:$0xf]
        %v1249 = vld [vmem:[#allocation10 + $0x1c] sm:$0xf]
        %v1250 = vld [vmem:[#allocation10 + $0x20] sm:$0xf]
        %v1251 = vld [vmem:[#allocation10 + $0x24] sm:$0xf]
        %v1252 = vld [vmem:[#allocation10 + $0x28] sm:$0xf]
        %v1253 = vld [vmem:[#allocation10 + $0x2c] sm:$0xf]
        %v1254 = vld [vmem:[#allocation10 + $0x30] sm:$0xf]
        %v1255 = vld [vmem:[#allocation10 + $0x34] sm:$0xf]
        %v1256 = vld [vmem:[#allocation10 + $0x38] sm:$0xf]
        %v1257 = vld [vmem:[#allocation10 + $0x3c] sm:$0xf]
        %v1258 = vpack.c.bf16 %v1196, %v1196
        %v1259 = vpack.c.bf16 %v1198, %v1198
        %v1260 = vpack.c.bf16 %v1237, %v1237
        %vm1261 = vcmask 523264
        %v1263 = vsel %vm1261, %v1258, 0
        %v1266 = vsel %vm1261, %v1259, 0
        %1268 = vmatprep.subr.bf16.mxu0 0
        %1269 = vmatpush1.bf16.xpose.msra.mxu0 %v1266
        %1270 = vmatprep.subr.bf16.mxu0 0
        %1271 = vmatpush1.bf16.xpose.msra.mxu0 0
        %1272 = vmatprep.subr.bf16.mxu0 0
        %1273 = vmatpush1.bf16.xpose.msra.mxu0 0
        %1274 = vmatprep.subr.bf16.mxu0 0
        %1275 = vmatpush1.bf16.xpose.msra.mxu0 0
        %1276 = vmatprep.subr.bf16.mxu0 0
        %1277 = vmatpush1.bf16.xpose.msra.mxu0 0
        %1278 = vmatprep.subr.bf16.mxu0 0
        %1279 = vmatpush1.bf16.xpose.msra.mxu0 0
        %1280 = vmatprep.subr.bf16.mxu0 0
        %1281 = vmatpush1.bf16.xpose.msra.mxu0 0
        %1282 = vmatprep.subr.bf16.mxu0 0
        %1283 = vmatpush1.bf16.xpose.msra.mxu0 0
        %1284 = vmatprep.subr.bf16.mxu0 0
        %1285 = vmatpush1.bf16.xpose.msra.mxu0 0
        %1286 = vmatprep.subr.bf16.mxu0 0
        %1287 = vmatpush1.bf16.xpose.msra.mxu0 0
        %1288 = vmatprep.subr.bf16.mxu0 0
        %1289 = vmatpush1.bf16.xpose.msra.mxu0 0
        %1290 = vmatprep.subr.bf16.mxu0 0
        %1291 = vmatpush1.bf16.xpose.msra.mxu0 0
        %1292 = vmatprep.subr.bf16.mxu0 0
        %1293 = vmatpush1.bf16.xpose.msra.mxu0 0
        %1294 = vmatprep.subr.bf16.mxu0 0
        %1295 = vmatpush1.bf16.xpose.msra.mxu0 0
        %1296 = vmatprep.subr.bf16.mxu0 0
        %1297 = vmatpush1.bf16.xpose.msra.mxu0 0
        %1298 = vmatprep.subr.bf16.mxu0 0
        %1299 = vmatpush1.bf16.xpose.msra.mxu0 0
        %1300 = vmatprep.mubr.bf16.mxu0 0
        %1301 = vmatmul.mubr.bf16.gmra.mrb[0].mxu0 %v1263
        %v1302 = vpop.f32.mrb[0].mxu0
        %v1303 = vadd.f32 0.0, %v1302
        %v1304 = vpop.f32.mrb[0].mxu0
        %v1305 = vpop.f32.mrb[0].mxu0
        %v1306 = vpop.f32.mrb[0].mxu0
        %1307 = vdwg.mxu0
        %v1308 = vmul.f32 %v1303, 0.125
        %v1310 = vlaneseq
        %v1311 = vshrl.u32 %v1310, 7
        %v1312 = vsub.s32 0, %v1311
        %v1313 = vrot.slane %v982, %v1312
        %v1315 = vadd.f32 %v1308, %v1313
        %vm1316 = vcmask 64512
        %v1317 = vsel %vm1316, %v1315, -inf
        %1318 = vmax.xlane.f32.xlu0 %v1317
        %v1319 = vpop.xlane.xlu0 %1318
        %v1320 = vsub.f32 %v1315, %v1319
        %v1321 = vmul.f32 %v1320, 1.442695
        %v1322 = vpow.pop %v1321
        %v1323 = vsel %vm1316, %v1322, 0.0
        %1324 = vadd.xlane.f32.xlu0 %v1323
        %v1325 = vpop.xlane.xlu0 %1324
        %v1326 = vmax.f32 %v1325, 1e-30
        %v1327 = vrcp.pop %v1326
        %v1328 = vmul.f32 %v1322, %v1327
        %v1329 = vpack.c.bf16 %v1328, %v1328
        %v1331 = vsel %vm1316, %v1329, 0
        %vm1333 = vcmask 1043456
        %v1335 = vsel %vm1333, %v1260, 0
        %1337 = vmatprep.subr.bf16.mxu0 0
        %1338 = vmatpush1.bf16.msra.mxu0 %v1335
        %1339 = vmatprep.subr.bf16.mxu0 0
        %1340 = vmatpush1.bf16.msra.mxu0 0
        %1341 = vmatprep.subr.bf16.mxu0 0
        %1342 = vmatpush1.bf16.msra.mxu0 0
        %1343 = vmatprep.subr.bf16.mxu0 0
        %1344 = vmatpush1.bf16.msra.mxu0 0
        %1345 = vmatprep.subr.bf16.mxu0 0
        %1346 = vmatpush1.bf16.msra.mxu0 0
        %1347 = vmatprep.subr.bf16.mxu0 0
        %1348 = vmatpush1.bf16.msra.mxu0 0
        %1349 = vmatprep.subr.bf16.mxu0 0
        %1350 = vmatpush1.bf16.msra.mxu0 0
        %1351 = vmatprep.subr.bf16.mxu0 0
        %1352 = vmatpush1.bf16.msra.mxu0 0
        %1353 = vmatprep.subr.bf16.mxu0 0
        %1354 = vmatpush1.bf16.msra.mxu0 0
        %1355 = vmatprep.subr.bf16.mxu0 0
        %1356 = vmatpush1.bf16.msra.mxu0 0
        %1357 = vmatprep.subr.bf16.mxu0 0
        %1358 = vmatpush1.bf16.msra.mxu0 0
        %1359 = vmatprep.subr.bf16.mxu0 0
        %1360 = vmatpush1.bf16.msra.mxu0 0
        %1361 = vmatprep.subr.bf16.mxu0 0
        %1362 = vmatpush1.bf16.msra.mxu0 0
        %1363 = vmatprep.subr.bf16.mxu0 0
        %1364 = vmatpush1.bf16.msra.mxu0 0
        %1365 = vmatprep.subr.bf16.mxu0 0
        %1366 = vmatpush1.bf16.msra.mxu0 0
        %1367 = vmatprep.subr.bf16.mxu0 0
        %1368 = vmatpush1.bf16.msra.mxu0 0
        %1369 = vmatprep.mubr.bf16.mxu0 0
        %1370 = vmatmul.mubr.bf16.gmra.mrb[0].mxu0 %v1331
        %v1371 = vpop.f32.mrb[0].mxu0
        %v1372 = vadd.f32 0.0, %v1371
        %v1373 = vpop.f32.mrb[0].mxu0
        %v1374 = vpop.f32.mrb[0].mxu0
        %v1375 = vpop.f32.mrb[0].mxu0
        %1376 = vdwg.mxu0
        %v1377 = vpack.c.bf16 %v1372, %v1372
        %1379 = vrot.lane.b32.xlu0 %v1258, 64
        %v1380 = vpop.permute.xlu0 %1379
        %1382 = vrot.lane.b32.xlu0 %v1259, 64
        %v1383 = vpop.permute.xlu0 %1382
        %v1385 = vsel %vm1261, %v1380, 0
        %v1388 = vsel %vm1261, %v1383, 0
        %1390 = vmatprep.subr.bf16.mxu0 0
        %1391 = vmatpush1.bf16.xpose.msra.mxu0 %v1388
        %1392 = vmatprep.subr.bf16.mxu0 0
        %1393 = vmatpush1.bf16.xpose.msra.mxu0 0
        %1394 = vmatprep.subr.bf16.mxu0 0
        %1395 = vmatpush1.bf16.xpose.msra.mxu0 0
        %1396 = vmatprep.subr.bf16.mxu0 0
        %1397 = vmatpush1.bf16.xpose.msra.mxu0 0
        %1398 = vmatprep.subr.bf16.mxu0 0
        %1399 = vmatpush1.bf16.xpose.msra.mxu0 0
        %1400 = vmatprep.subr.bf16.mxu0 0
        %1401 = vmatpush1.bf16.xpose.msra.mxu0 0
        %1402 = vmatprep.subr.bf16.mxu0 0
        %1403 = vmatpush1.bf16.xpose.msra.mxu0 0
        %1404 = vmatprep.subr.bf16.mxu0 0
        %1405 = vmatpush1.bf16.xpose.msra.mxu0 0
        %1406 = vmatprep.subr.bf16.mxu0 0
        %1407 = vmatpush1.bf16.xpose.msra.mxu0 0
        %1408 = vmatprep.subr.bf16.mxu0 0
        %1409 = vmatpush1.bf16.xpose.msra.mxu0 0
        %1410 = vmatprep.subr.bf16.mxu0 0
        %1411 = vmatpush1.bf16.xpose.msra.mxu0 0
        %1412 = vmatprep.subr.bf16.mxu0 0
        %1413 = vmatpush1.bf16.xpose.msra.mxu0 0
        %1414 = vmatprep.subr.bf16.mxu0 0
        %1415 = vmatpush1.bf16.xpose.msra.mxu0 0
        %1416 = vmatprep.subr.bf16.mxu0 0
        %1417 = vmatpush1.bf16.xpose.msra.mxu0 0
        %1418 = vmatprep.subr.bf16.mxu0 0
        %1419 = vmatpush1.bf16.xpose.msra.mxu0 0
        %1420 = vmatprep.subr.bf16.mxu0 0
        %1421 = vmatpush1.bf16.xpose.msra.mxu0 0
        %1422 = vmatprep.mubr.bf16.mxu0 0
        %1423 = vmatmul.mubr.bf16.gmra.mrb[0].mxu0 %v1385
        %v1424 = vpop.f32.mrb[0].mxu0
        %v1425 = vadd.f32 0.0, %v1424
        %v1426 = vpop.f32.mrb[0].mxu0
        %v1427 = vpop.f32.mrb[0].mxu0
        %v1428 = vpop.f32.mrb[0].mxu0
        %1429 = vdwg.mxu0
        %v1430 = vmul.f32 %v1425, 0.125
        %v1431 = vadd.f32 %v1430, %v1313
        %v1432 = vsel %vm1316, %v1431, -inf
        %1433 = vmax.xlane.f32.xlu0 %v1432
        %v1434 = vpop.xlane.xlu0 %1433
        %v1435 = vsub.f32 %v1431, %v1434
        %v1436 = vmul.f32 %v1435, 1.442695
        %v1437 = vpow.pop %v1436
        %v1438 = vsel %vm1316, %v1437, 0.0
        %1439 = vadd.xlane.f32.xlu0 %v1438
        %v1440 = vpop.xlane.xlu0 %1439
        %v1441 = vmax.f32 %v1440, 1e-30
        %v1442 = vrcp.pop %v1441
        %v1443 = vmul.f32 %v1437, %v1442
        %v1444 = vpack.c.bf16 %v1443, %v1443
        %1446 = vrot.lane.b32.xlu0 %v1260, 64
        %v1447 = vpop.permute.xlu0 %1446
        %v1449 = vsel %vm1316, %v1444, 0
        %v1452 = vsel %vm1333, %v1447, 0
        %1454 = vmatprep.subr.bf16.mxu0 0
        %1455 = vmatpush1.bf16.msra.mxu0 %v1452
        %1456 = vmatprep.subr.bf16.mxu0 0
        %1457 = vmatpush1.bf16.msra.mxu0 0
        %1458 = vmatprep.subr.bf16.mxu0 0
        %1459 = vmatpush1.bf16.msra.mxu0 0
        %1460 = vmatprep.subr.bf16.mxu0 0
        %1461 = vmatpush1.bf16.msra.mxu0 0
        %1462 = vmatprep.subr.bf16.mxu0 0
        %1463 = vmatpush1.bf16.msra.mxu0 0
        %1464 = vmatprep.subr.bf16.mxu0 0
        %1465 = vmatpush1.bf16.msra.mxu0 0
        %1466 = vmatprep.subr.bf16.mxu0 0
        %1467 = vmatpush1.bf16.msra.mxu0 0
        %1468 = vmatprep.subr.bf16.mxu0 0
        %1469 = vmatpush1.bf16.msra.mxu0 0
        %1470 = vmatprep.subr.bf16.mxu0 0
        %1471 = vmatpush1.bf16.msra.mxu0 0
        %1472 = vmatprep.subr.bf16.mxu0 0
        %1473 = vmatpush1.bf16.msra.mxu0 0
        %1474 = vmatprep.subr.bf16.mxu0 0
        %1475 = vmatpush1.bf16.msra.mxu0 0
        %1476 = vmatprep.subr.bf16.mxu0 0
        %1477 = vmatpush1.bf16.msra.mxu0 0
        %1478 = vmatprep.subr.bf16.mxu0 0
        %1479 = vmatpush1.bf16.msra.mxu0 0
        %1480 = vmatprep.subr.bf16.mxu0 0
        %1481 = vmatpush1.bf16.msra.mxu0 0
        %1482 = vmatprep.subr.bf16.mxu0 0
        %1483 = vmatpush1.bf16.msra.mxu0 0
        %1484 = vmatprep.subr.bf16.mxu0 0
        %1485 = vmatpush1.bf16.msra.mxu0 0
        %1486 = vmatprep.mubr.bf16.mxu0 0
        %1487 = vmatmul.mubr.bf16.gmra.mrb[0].mxu0 %v1449
        %v1488 = vpop.f32.mrb[0].mxu0
        %v1489 = vadd.f32 0.0, %v1488
        %v1490 = vpop.f32.mrb[0].mxu0
        %v1491 = vpop.f32.mrb[0].mxu0
        %v1492 = vpop.f32.mrb[0].mxu0
        %1493 = vdwg.mxu0
        %v1494 = vpack.c.bf16 %v1489, %v1489
        %v1503 = vunpack.c.l.b16 %v1250
        %v1504 = vunpack.c.l.b16 %v1251
        %v1505 = vunpack.c.l.b16 %v1252
        %v1506 = vunpack.c.l.b16 %v1253
        %v1507 = vunpack.c.l.b16 %v1254
        %v1508 = vunpack.c.l.b16 %v1255
        %v1509 = vunpack.c.l.b16 %v1256
        %v1510 = vunpack.c.l.b16 %v1257
        %v1511 = vpack.c.b16 %v1504, %v1503
        %v1512 = vpack.c.b16 %v1506, %v1505
        %v1513 = vpack.c.b16 %v1508, %v1507
        %v1514 = vpack.c.b16 %v1510, %v1509
        %v1520 = vsel %vm1261, %v1494, 0
        %1522 = vmatprep.subr.bf16.mxu0 0
        %1523 = vmatpush1.bf16.msra.mxu0 %v1511
        %1524 = vmatprep.subr.bf16.mxu0 0
        %1525 = vmatpush1.bf16.msra.mxu0 %v1512
        %1526 = vmatprep.subr.bf16.mxu0 0
        %1527 = vmatpush1.bf16.msra.mxu0 %v1513
        %1528 = vmatprep.subr.bf16.mxu0 0
        %1529 = vmatpush1.bf16.msra.mxu0 %v1514
        %1530 = vmatprep.subr.bf16.mxu0 0
        %1531 = vmatpush1.bf16.msra.mxu0 0
        %1532 = vmatprep.subr.bf16.mxu0 0
        %1533 = vmatpush1.bf16.msra.mxu0 0
        %1534 = vmatprep.subr.bf16.mxu0 0
        %1535 = vmatpush1.bf16.msra.mxu0 0
        %1536 = vmatprep.subr.bf16.mxu0 0
        %1537 = vmatpush1.bf16.msra.mxu0 0
        %1538 = vmatprep.subr.bf16.mxu0 0
        %1539 = vmatpush1.bf16.msra.mxu0 0
        %1540 = vmatprep.subr.bf16.mxu0 0
        %1541 = vmatpush1.bf16.msra.mxu0 0
        %1542 = vmatprep.subr.bf16.mxu0 0
        %1543 = vmatpush1.bf16.msra.mxu0 0
        %1544 = vmatprep.subr.bf16.mxu0 0
        %1545 = vmatpush1.bf16.msra.mxu0 0
        %1546 = vmatprep.subr.bf16.mxu0 0
        %1547 = vmatpush1.bf16.msra.mxu0 0
        %1548 = vmatprep.subr.bf16.mxu0 0
        %1549 = vmatpush1.bf16.msra.mxu0 0
        %1550 = vmatprep.subr.bf16.mxu0 0
        %1551 = vmatpush1.bf16.msra.mxu0 0
        %1552 = vmatprep.subr.bf16.mxu0 0
        %1553 = vmatpush1.bf16.msra.mxu0 0
        %1554 = vmatprep.mubr.bf16.mxu0 0
        %1555 = vmatmul.mubr.bf16.gmra.mrb[0].mxu0 %v1520
        %v1556 = vpop.f32.mrb[0].mxu0
        %v1557 = vadd.f32 0.0, %v1556
        %v1558 = vpop.f32.mrb[0].mxu0
        %v1559 = vpop.f32.mrb[0].mxu0
        %v1560 = vpop.f32.mrb[0].mxu0
        %1561 = vdwg.mxu0
        %v1570 = vunpack.c.l.b16 %v1242
        %v1571 = vunpack.c.l.b16 %v1243
        %v1572 = vunpack.c.l.b16 %v1244
        %v1573 = vunpack.c.l.b16 %v1245
        %v1574 = vunpack.c.l.b16 %v1246
        %v1575 = vunpack.c.l.b16 %v1247
        %v1576 = vunpack.c.l.b16 %v1248
        %v1577 = vunpack.c.l.b16 %v1249
        %v1578 = vpack.c.b16 %v1571, %v1570
        %v1579 = vpack.c.b16 %v1573, %v1572
        %v1580 = vpack.c.b16 %v1575, %v1574
        %v1581 = vpack.c.b16 %v1577, %v1576
        %v1587 = vsel %vm1261, %v1377, 0
        %1589 = vmatprep.subr.bf16.mxu0 0
        %1590 = vmatpush1.bf16.msra.mxu0 %v1578
        %1591 = vmatprep.subr.bf16.mxu0 0
        %1592 = vmatpush1.bf16.msra.mxu0 %v1579
        %1593 = vmatprep.subr.bf16.mxu0 0
        %1594 = vmatpush1.bf16.msra.mxu0 %v1580
        %1595 = vmatprep.subr.bf16.mxu0 0
        %1596 = vmatpush1.bf16.msra.mxu0 %v1581
        %1597 = vmatprep.subr.bf16.mxu0 0
        %1598 = vmatpush1.bf16.msra.mxu0 0
        %1599 = vmatprep.subr.bf16.mxu0 0
        %1600 = vmatpush1.bf16.msra.mxu0 0
        %1601 = vmatprep.subr.bf16.mxu0 0
        %1602 = vmatpush1.bf16.msra.mxu0 0
        %1603 = vmatprep.subr.bf16.mxu0 0
        %1604 = vmatpush1.bf16.msra.mxu0 0
        %1605 = vmatprep.subr.bf16.mxu0 0
        %1606 = vmatpush1.bf16.msra.mxu0 0
        %1607 = vmatprep.subr.bf16.mxu0 0
        %1608 = vmatpush1.bf16.msra.mxu0 0
        %1609 = vmatprep.subr.bf16.mxu0 0
        %1610 = vmatpush1.bf16.msra.mxu0 0
        %1611 = vmatprep.subr.bf16.mxu0 0
        %1612 = vmatpush1.bf16.msra.mxu0 0
        %1613 = vmatprep.subr.bf16.mxu0 0
        %1614 = vmatpush1.bf16.msra.mxu0 0
        %1615 = vmatprep.subr.bf16.mxu0 0
        %1616 = vmatpush1.bf16.msra.mxu0 0
        %1617 = vmatprep.subr.bf16.mxu0 0
        %1618 = vmatpush1.bf16.msra.mxu0 0
        %1619 = vmatprep.subr.bf16.mxu0 0
        %1620 = vmatpush1.bf16.msra.mxu0 0
        %1621 = vmatprep.mubr.bf16.mxu0 0
        %1622 = vmatmul.mubr.bf16.gmra.mrb[0].mxu0 %v1587
        %v1623 = vpop.f32.mrb[0].mxu0
        %v1624 = vadd.f32 %v1557, %v1623
        %v1625 = vpop.f32.mrb[0].mxu0
        %v1626 = vpop.f32.mrb[0].mxu0
        %v1627 = vpop.f32.mrb[0].mxu0
        %1628 = vdwg.mxu0
        %v1629 = vld [vmem:[%s10] sm:$0x1]
        %v1631 = vlaneseq
        %v1632 = vshrl.u32 %v1631, 7
        %v1633 = vsub.s32 0, %v1632
        %v1634 = vrot.slane %v1629, %v1633
        %v1636 = vadd.f32 %v1624, %v1634
        %v1637 = vadd.f32 %v1636, %v981
        %v1638 = vld [vmem:[%s11] sm:$0x1]
        %v1639 = vld [vmem:[%s12] sm:$0x1]
        %1640 = vadd.xlane.f32.xlu0 %v1637
        %v1641 = vpop.xlane.xlu0 %1640
        %v1642 = vmul.f32 %v1641, %v958
        %v1643 = vsub.f32 %v1637, %v1642
        %v1644 = vmul.f32 %v1643, %v1643
        %1645 = vadd.xlane.f32.xlu0 %v1644
        %v1646 = vpop.xlane.xlu0 %1645
        %v1647 = vmul.f32 %v1646, %v958
        %v1648 = vadd.f32 %v1647, 1e-12
        %v1649 = vrsqrt.pop %v1648
        %v1650 = vmul.f32 %v1643, %v1649
        %v1652 = vlaneseq
        %v1653 = vshrl.u32 %v1652, 7
        %v1654 = vsub.s32 0, %v1653
        %v1655 = vrot.slane %v1638, %v1654
        %v1657 = vmul.f32 %v1650, %v1655
        %v1659 = vlaneseq
        %v1660 = vshrl.u32 %v1659, 7
        %v1661 = vsub.s32 0, %v1660
        %v1662 = vrot.slane %v1639, %v1661
        %v1664 = vadd.f32 %v1657, %v1662
        %v1665 = vld [vmem:[#allocation11] sm:$0xff]
        %v1666 = vld [vmem:[#allocation11 + $0x8] sm:$0xff]
        %v1667 = vld [vmem:[#allocation11 + $0x10] sm:$0xff]
        %v1668 = vld [vmem:[#allocation11 + $0x18] sm:$0xff]
        %v1669 = vld [vmem:[#allocation11 + $0x20] sm:$0xff]
        %v1670 = vld [vmem:[#allocation11 + $0x28] sm:$0xff]
        %v1671 = vld [vmem:[#allocation11 + $0x30] sm:$0xff]
        %v1672 = vld [vmem:[#allocation11 + $0x38] sm:$0xff]
        %v1673 = vld [vmem:[#allocation11 + $0x40] sm:$0xff]
        %v1674 = vld [vmem:[#allocation11 + $0x48] sm:$0xff]
        %v1675 = vld [vmem:[#allocation11 + $0x50] sm:$0xff]
        %v1676 = vld [vmem:[#allocation11 + $0x58] sm:$0xff]
        %v1677 = vld [vmem:[#allocation11 + $0x60] sm:$0xff]
        %v1678 = vld [vmem:[#allocation11 + $0x68] sm:$0xff]
        %v1679 = vld [vmem:[#allocation11 + $0x70] sm:$0xff]
        %v1680 = vld [vmem:[#allocation11 + $0x78] sm:$0xff]
        %v1681 = vld [vmem:[#allocation11 + $0x80] sm:$0xff]
        %v1682 = vld [vmem:[#allocation11 + $0x88] sm:$0xff]
        %v1683 = vld [vmem:[#allocation11 + $0x90] sm:$0xff]
        %v1684 = vld [vmem:[#allocation11 + $0x98] sm:$0xff]
        %v1685 = vld [vmem:[#allocation11 + $0xa0] sm:$0xff]
        %v1686 = vld [vmem:[#allocation11 + $0xa8] sm:$0xff]
        %v1687 = vld [vmem:[#allocation11 + $0xb0] sm:$0xff]
        %v1688 = vld [vmem:[#allocation11 + $0xb8] sm:$0xff]
        %v1689 = vld [vmem:[#allocation11 + $0xc0] sm:$0xff]
        %v1690 = vld [vmem:[#allocation11 + $0xc8] sm:$0xff]
        %v1691 = vld [vmem:[#allocation11 + $0xd0] sm:$0xff]
        %v1692 = vld [vmem:[#allocation11 + $0xd8] sm:$0xff]
        %v1693 = vld [vmem:[#allocation11 + $0xe0] sm:$0xff]
        %v1694 = vld [vmem:[#allocation11 + $0xe8] sm:$0xff]
        %v1695 = vld [vmem:[#allocation11 + $0xf0] sm:$0xff]
        %v1696 = vld [vmem:[#allocation11 + $0xf8] sm:$0xff]
        %v1697 = vpack.c.bf16 %v1664, %v1664
        %v1698 = vld [vmem:[%s14] sm:$0xf]
        %v1700 = vlaneseq
        %v1701 = vshrl.u32 %v1700, 7
        %v1702 = vsub.s32 0, %v1701
        %v1703 = vrot.slane %v1698, %v1702
        %v1704 = vlaneseq
        %v1705 = vshrl.u32 %v1704, 7
        %v1706 = vsub.s32 1, %v1705
        %v1707 = vrot.slane %v1698, %v1706
        %v1708 = vlaneseq
        %v1709 = vshrl.u32 %v1708, 7
        %v1710 = vsub.s32 2, %v1709
        %v1711 = vrot.slane %v1698, %v1710
        %v1712 = vlaneseq
        %v1713 = vshrl.u32 %v1712, 7
        %v1714 = vsub.s32 3, %v1713
        %v1715 = vrot.slane %v1698, %v1714
        %v1752 = vunpack.c.l.b16 %v1665
        %v1753 = vunpack.c.h.b16 %v1665
        %v1754 = vunpack.c.l.b16 %v1666
        %v1755 = vunpack.c.h.b16 %v1666
        %v1756 = vunpack.c.l.b16 %v1667
        %v1757 = vunpack.c.h.b16 %v1667
        %v1758 = vunpack.c.l.b16 %v1668
        %v1759 = vunpack.c.h.b16 %v1668
        %v1760 = vunpack.c.l.b16 %v1669
        %v1761 = vunpack.c.h.b16 %v1669
        %v1762 = vunpack.c.l.b16 %v1670
        %v1763 = vunpack.c.h.b16 %v1670
        %v1764 = vunpack.c.l.b16 %v1671
        %v1765 = vunpack.c.h.b16 %v1671
        %v1766 = vunpack.c.l.b16 %v1672
        %v1767 = vunpack.c.h.b16 %v1672
        %v1768 = vunpack.c.l.b16 %v1673
        %v1769 = vunpack.c.h.b16 %v1673
        %v1770 = vunpack.c.l.b16 %v1674
        %v1771 = vunpack.c.h.b16 %v1674
        %v1772 = vunpack.c.l.b16 %v1675
        %v1773 = vunpack.c.h.b16 %v1675
        %v1774 = vunpack.c.l.b16 %v1676
        %v1775 = vunpack.c.h.b16 %v1676
        %v1776 = vunpack.c.l.b16 %v1677
        %v1777 = vunpack.c.h.b16 %v1677
        %v1778 = vunpack.c.l.b16 %v1678
        %v1779 = vunpack.c.h.b16 %v1678
        %v1780 = vunpack.c.l.b16 %v1679
        %v1781 = vunpack.c.h.b16 %v1679
        %v1782 = vunpack.c.l.b16 %v1680
        %v1783 = vunpack.c.h.b16 %v1680
        %v1784 = vunpack.c.l.b16 %v1681
        %v1785 = vunpack.c.h.b16 %v1681
        %v1786 = vunpack.c.l.b16 %v1682
        %v1787 = vunpack.c.h.b16 %v1682
        %v1788 = vunpack.c.l.b16 %v1683
        %v1789 = vunpack.c.h.b16 %v1683
        %v1790 = vunpack.c.l.b16 %v1684
        %v1791 = vunpack.c.h.b16 %v1684
        %v1792 = vunpack.c.l.b16 %v1685
        %v1793 = vunpack.c.h.b16 %v1685
        %v1794 = vunpack.c.l.b16 %v1686
        %v1795 = vunpack.c.h.b16 %v1686
        %v1796 = vunpack.c.l.b16 %v1687
        %v1797 = vunpack.c.h.b16 %v1687
        %v1798 = vunpack.c.l.b16 %v1688
        %v1799 = vunpack.c.h.b16 %v1688
        %v1800 = vunpack.c.l.b16 %v1689
        %v1801 = vunpack.c.h.b16 %v1689
        %v1802 = vunpack.c.l.b16 %v1690
        %v1803 = vunpack.c.h.b16 %v1690
        %v1804 = vunpack.c.l.b16 %v1691
        %v1805 = vunpack.c.h.b16 %v1691
        %v1806 = vunpack.c.l.b16 %v1692
        %v1807 = vunpack.c.h.b16 %v1692
        %v1808 = vunpack.c.l.b16 %v1693
        %v1809 = vunpack.c.h.b16 %v1693
        %v1810 = vunpack.c.l.b16 %v1694
        %v1811 = vunpack.c.h.b16 %v1694
        %v1812 = vunpack.c.l.b16 %v1695
        %v1813 = vunpack.c.h.b16 %v1695
        %v1814 = vunpack.c.l.b16 %v1696
        %v1815 = vunpack.c.h.b16 %v1696
        %v1816 = vpack.c.b16 %v1756, %v1752
        %v1817 = vpack.c.b16 %v1757, %v1753
        %v1818 = vpack.c.b16 %v1758, %v1754
        %v1819 = vpack.c.b16 %v1759, %v1755
        %v1820 = vpack.c.b16 %v1764, %v1760
        %v1821 = vpack.c.b16 %v1765, %v1761
        %v1822 = vpack.c.b16 %v1766, %v1762
        %v1823 = vpack.c.b16 %v1767, %v1763
        %v1824 = vpack.c.b16 %v1772, %v1768
        %v1825 = vpack.c.b16 %v1773, %v1769
        %v1826 = vpack.c.b16 %v1774, %v1770
        %v1827 = vpack.c.b16 %v1775, %v1771
        %v1828 = vpack.c.b16 %v1780, %v1776
        %v1829 = vpack.c.b16 %v1781, %v1777
        %v1830 = vpack.c.b16 %v1782, %v1778
        %v1831 = vpack.c.b16 %v1783, %v1779
        %v1832 = vpack.c.b16 %v1788, %v1784
        %v1833 = vpack.c.b16 %v1789, %v1785
        %v1834 = vpack.c.b16 %v1790, %v1786
        %v1835 = vpack.c.b16 %v1791, %v1787
        %v1836 = vpack.c.b16 %v1796, %v1792
        %v1837 = vpack.c.b16 %v1797, %v1793
        %v1838 = vpack.c.b16 %v1798, %v1794
        %v1839 = vpack.c.b16 %v1799, %v1795
        %v1840 = vpack.c.b16 %v1804, %v1800
        %v1841 = vpack.c.b16 %v1805, %v1801
        %v1842 = vpack.c.b16 %v1806, %v1802
        %v1843 = vpack.c.b16 %v1807, %v1803
        %v1844 = vpack.c.b16 %v1812, %v1808
        %v1845 = vpack.c.b16 %v1813, %v1809
        %v1846 = vpack.c.b16 %v1814, %v1810
        %v1847 = vpack.c.b16 %v1815, %v1811
        %1880 = vmatprep.subr.bf16.mxu0 %v1817
        %1881 = vmatpush1.bf16.msra.mxu0 %v1816
        %1882 = vmatprep.subr.bf16.mxu0 %v1821
        %1883 = vmatpush1.bf16.msra.mxu0 %v1820
        %1884 = vmatprep.subr.bf16.mxu0 %v1825
        %1885 = vmatpush1.bf16.msra.mxu0 %v1824
        %1886 = vmatprep.subr.bf16.mxu0 %v1829
        %1887 = vmatpush1.bf16.msra.mxu0 %v1828
        %1888 = vmatprep.subr.bf16.mxu0 %v1833
        %1889 = vmatpush1.bf16.msra.mxu0 %v1832
        %1890 = vmatprep.subr.bf16.mxu0 %v1837
        %1891 = vmatpush1.bf16.msra.mxu0 %v1836
        %1892 = vmatprep.subr.bf16.mxu0 %v1841
        %1893 = vmatpush1.bf16.msra.mxu0 %v1840
        %1894 = vmatprep.subr.bf16.mxu0 %v1845
        %1895 = vmatpush1.bf16.msra.mxu0 %v1844
        %1896 = vmatprep.subr.bf16.mxu0 0
        %1897 = vmatpush1.bf16.msra.mxu0 0
        %1898 = vmatprep.subr.bf16.mxu0 0
        %1899 = vmatpush1.bf16.msra.mxu0 0
        %1900 = vmatprep.subr.bf16.mxu0 0
        %1901 = vmatpush1.bf16.msra.mxu0 0
        %1902 = vmatprep.subr.bf16.mxu0 0
        %1903 = vmatpush1.bf16.msra.mxu0 0
        %1904 = vmatprep.subr.bf16.mxu0 0
        %1905 = vmatpush1.bf16.msra.mxu0 0
        %1906 = vmatprep.subr.bf16.mxu0 0
        %1907 = vmatpush1.bf16.msra.mxu0 0
        %1908 = vmatprep.subr.bf16.mxu0 0
        %1909 = vmatpush1.bf16.msra.mxu0 0
        %1910 = vmatprep.subr.bf16.mxu0 0
        %1911 = vmatpush1.bf16.msra.mxu0 0
        %1912 = vmatprep.mubr.bf16.mxu0 0
        %1913 = vmatmul.mubr.bf16.gmra.mrb[0].mxu0 %v1697
        %v1914 = vpop.f32.mrb[0].mxu0
        %v1915 = vadd.f32 %v1703, %v1914
        %v1916 = vpop.f32.mrb[0].mxu0
        %v1917 = vadd.f32 %v1707, %v1916
        %v1918 = vpop.f32.mrb[0].mxu0
        %v1919 = vpop.f32.mrb[0].mxu0
        %1920 = vdwg.mxu0
        %1921 = vmatprep.subr.bf16.mxu0 %v1819
        %1922 = vmatpush1.bf16.msra.mxu0 %v1818
        %1923 = vmatprep.subr.bf16.mxu0 %v1823
        %1924 = vmatpush1.bf16.msra.mxu0 %v1822
        %1925 = vmatprep.subr.bf16.mxu0 %v1827
        %1926 = vmatpush1.bf16.msra.mxu0 %v1826
        %1927 = vmatprep.subr.bf16.mxu0 %v1831
        %1928 = vmatpush1.bf16.msra.mxu0 %v1830
        %1929 = vmatprep.subr.bf16.mxu0 %v1835
        %1930 = vmatpush1.bf16.msra.mxu0 %v1834
        %1931 = vmatprep.subr.bf16.mxu0 %v1839
        %1932 = vmatpush1.bf16.msra.mxu0 %v1838
        %1933 = vmatprep.subr.bf16.mxu0 %v1843
        %1934 = vmatpush1.bf16.msra.mxu0 %v1842
        %1935 = vmatprep.subr.bf16.mxu0 %v1847
        %1936 = vmatpush1.bf16.msra.mxu0 %v1846
        %1937 = vmatprep.subr.bf16.mxu0 0
        %1938 = vmatpush1.bf16.msra.mxu0 0
        %1939 = vmatprep.subr.bf16.mxu0 0
        %1940 = vmatpush1.bf16.msra.mxu0 0
        %1941 = vmatprep.subr.bf16.mxu0 0
        %1942 = vmatpush1.bf16.msra.mxu0 0
        %1943 = vmatprep.subr.bf16.mxu0 0
        %1944 = vmatpush1.bf16.msra.mxu0 0
        %1945 = vmatprep.subr.bf16.mxu0 0
        %1946 = vmatpush1.bf16.msra.mxu0 0
        %1947 = vmatprep.subr.bf16.mxu0 0
        %1948 = vmatpush1.bf16.msra.mxu0 0
        %1949 = vmatprep.subr.bf16.mxu0 0
        %1950 = vmatpush1.bf16.msra.mxu0 0
        %1951 = vmatprep.subr.bf16.mxu0 0
        %1952 = vmatpush1.bf16.msra.mxu0 0
        %1953 = vmatprep.mubr.bf16.mxu0 0
        %1954 = vmatmul.mubr.bf16.gmra.mrb[0].mxu0 %v1697
        %v1955 = vpop.f32.mrb[0].mxu0
        %v1956 = vadd.f32 %v1711, %v1955
        %v1957 = vpop.f32.mrb[0].mxu0
        %v1958 = vadd.f32 %v1715, %v1957
        %v1959 = vpop.f32.mrb[0].mxu0
        %v1960 = vpop.f32.mrb[0].mxu0
        %1961 = vdwg.mxu0
        %v1962 = vmul.f32 %v1915, %v1915
        %v1963 = vmul.f32 %v1917, %v1917
        %v1964 = vmul.f32 %v1956, %v1956
        %v1965 = vmul.f32 %v1958, %v1958
        %v1966 = vmul.f32 %v1915, %v1962
        %v1967 = vmul.f32 %v1917, %v1963
        %v1968 = vmul.f32 %v1956, %v1964
        %v1969 = vmul.f32 %v1958, %v1965
        %v1970 = vmul.f32 %v1966, 0.044715
        %v1971 = vmul.f32 %v1967, 0.044715
        %v1972 = vmul.f32 %v1968, 0.044715
        %v1973 = vmul.f32 %v1969, 0.044715
        %v1974 = vadd.f32 %v1915, %v1970
        %v1975 = vadd.f32 %v1917, %v1971
        %v1976 = vadd.f32 %v1956, %v1972
        %v1977 = vadd.f32 %v1958, %v1973
        %v1978 = vmul.f32 %v1974, 0.7978846
        %v1979 = vmul.f32 %v1975, 0.7978846
        %v1980 = vmul.f32 %v1976, 0.7978846
        %v1981 = vmul.f32 %v1977, 0.7978846
        %v1982 = vtanh.pop %v1978
        %v1983 = vtanh.pop %v1979
        %v1984 = vtanh.pop %v1980
        %v1985 = vtanh.pop %v1981
        %v1986 = vadd.f32 %v1982, 1.0
        %v1987 = vadd.f32 %v1983, 1.0
        %v1988 = vadd.f32 %v1984, 1.0
        %v1989 = vadd.f32 %v1985, 1.0
        %v1990 = vmul.f32 %v1986, 0.5
        %v1991 = vmul.f32 %v1987, 0.5
        %v1992 = vmul.f32 %v1988, 0.5
        %v1993 = vmul.f32 %v1989, 0.5
        %v1994 = vmul.f32 %v1915, %v1990
        %v1995 = vmul.f32 %v1917, %v1991
        %v1996 = vmul.f32 %v1956, %v1992
        %v1997 = vmul.f32 %v1958, %v1993
        %v1998 = vld [vmem:[#allocation13] sm:$0xf]
        %v1999 = vld [vmem:[#allocation13 + $0x4] sm:$0xf]
        %v2000 = vld [vmem:[#allocation13 + $0x8] sm:$0xf]
        %v2001 = vld [vmem:[#allocation13 + $0xc] sm:$0xf]
        %v2002 = vld [vmem:[#allocation13 + $0x10] sm:$0xf]
        %v2003 = vld [vmem:[#allocation13 + $0x14] sm:$0xf]
        %v2004 = vld [vmem:[#allocation13 + $0x18] sm:$0xf]
        %v2005 = vld [vmem:[#allocation13 + $0x1c] sm:$0xf]
        %v2006 = vld [vmem:[#allocation13 + $0x20] sm:$0xf]
        %v2007 = vld [vmem:[#allocation13 + $0x24] sm:$0xf]
        %v2008 = vld [vmem:[#allocation13 + $0x28] sm:$0xf]
        %v2009 = vld [vmem:[#allocation13 + $0x2c] sm:$0xf]
        %v2010 = vld [vmem:[#allocation13 + $0x30] sm:$0xf]
        %v2011 = vld [vmem:[#allocation13 + $0x34] sm:$0xf]
        %v2012 = vld [vmem:[#allocation13 + $0x38] sm:$0xf]
        %v2013 = vld [vmem:[#allocation13 + $0x3c] sm:$0xf]
        %v2014 = vld [vmem:[#allocation13 + $0x40] sm:$0xf]
        %v2015 = vld [vmem:[#allocation13 + $0x44] sm:$0xf]
        %v2016 = vld [vmem:[#allocation13 + $0x48] sm:$0xf]
        %v2017 = vld [vmem:[#allocation13 + $0x4c] sm:$0xf]
        %v2018 = vld [vmem:[#allocation13 + $0x50] sm:$0xf]
        %v2019 = vld [vmem:[#allocation13 + $0x54] sm:$0xf]
        %v2020 = vld [vmem:[#allocation13 + $0x58] sm:$0xf]
        %v2021 = vld [vmem:[#allocation13 + $0x5c] sm:$0xf]
        %v2022 = vld [vmem:[#allocation13 + $0x60] sm:$0xf]
        %v2023 = vld [vmem:[#allocation13 + $0x64] sm:$0xf]
        %v2024 = vld [vmem:[#allocation13 + $0x68] sm:$0xf]
        %v2025 = vld [vmem:[#allocation13 + $0x6c] sm:$0xf]
        %v2026 = vld [vmem:[#allocation13 + $0x70] sm:$0xf]
        %v2027 = vld [vmem:[#allocation13 + $0x74] sm:$0xf]
        %v2028 = vld [vmem:[#allocation13 + $0x78] sm:$0xf]
        %v2029 = vld [vmem:[#allocation13 + $0x7c] sm:$0xf]
        %v2030 = vld [vmem:[#allocation13 + $0x80] sm:$0xf]
        %v2031 = vld [vmem:[#allocation13 + $0x84] sm:$0xf]
        %v2032 = vld [vmem:[#allocation13 + $0x88] sm:$0xf]
        %v2033 = vld [vmem:[#allocation13 + $0x8c] sm:$0xf]
        %v2034 = vld [vmem:[#allocation13 + $0x90] sm:$0xf]
        %v2035 = vld [vmem:[#allocation13 + $0x94] sm:$0xf]
        %v2036 = vld [vmem:[#allocation13 + $0x98] sm:$0xf]
        %v2037 = vld [vmem:[#allocation13 + $0x9c] sm:$0xf]
        %v2038 = vld [vmem:[#allocation13 + $0xa0] sm:$0xf]
        %v2039 = vld [vmem:[#allocation13 + $0xa4] sm:$0xf]
        %v2040 = vld [vmem:[#allocation13 + $0xa8] sm:$0xf]
        %v2041 = vld [vmem:[#allocation13 + $0xac] sm:$0xf]
        %v2042 = vld [vmem:[#allocation13 + $0xb0] sm:$0xf]
        %v2043 = vld [vmem:[#allocation13 + $0xb4] sm:$0xf]
        %v2044 = vld [vmem:[#allocation13 + $0xb8] sm:$0xf]
        %v2045 = vld [vmem:[#allocation13 + $0xbc] sm:$0xf]
        %v2046 = vld [vmem:[#allocation13 + $0xc0] sm:$0xf]
        %v2047 = vld [vmem:[#allocation13 + $0xc4] sm:$0xf]
        %v2048 = vld [vmem:[#allocation13 + $0xc8] sm:$0xf]
        %v2049 = vld [vmem:[#allocation13 + $0xcc] sm:$0xf]
        %v2050 = vld [vmem:[#allocation13 + $0xd0] sm:$0xf]
        %v2051 = vld [vmem:[#allocation13 + $0xd4] sm:$0xf]
        %v2052 = vld [vmem:[#allocation13 + $0xd8] sm:$0xf]
        %v2053 = vld [vmem:[#allocation13 + $0xdc] sm:$0xf]
        %v2054 = vld [vmem:[#allocation13 + $0xe0] sm:$0xf]
        %v2055 = vld [vmem:[#allocation13 + $0xe4] sm:$0xf]
        %v2056 = vld [vmem:[#allocation13 + $0xe8] sm:$0xf]
        %v2057 = vld [vmem:[#allocation13 + $0xec] sm:$0xf]
        %v2058 = vld [vmem:[#allocation13 + $0xf0] sm:$0xf]
        %v2059 = vld [vmem:[#allocation13 + $0xf4] sm:$0xf]
        %v2060 = vld [vmem:[#allocation13 + $0xf8] sm:$0xf]
        %v2061 = vld [vmem:[#allocation13 + $0xfc] sm:$0xf]
        %v2062 = vpack.c.bf16 %v1994, %v1994
        %v2063 = vpack.c.bf16 %v1995, %v1995
        %v2064 = vpack.c.bf16 %v1996, %v1996
        %v2065 = vpack.c.bf16 %v1997, %v1997
        %v2066 = vld [vmem:[#allocation14] sm:$0x1]
        %v2068 = vlaneseq
        %v2069 = vshrl.u32 %v2068, 7
        %v2070 = vsub.s32 0, %v2069
        %v2071 = vrot.slane %v2066, %v2070
        %v2137 = vunpack.c.l.b16 %v1998
        %v2138 = vunpack.c.l.b16 %v1999
        %v2139 = vunpack.c.l.b16 %v2000
        %v2140 = vunpack.c.l.b16 %v2001
        %v2141 = vunpack.c.l.b16 %v2002
        %v2142 = vunpack.c.l.b16 %v2003
        %v2143 = vunpack.c.l.b16 %v2004
        %v2144 = vunpack.c.l.b16 %v2005
        %v2145 = vunpack.c.l.b16 %v2006
        %v2146 = vunpack.c.l.b16 %v2007
        %v2147 = vunpack.c.l.b16 %v2008
        %v2148 = vunpack.c.l.b16 %v2009
        %v2149 = vunpack.c.l.b16 %v2010
        %v2150 = vunpack.c.l.b16 %v2011
        %v2151 = vunpack.c.l.b16 %v2012
        %v2152 = vunpack.c.l.b16 %v2013
        %v2153 = vunpack.c.l.b16 %v2014
        %v2154 = vunpack.c.l.b16 %v2015
        %v2155 = vunpack.c.l.b16 %v2016
        %v2156 = vunpack.c.l.b16 %v2017
        %v2157 = vunpack.c.l.b16 %v2018
        %v2158 = vunpack.c.l.b16 %v2019
        %v2159 = vunpack.c.l.b16 %v2020
        %v2160 = vunpack.c.l.b16 %v2021
        %v2161 = vunpack.c.l.b16 %v2022
        %v2162 = vunpack.c.l.b16 %v2023
        %v2163 = vunpack.c.l.b16 %v2024
        %v2164 = vunpack.c.l.b16 %v2025
        %v2165 = vunpack.c.l.b16 %v2026
        %v2166 = vunpack.c.l.b16 %v2027
        %v2167 = vunpack.c.l.b16 %v2028
        %v2168 = vunpack.c.l.b16 %v2029
        %v2169 = vunpack.c.l.b16 %v2030
        %v2170 = vunpack.c.l.b16 %v2031
        %v2171 = vunpack.c.l.b16 %v2032
        %v2172 = vunpack.c.l.b16 %v2033
        %v2173 = vunpack.c.l.b16 %v2034
        %v2174 = vunpack.c.l.b16 %v2035
        %v2175 = vunpack.c.l.b16 %v2036
        %v2176 = vunpack.c.l.b16 %v2037
        %v2177 = vunpack.c.l.b16 %v2038
        %v2178 = vunpack.c.l.b16 %v2039
        %v2179 = vunpack.c.l.b16 %v2040
        %v2180 = vunpack.c.l.b16 %v2041
        %v2181 = vunpack.c.l.b16 %v2042
        %v2182 = vunpack.c.l.b16 %v2043
        %v2183 = vunpack.c.l.b16 %v2044
        %v2184 = vunpack.c.l.b16 %v2045
        %v2185 = vunpack.c.l.b16 %v2046
        %v2186 = vunpack.c.l.b16 %v2047
        %v2187 = vunpack.c.l.b16 %v2048
        %v2188 = vunpack.c.l.b16 %v2049
        %v2189 = vunpack.c.l.b16 %v2050
        %v2190 = vunpack.c.l.b16 %v2051
        %v2191 = vunpack.c.l.b16 %v2052
        %v2192 = vunpack.c.l.b16 %v2053
        %v2193 = vunpack.c.l.b16 %v2054
        %v2194 = vunpack.c.l.b16 %v2055
        %v2195 = vunpack.c.l.b16 %v2056
        %v2196 = vunpack.c.l.b16 %v2057
        %v2197 = vunpack.c.l.b16 %v2058
        %v2198 = vunpack.c.l.b16 %v2059
        %v2199 = vunpack.c.l.b16 %v2060
        %v2200 = vunpack.c.l.b16 %v2061
        %v2201 = vpack.c.b16 %v2138, %v2137
        %v2202 = vpack.c.b16 %v2140, %v2139
        %v2203 = vpack.c.b16 %v2142, %v2141
        %v2204 = vpack.c.b16 %v2144, %v2143
        %v2205 = vpack.c.b16 %v2146, %v2145
        %v2206 = vpack.c.b16 %v2148, %v2147
        %v2207 = vpack.c.b16 %v2150, %v2149
        %v2208 = vpack.c.b16 %v2152, %v2151
        %v2209 = vpack.c.b16 %v2154, %v2153
        %v2210 = vpack.c.b16 %v2156, %v2155
        %v2211 = vpack.c.b16 %v2158, %v2157
        %v2212 = vpack.c.b16 %v2160, %v2159
        %v2213 = vpack.c.b16 %v2162, %v2161
        %v2214 = vpack.c.b16 %v2164, %v2163
        %v2215 = vpack.c.b16 %v2166, %v2165
        %v2216 = vpack.c.b16 %v2168, %v2167
        %v2217 = vpack.c.b16 %v2170, %v2169
        %v2218 = vpack.c.b16 %v2172, %v2171
        %v2219 = vpack.c.b16 %v2174, %v2173
        %v2220 = vpack.c.b16 %v2176, %v2175
        %v2221 = vpack.c.b16 %v2178, %v2177
        %v2222 = vpack.c.b16 %v2180, %v2179
        %v2223 = vpack.c.b16 %v2182, %v2181
        %v2224 = vpack.c.b16 %v2184, %v2183
        %v2225 = vpack.c.b16 %v2186, %v2185
        %v2226 = vpack.c.b16 %v2188, %v2187
        %v2227 = vpack.c.b16 %v2190, %v2189
        %v2228 = vpack.c.b16 %v2192, %v2191
        %v2229 = vpack.c.b16 %v2194, %v2193
        %v2230 = vpack.c.b16 %v2196, %v2195
        %v2231 = vpack.c.b16 %v2198, %v2197
        %v2232 = vpack.c.b16 %v2200, %v2199
        %2265 = vmatprep.subr.bf16.mxu0 0
        %2266 = vmatpush1.bf16.msra.mxu0 %v2201
        %2267 = vmatprep.subr.bf16.mxu0 0
        %2268 = vmatpush1.bf16.msra.mxu0 %v2202
        %2269 = vmatprep.subr.bf16.mxu0 0
        %2270 = vmatpush1.bf16.msra.mxu0 %v2203
        %2271 = vmatprep.subr.bf16.mxu0 0
        %2272 = vmatpush1.bf16.msra.mxu0 %v2204
        %2273 = vmatprep.subr.bf16.mxu0 0
        %2274 = vmatpush1.bf16.msra.mxu0 %v2205
        %2275 = vmatprep.subr.bf16.mxu0 0
        %2276 = vmatpush1.bf16.msra.mxu0 %v2206
        %2277 = vmatprep.subr.bf16.mxu0 0
        %2278 = vmatpush1.bf16.msra.mxu0 %v2207
        %2279 = vmatprep.subr.bf16.mxu0 0
        %2280 = vmatpush1.bf16.msra.mxu0 %v2208
        %2281 = vmatprep.subr.bf16.mxu0 0
        %2282 = vmatpush1.bf16.msra.mxu0 %v2209
        %2283 = vmatprep.subr.bf16.mxu0 0
        %2284 = vmatpush1.bf16.msra.mxu0 %v2210
        %2285 = vmatprep.subr.bf16.mxu0 0
        %2286 = vmatpush1.bf16.msra.mxu0 %v2211
        %2287 = vmatprep.subr.bf16.mxu0 0
        %2288 = vmatpush1.bf16.msra.mxu0 %v2212
        %2289 = vmatprep.subr.bf16.mxu0 0
        %2290 = vmatpush1.bf16.msra.mxu0 %v2213
        %2291 = vmatprep.subr.bf16.mxu0 0
        %2292 = vmatpush1.bf16.msra.mxu0 %v2214
        %2293 = vmatprep.subr.bf16.mxu0 0
        %2294 = vmatpush1.bf16.msra.mxu0 %v2215
        %2295 = vmatprep.subr.bf16.mxu0 0
        %2296 = vmatpush1.bf16.msra.mxu0 %v2216
        %2297 = vmatprep.mubr.bf16.mxu0 %v2063
        %2298 = vmatmul.mubr.bf16.gmra.mrb[0].mxu0 %v2062
        %v2299 = vpop.f32.mrb[0].mxu0
        %v2300 = vadd.f32 %v2071, %v2299
        %v2301 = vpop.f32.mrb[0].mxu0
        %v2302 = vpop.f32.mrb[0].mxu0
        %v2303 = vpop.f32.mrb[0].mxu0
        %2304 = vdwg.mxu0
        %2305 = vmatprep.subr.bf16.mxu0 0
        %2306 = vmatpush1.bf16.msra.mxu0 %v2217
        %2307 = vmatprep.subr.bf16.mxu0 0
        %2308 = vmatpush1.bf16.msra.mxu0 %v2218
        %2309 = vmatprep.subr.bf16.mxu0 0
        %2310 = vmatpush1.bf16.msra.mxu0 %v2219
        %2311 = vmatprep.subr.bf16.mxu0 0
        %2312 = vmatpush1.bf16.msra.mxu0 %v2220
        %2313 = vmatprep.subr.bf16.mxu0 0
        %2314 = vmatpush1.bf16.msra.mxu0 %v2221
        %2315 = vmatprep.subr.bf16.mxu0 0
        %2316 = vmatpush1.bf16.msra.mxu0 %v2222
        %2317 = vmatprep.subr.bf16.mxu0 0
        %2318 = vmatpush1.bf16.msra.mxu0 %v2223
        %2319 = vmatprep.subr.bf16.mxu0 0
        %2320 = vmatpush1.bf16.msra.mxu0 %v2224
        %2321 = vmatprep.subr.bf16.mxu0 0
        %2322 = vmatpush1.bf16.msra.mxu0 %v2225
        %2323 = vmatprep.subr.bf16.mxu0 0
        %2324 = vmatpush1.bf16.msra.mxu0 %v2226
        %2325 = vmatprep.subr.bf16.mxu0 0
        %2326 = vmatpush1.bf16.msra.mxu0 %v2227
        %2327 = vmatprep.subr.bf16.mxu0 0
        %2328 = vmatpush1.bf16.msra.mxu0 %v2228
        %2329 = vmatprep.subr.bf16.mxu0 0
        %2330 = vmatpush1.bf16.msra.mxu0 %v2229
        %2331 = vmatprep.subr.bf16.mxu0 0
        %2332 = vmatpush1.bf16.msra.mxu0 %v2230
        %2333 = vmatprep.subr.bf16.mxu0 0
        %2334 = vmatpush1.bf16.msra.mxu0 %v2231
        %2335 = vmatprep.subr.bf16.mxu0 0
        %2336 = vmatpush1.bf16.msra.mxu0 %v2232
        %2337 = vmatprep.mubr.bf16.mxu0 %v2065
        %2338 = vmatmul.mubr.bf16.gmra.mrb[0].mxu0 %v2064
        %v2339 = vpop.f32.mrb[0].mxu0
        %v2340 = vadd.f32 %v2300, %v2339
        %v2341 = vpop.f32.mrb[0].mxu0
        %v2342 = vpop.f32.mrb[0].mxu0
        %v2343 = vpop.f32.mrb[0].mxu0
        %2344 = vdwg.mxu0
        %v2345 = vadd.f32 %v2340, %v1664
        %v2346 = vld [vmem:[%s17] sm:$0x1]
        %v2347 = vld [vmem:[%s18] sm:$0x1]
        %2348 = vadd.xlane.f32.xlu0 %v2345
        %v2349 = vpop.xlane.xlu0 %2348
        %v2350 = vmul.f32 %v2349, %v958
        %v2351 = vsub.f32 %v2345, %v2350
        %v2352 = vmul.f32 %v2351, %v2351
        %2353 = vadd.xlane.f32.xlu0 %v2352
        %v2354 = vpop.xlane.xlu0 %2353
        %v2355 = vmul.f32 %v2354, %v958
        %v2356 = vadd.f32 %v2355, 1e-12
        %v2357 = vrsqrt.pop %v2356
        %v2358 = vmul.f32 %v2351, %v2357
        %v2360 = vlaneseq
        %v2361 = vshrl.u32 %v2360, 7
        %v2362 = vsub.s32 0, %v2361
        %v2363 = vrot.slane %v2346, %v2362
        %v2365 = vmul.f32 %v2358, %v2363
        %v2367 = vlaneseq
        %v2368 = vshrl.u32 %v2367, 7
        %v2369 = vsub.s32 0, %v2368
        %v2370 = vrot.slane %v2347, %v2369
        %v2372 = vadd.f32 %v2365, %v2370
        %s2373 = scalar_lea.vmem [#allocation8], 192
        %v2374 = vld [vmem:[%s2373] sm:$0xff]
        %v2375 = vld [vmem:[%s2373 + $0x8] sm:$0xf]
        %v2376 = vld [vmem:[%s2373 + $0xc] sm:$0xff]
        %v2377 = vld [vmem:[%s2373 + $0x14] sm:$0xf]
        %v2378 = vld [vmem:[%s2373 + $0x18] sm:$0xff]
        %v2379 = vld [vmem:[%s2373 + $0x20] sm:$0xf]
        %v2380 = vld [vmem:[%s2373 + $0x24] sm:$0xff]
        %v2381 = vld [vmem:[%s2373 + $0x2c] sm:$0xf]
        %v2382 = vld [vmem:[%s2373 + $0x30] sm:$0xff]
        %v2383 = vld [vmem:[%s2373 + $0x38] sm:$0xf]
        %v2384 = vld [vmem:[%s2373 + $0x3c] sm:$0xff]
        %v2385 = vld [vmem:[%s2373 + $0x44] sm:$0xf]
        %v2386 = vld [vmem:[%s2373 + $0x48] sm:$0xff]
        %v2387 = vld [vmem:[%s2373 + $0x50] sm:$0xf]
        %v2388 = vld [vmem:[%s2373 + $0x54] sm:$0xff]
        %v2389 = vld [vmem:[%s2373 + $0x5c] sm:$0xf]
        %v2390 = vld [vmem:[%s2373 + $0x60] sm:$0xff]
        %v2391 = vld [vmem:[%s2373 + $0x68] sm:$0xf]
        %v2392 = vld [vmem:[%s2373 + $0x6c] sm:$0xff]
        %v2393 = vld [vmem:[%s2373 + $0x74] sm:$0xf]
        %v2394 = vld [vmem:[%s2373 + $0x78] sm:$0xff]
        %v2395 = vld [vmem:[%s2373 + $0x80] sm:$0xf]
        %v2396 = vld [vmem:[%s2373 + $0x84] sm:$0xff]
        %v2397 = vld [vmem:[%s2373 + $0x8c] sm:$0xf]
        %v2398 = vld [vmem:[%s2373 + $0x90] sm:$0xff]
        %v2399 = vld [vmem:[%s2373 + $0x98] sm:$0xf]
        %v2400 = vld [vmem:[%s2373 + $0x9c] sm:$0xff]
        %v2401 = vld [vmem:[%s2373 + $0xa4] sm:$0xf]
        %v2402 = vld [vmem:[%s2373 + $0xa8] sm:$0xff]
        %v2403 = vld [vmem:[%s2373 + $0xb0] sm:$0xf]
        %v2404 = vld [vmem:[%s2373 + $0xb4] sm:$0xff]
        %v2405 = vld [vmem:[%s2373 + $0xbc] sm:$0xf]
        %v2406 = vpack.c.bf16 %v2372, %v2372
        %s2407 = scalar_lea.vmem %s8, 3
        %v2408 = vld [vmem:[%s2407] sm:$0x7]
        %v2410 = vlaneseq
        %v2411 = vshrl.u32 %v2410, 7
        %v2412 = vsub.s32 0, %v2411
        %v2413 = vrot.slane %v2408, %v2412
        %v2414 = vlaneseq
        %v2415 = vshrl.u32 %v2414, 7
        %v2416 = vsub.s32 1, %v2415
        %v2417 = vrot.slane %v2408, %v2416
        %v2418 = vlaneseq
        %v2419 = vshrl.u32 %v2418, 7
        %v2420 = vsub.s32 2, %v2419
        %v2421 = vrot.slane %v2408, %v2420
        %v2457 = vunpack.c.l.b16 %v2374
        %v2458 = vunpack.c.h.b16 %v2374
        %v2459 = vunpack.c.l.b16 %v2375
        %v2460 = vunpack.c.l.b16 %v2376
        %v2461 = vunpack.c.h.b16 %v2376
        %v2462 = vunpack.c.l.b16 %v2377
        %v2463 = vunpack.c.l.b16 %v2378
        %v2464 = vunpack.c.h.b16 %v2378
        %v2465 = vunpack.c.l.b16 %v2379
        %v2466 = vunpack.c.l.b16 %v2380
        %v2467 = vunpack.c.h.b16 %v2380
        %v2468 = vunpack.c.l.b16 %v2381
        %v2469 = vunpack.c.l.b16 %v2382
        %v2470 = vunpack.c.h.b16 %v2382
        %v2471 = vunpack.c.l.b16 %v2383
        %v2472 = vunpack.c.l.b16 %v2384
        %v2473 = vunpack.c.h.b16 %v2384
        %v2474 = vunpack.c.l.b16 %v2385
        %v2475 = vunpack.c.l.b16 %v2386
        %v2476 = vunpack.c.h.b16 %v2386
        %v2477 = vunpack.c.l.b16 %v2387
        %v2478 = vunpack.c.l.b16 %v2388
        %v2479 = vunpack.c.h.b16 %v2388
        %v2480 = vunpack.c.l.b16 %v2389
        %v2481 = vunpack.c.l.b16 %v2390
        %v2482 = vunpack.c.h.b16 %v2390
        %v2483 = vunpack.c.l.b16 %v2391
        %v2484 = vunpack.c.l.b16 %v2392
        %v2485 = vunpack.c.h.b16 %v2392
        %v2486 = vunpack.c.l.b16 %v2393
        %v2487 = vunpack.c.l.b16 %v2394
        %v2488 = vunpack.c.h.b16 %v2394
        %v2489 = vunpack.c.l.b16 %v2395
        %v2490 = vunpack.c.l.b16 %v2396
        %v2491 = vunpack.c.h.b16 %v2396
        %v2492 = vunpack.c.l.b16 %v2397
        %v2493 = vunpack.c.l.b16 %v2398
        %v2494 = vunpack.c.h.b16 %v2398
        %v2495 = vunpack.c.l.b16 %v2399
        %v2496 = vunpack.c.l.b16 %v2400
        %v2497 = vunpack.c.h.b16 %v2400
        %v2498 = vunpack.c.l.b16 %v2401
        %v2499 = vunpack.c.l.b16 %v2402
        %v2500 = vunpack.c.h.b16 %v2402
        %v2501 = vunpack.c.l.b16 %v2403
        %v2502 = vunpack.c.l.b16 %v2404
        %v2503 = vunpack.c.h.b16 %v2404
        %v2504 = vunpack.c.l.b16 %v2405
        %v2505 = vpack.c.b16 %v2460, %v2457
        %v2506 = vpack.c.b16 %v2461, %v2458
        %v2507 = vpack.c.b16 %v2462, %v2459
        %v2508 = vpack.c.b16 %v2466, %v2463
        %v2509 = vpack.c.b16 %v2467, %v2464
        %v2510 = vpack.c.b16 %v2468, %v2465
        %v2511 = vpack.c.b16 %v2472, %v2469
        %v2512 = vpack.c.b16 %v2473, %v2470
        %v2513 = vpack.c.b16 %v2474, %v2471
        %v2514 = vpack.c.b16 %v2478, %v2475
        %v2515 = vpack.c.b16 %v2479, %v2476
        %v2516 = vpack.c.b16 %v2480, %v2477
        %v2517 = vpack.c.b16 %v2484, %v2481
        %v2518 = vpack.c.b16 %v2485, %v2482
        %v2519 = vpack.c.b16 %v2486, %v2483
        %v2520 = vpack.c.b16 %v2490, %v2487
        %v2521 = vpack.c.b16 %v2491, %v2488
        %v2522 = vpack.c.b16 %v2492, %v2489
        %v2523 = vpack.c.b16 %v2496, %v2493
        %v2524 = vpack.c.b16 %v2497, %v2494
        %v2525 = vpack.c.b16 %v2498, %v2495
        %v2526 = vpack.c.b16 %v2502, %v2499
        %v2527 = vpack.c.b16 %v2503, %v2500
        %v2528 = vpack.c.b16 %v2504, %v2501
        %2553 = vmatprep.subr.bf16.mxu0 %v2506
        %2554 = vmatpush1.bf16.msra.mxu0 %v2505
        %2555 = vmatprep.subr.bf16.mxu0 %v2509
        %2556 = vmatpush1.bf16.msra.mxu0 %v2508
        %2557 = vmatprep.subr.bf16.mxu0 %v2512
        %2558 = vmatpush1.bf16.msra.mxu0 %v2511
        %2559 = vmatprep.subr.bf16.mxu0 %v2515
        %2560 = vmatpush1.bf16.msra.mxu0 %v2514
        %2561 = vmatprep.subr.bf16.mxu0 %v2518
        %2562 = vmatpush1.bf16.msra.mxu0 %v2517
        %2563 = vmatprep.subr.bf16.mxu0 %v2521
        %2564 = vmatpush1.bf16.msra.mxu0 %v2520
        %2565 = vmatprep.subr.bf16.mxu0 %v2524
        %2566 = vmatpush1.bf16.msra.mxu0 %v2523
        %2567 = vmatprep.subr.bf16.mxu0 %v2527
        %2568 = vmatpush1.bf16.msra.mxu0 %v2526
        %2569 = vmatprep.subr.bf16.mxu0 0
        %2570 = vmatpush1.bf16.msra.mxu0 0
        %2571 = vmatprep.subr.bf16.mxu0 0
        %2572 = vmatpush1.bf16.msra.mxu0 0
        %2573 = vmatprep.subr.bf16.mxu0 0
        %2574 = vmatpush1.bf16.msra.mxu0 0
        %2575 = vmatprep.subr.bf16.mxu0 0
        %2576 = vmatpush1.bf16.msra.mxu0 0
        %2577 = vmatprep.subr.bf16.mxu0 0
        %2578 = vmatpush1.bf16.msra.mxu0 0
        %2579 = vmatprep.subr.bf16.mxu0 0
        %2580 = vmatpush1.bf16.msra.mxu0 0
        %2581 = vmatprep.subr.bf16.mxu0 0
        %2582 = vmatpush1.bf16.msra.mxu0 0
        %2583 = vmatprep.subr.bf16.mxu0 0
        %2584 = vmatpush1.bf16.msra.mxu0 0
        %2585 = vmatprep.mubr.bf16.mxu0 0
        %2586 = vmatmul.mubr.bf16.gmra.mrb[0].mxu0 %v2406
        %v2587 = vpop.f32.mrb[0].mxu0
        %v2588 = vadd.f32 %v2413, %v2587
        %v2589 = vpop.f32.mrb[0].mxu0
        %v2590 = vadd.f32 %v2417, %v2589
        %v2591 = vpop.f32.mrb[0].mxu0
        %v2592 = vpop.f32.mrb[0].mxu0
        %2593 = vdwg.mxu0
        %2594 = vmatprep.subr.bf16.mxu0 0
        %2595 = vmatpush1.bf16.msra.mxu0 %v2507
        %2596 = vmatprep.subr.bf16.mxu0 0
        %2597 = vmatpush1.bf16.msra.mxu0 %v2510
        %2598 = vmatprep.subr.bf16.mxu0 0
        %2599 = vmatpush1.bf16.msra.mxu0 %v2513
        %2600 = vmatprep.subr.bf16.mxu0 0
        %2601 = vmatpush1.bf16.msra.mxu0 %v2516
        %2602 = vmatprep.subr.bf16.mxu0 0
        %2603 = vmatpush1.bf16.msra.mxu0 %v2519
        %2604 = vmatprep.subr.bf16.mxu0 0
        %2605 = vmatpush1.bf16.msra.mxu0 %v2522
        %2606 = vmatprep.subr.bf16.mxu0 0
        %2607 = vmatpush1.bf16.msra.mxu0 %v2525
        %2608 = vmatprep.subr.bf16.mxu0 0
        %2609 = vmatpush1.bf16.msra.mxu0 %v2528
        %2610 = vmatprep.subr.bf16.mxu0 0
        %2611 = vmatpush1.bf16.msra.mxu0 0
        %2612 = vmatprep.subr.bf16.mxu0 0
        %2613 = vmatpush1.bf16.msra.mxu0 0
        %2614 = vmatprep.subr.bf16.mxu0 0
        %2615 = vmatpush1.bf16.msra.mxu0 0
        %2616 = vmatprep.subr.bf16.mxu0 0
        %2617 = vmatpush1.bf16.msra.mxu0 0
        %2618 = vmatprep.subr.bf16.mxu0 0
        %2619 = vmatpush1.bf16.msra.mxu0 0
        %2620 = vmatprep.subr.bf16.mxu0 0
        %2621 = vmatpush1.bf16.msra.mxu0 0
        %2622 = vmatprep.subr.bf16.mxu0 0
        %2623 = vmatpush1.bf16.msra.mxu0 0
        %2624 = vmatprep.subr.bf16.mxu0 0
        %2625 = vmatpush1.bf16.msra.mxu0 0
        %2626 = vmatprep.mubr.bf16.mxu0 0
        %2627 = vmatmul.mubr.bf16.gmra.mrb[0].mxu0 %v2406
        %v2628 = vpop.f32.mrb[0].mxu0
        %v2629 = vadd.f32 %v2421, %v2628
        %v2630 = vpop.f32.mrb[0].mxu0
        %v2631 = vpop.f32.mrb[0].mxu0
        %v2632 = vpop.f32.mrb[0].mxu0
        %2633 = vdwg.mxu0
        %s2634 = scalar_lea.vmem [#allocation10], 64
        %v2635 = vld [vmem:[%s2634] sm:$0xf]
        %v2636 = vld [vmem:[%s2634 + $0x4] sm:$0xf]
        %v2637 = vld [vmem:[%s2634 + $0x8] sm:$0xf]
        %v2638 = vld [vmem:[%s2634 + $0xc] sm:$0xf]
        %v2639 = vld [vmem:[%s2634 + $0x10] sm:$0xf]
        %v2640 = vld [vmem:[%s2634 + $0x14] sm:$0xf]
        %v2641 = vld [vmem:[%s2634 + $0x18] sm:$0xf]
        %v2642 = vld [vmem:[%s2634 + $0x1c] sm:$0xf]
        %v2643 = vld [vmem:[%s2634 + $0x20] sm:$0xf]
        %v2644 = vld [vmem:[%s2634 + $0x24] sm:$0xf]
        %v2645 = vld [vmem:[%s2634 + $0x28] sm:$0xf]
        %v2646 = vld [vmem:[%s2634 + $0x2c] sm:$0xf]
        %v2647 = vld [vmem:[%s2634 + $0x30] sm:$0xf]
        %v2648 = vld [vmem:[%s2634 + $0x34] sm:$0xf]
        %v2649 = vld [vmem:[%s2634 + $0x38] sm:$0xf]
        %v2650 = vld [vmem:[%s2634 + $0x3c] sm:$0xf]
        %v2651 = vpack.c.bf16 %v2588, %v2588
        %v2652 = vpack.c.bf16 %v2590, %v2590
        %v2653 = vpack.c.bf16 %v2629, %v2629
        %v2655 = vsel %vm1261, %v2651, 0
        %v2658 = vsel %vm1261, %v2652, 0
        %2660 = vmatprep.subr.bf16.mxu0 0
        %2661 = vmatpush1.bf16.xpose.msra.mxu0 %v2658
        %2662 = vmatprep.subr.bf16.mxu0 0
        %2663 = vmatpush1.bf16.xpose.msra.mxu0 0
        %2664 = vmatprep.subr.bf16.mxu0 0
        %2665 = vmatpush1.bf16.xpose.msra.mxu0 0
        %2666 = vmatprep.subr.bf16.mxu0 0
        %2667 = vmatpush1.bf16.xpose.msra.mxu0 0
        %2668 = vmatprep.subr.bf16.mxu0 0
        %2669 = vmatpush1.bf16.xpose.msra.mxu0 0
        %2670 = vmatprep.subr.bf16.mxu0 0
        %2671 = vmatpush1.bf16.xpose.msra.mxu0 0
        %2672 = vmatprep.subr.bf16.mxu0 0
        %2673 = vmatpush1.bf16.xpose.msra.mxu0 0
        %2674 = vmatprep.subr.bf16.mxu0 0
        %2675 = vmatpush1.bf16.xpose.msra.mxu0 0
        %2676 = vmatprep.subr.bf16.mxu0 0
        %2677 = vmatpush1.bf16.xpose.msra.mxu0 0
        %2678 = vmatprep.subr.bf16.mxu0 0
        %2679 = vmatpush1.bf16.xpose.msra.mxu0 0
        %2680 = vmatprep.subr.bf16.mxu0 0
        %2681 = vmatpush1.bf16.xpose.msra.mxu0 0
        %2682 = vmatprep.subr.bf16.mxu0 0
        %2683 = vmatpush1.bf16.xpose.msra.mxu0 0
        %2684 = vmatprep.subr.bf16.mxu0 0
        %2685 = vmatpush1.bf16.xpose.msra.mxu0 0
        %2686 = vmatprep.subr.bf16.mxu0 0
        %2687 = vmatpush1.bf16.xpose.msra.mxu0 0
        %2688 = vmatprep.subr.bf16.mxu0 0
        %2689 = vmatpush1.bf16.xpose.msra.mxu0 0
        %2690 = vmatprep.subr.bf16.mxu0 0
        %2691 = vmatpush1.bf16.xpose.msra.mxu0 0
        %2692 = vmatprep.mubr.bf16.mxu0 0
        %2693 = vmatmul.mubr.bf16.gmra.mrb[0].mxu0 %v2655
        %v2694 = vpop.f32.mrb[0].mxu0
        %v2695 = vadd.f32 0.0, %v2694
        %v2696 = vpop.f32.mrb[0].mxu0
        %v2697 = vpop.f32.mrb[0].mxu0
        %v2698 = vpop.f32.mrb[0].mxu0
        %2699 = vdwg.mxu0
        %v2700 = vmul.f32 %v2695, 0.125
        %v2701 = vadd.f32 %v2700, %v1313
        %v2702 = vsel %vm1316, %v2701, -inf
        %2703 = vmax.xlane.f32.xlu0 %v2702
        %v2704 = vpop.xlane.xlu0 %2703
        %v2705 = vsub.f32 %v2701, %v2704
        %v2706 = vmul.f32 %v2705, 1.442695
        %v2707 = vpow.pop %v2706
        %v2708 = vsel %vm1316, %v2707, 0.0
        %2709 = vadd.xlane.f32.xlu0 %v2708
        %v2710 = vpop.xlane.xlu0 %2709
        %v2711 = vmax.f32 %v2710, 1e-30
        %v2712 = vrcp.pop %v2711
        %v2713 = vmul.f32 %v2707, %v2712
        %v2714 = vpack.c.bf16 %v2713, %v2713
        %v2716 = vsel %vm1316, %v2714, 0
        %v2719 = vsel %vm1333, %v2653, 0
        %2721 = vmatprep.subr.bf16.mxu0 0
        %2722 = vmatpush1.bf16.msra.mxu0 %v2719
        %2723 = vmatprep.subr.bf16.mxu0 0
        %2724 = vmatpush1.bf16.msra.mxu0 0
        %2725 = vmatprep.subr.bf16.mxu0 0
        %2726 = vmatpush1.bf16.msra.mxu0 0
        %2727 = vmatprep.subr.bf16.mxu0 0
        %2728 = vmatpush1.bf16.msra.mxu0 0
        %2729 = vmatprep.subr.bf16.mxu0 0
        %2730 = vmatpush1.bf16.msra.mxu0 0
        %2731 = vmatprep.subr.bf16.mxu0 0
        %2732 = vmatpush1.bf16.msra.mxu0 0
        %2733 = vmatprep.subr.bf16.mxu0 0
        %2734 = vmatpush1.bf16.msra.mxu0 0
        %2735 = vmatprep.subr.bf16.mxu0 0
        %2736 = vmatpush1.bf16.msra.mxu0 0
        %2737 = vmatprep.subr.bf16.mxu0 0
        %2738 = vmatpush1.bf16.msra.mxu0 0
        %2739 = vmatprep.subr.bf16.mxu0 0
        %2740 = vmatpush1.bf16.msra.mxu0 0
        %2741 = vmatprep.subr.bf16.mxu0 0
        %2742 = vmatpush1.bf16.msra.mxu0 0
        %2743 = vmatprep.subr.bf16.mxu0 0
        %2744 = vmatpush1.bf16.msra.mxu0 0
        %2745 = vmatprep.subr.bf16.mxu0 0
        %2746 = vmatpush1.bf16.msra.mxu0 0
        %2747 = vmatprep.subr.bf16.mxu0 0
        %2748 = vmatpush1.bf16.msra.mxu0 0
        %2749 = vmatprep.subr.bf16.mxu0 0
        %2750 = vmatpush1.bf16.msra.mxu0 0
        %2751 = vmatprep.subr.bf16.mxu0 0
        %2752 = vmatpush1.bf16.msra.mxu0 0
        %2753 = vmatprep.mubr.bf16.mxu0 0
        %2754 = vmatmul.mubr.bf16.gmra.mrb[0].mxu0 %v2716
        %v2755 = vpop.f32.mrb[0].mxu0
        %v2756 = vadd.f32 0.0, %v2755
        %v2757 = vpop.f32.mrb[0].mxu0
        %v2758 = vpop.f32.mrb[0].mxu0
        %v2759 = vpop.f32.mrb[0].mxu0
        %2760 = vdwg.mxu0
        %v2761 = vpack.c.bf16 %v2756, %v2756
        %2763 = vrot.lane.b32.xlu0 %v2651, 64
        %v2764 = vpop.permute.xlu0 %2763
        %2766 = vrot.lane.b32.xlu0 %v2652, 64
        %v2767 = vpop.permute.xlu0 %2766
        %v2769 = vsel %vm1261, %v2764, 0
        %v2772 = vsel %vm1261, %v2767, 0
        %2774 = vmatprep.subr.bf16.mxu0 0
        %2775 = vmatpush1.bf16.xpose.msra.mxu0 %v2772
        %2776 = vmatprep.subr.bf16.mxu0 0
        %2777 = vmatpush1.bf16.xpose.msra.mxu0 0
        %2778 = vmatprep.subr.bf16.mxu0 0
        %2779 = vmatpush1.bf16.xpose.msra.mxu0 0
        %2780 = vmatprep.subr.bf16.mxu0 0
        %2781 = vmatpush1.bf16.xpose.msra.mxu0 0
        %2782 = vmatprep.subr.bf16.mxu0 0
        %2783 = vmatpush1.bf16.xpose.msra.mxu0 0
        %2784 = vmatprep.subr.bf16.mxu0 0
        %2785 = vmatpush1.bf16.xpose.msra.mxu0 0
        %2786 = vmatprep.subr.bf16.mxu0 0
        %2787 = vmatpush1.bf16.xpose.msra.mxu0 0
        %2788 = vmatprep.subr.bf16.mxu0 0
        %2789 = vmatpush1.bf16.xpose.msra.mxu0 0
        %2790 = vmatprep.subr.bf16.mxu0 0
        %2791 = vmatpush1.bf16.xpose.msra.mxu0 0
        %2792 = vmatprep.subr.bf16.mxu0 0
        %2793 = vmatpush1.bf16.xpose.msra.mxu0 0
        %2794 = vmatprep.subr.bf16.mxu0 0
        %2795 = vmatpush1.bf16.xpose.msra.mxu0 0
        %2796 = vmatprep.subr.bf16.mxu0 0
        %2797 = vmatpush1.bf16.xpose.msra.mxu0 0
        %2798 = vmatprep.subr.bf16.mxu0 0
        %2799 = vmatpush1.bf16.xpose.msra.mxu0 0
        %2800 = vmatprep.subr.bf16.mxu0 0
        %2801 = vmatpush1.bf16.xpose.msra.mxu0 0
        %2802 = vmatprep.subr.bf16.mxu0 0
        %2803 = vmatpush1.bf16.xpose.msra.mxu0 0
        %2804 = vmatprep.subr.bf16.mxu0 0
        %2805 = vmatpush1.bf16.xpose.msra.mxu0 0
        %2806 = vmatprep.mubr.bf16.mxu0 0
        %2807 = vmatmul.mubr.bf16.gmra.mrb[0].mxu0 %v2769
        %v2808 = vpop.f32.mrb[0].mxu0
        %v2809 = vadd.f32 0.0, %v2808
        %v2810 = vpop.f32.mrb[0].mxu0
        %v2811 = vpop.f32.mrb[0].mxu0
        %v2812 = vpop.f32.mrb[0].mxu0
        %2813 = vdwg.mxu0
        %v2814 = vmul.f32 %v2809, 0.125
        %v2815 = vadd.f32 %v2814, %v1313
        %v2816 = vsel %vm1316, %v2815, -inf
        %2817 = vmax.xlane.f32.xlu0 %v2816
        %v2818 = vpop.xlane.xlu0 %2817
        %v2819 = vsub.f32 %v2815, %v2818
        %v2820 = vmul.f32 %v2819, 1.442695
        %v2821 = vpow.pop %v2820
        %v2822 = vsel %vm1316, %v2821, 0.0
        %2823 = vadd.xlane.f32.xlu0 %v2822
        %v2824 = vpop.xlane.xlu0 %2823
        %v2825 = vmax.f32 %v2824, 1e-30
        %v2826 = vrcp.pop %v2825
        %v2827 = vmul.f32 %v2821, %v2826
        %v2828 = vpack.c.bf16 %v2827, %v2827
        %2830 = vrot.lane.b32.xlu0 %v2653, 64
        %v2831 = vpop.permute.xlu0 %2830
        %v2833 = vsel %vm1316, %v2828, 0
        %v2836 = vsel %vm1333, %v2831, 0
        %2838 = vmatprep.subr.bf16.mxu0 0
        %2839 = vmatpush1.bf16.msra.mxu0 %v2836
        %2840 = vmatprep.subr.bf16.mxu0 0
        %2841 = vmatpush1.bf16.msra.mxu0 0
        %2842 = vmatprep.subr.bf16.mxu0 0
        %2843 = vmatpush1.bf16.msra.mxu0 0
        %2844 = vmatprep.subr.bf16.mxu0 0
        %2845 = vmatpush1.bf16.msra.mxu0 0
        %2846 = vmatprep.subr.bf16.mxu0 0
        %2847 = vmatpush1.bf16.msra.mxu0 0
        %2848 = vmatprep.subr.bf16.mxu0 0
        %2849 = vmatpush1.bf16.msra.mxu0 0
        %2850 = vmatprep.subr.bf16.mxu0 0
        %2851 = vmatpush1.bf16.msra.mxu0 0
        %2852 = vmatprep.subr.bf16.mxu0 0
        %2853 = vmatpush1.bf16.msra.mxu0 0
        %2854 = vmatprep.subr.bf16.mxu0 0
        %2855 = vmatpush1.bf16.msra.mxu0 0
        %2856 = vmatprep.subr.bf16.mxu0 0
        %2857 = vmatpush1.bf16.msra.mxu0 0
        %2858 = vmatprep.subr.bf16.mxu0 0
        %2859 = vmatpush1.bf16.msra.mxu0 0
        %2860 = vmatprep.subr.bf16.mxu0 0
        %2861 = vmatpush1.bf16.msra.mxu0 0
        %2862 = vmatprep.subr.bf16.mxu0 0
        %2863 = vmatpush1.bf16.msra.mxu0 0
        %2864 = vmatprep.subr.bf16.mxu0 0
        %2865 = vmatpush1.bf16.msra.mxu0 0
        %2866 = vmatprep.subr.bf16.mxu0 0
        %2867 = vmatpush1.bf16.msra.mxu0 0
        %2868 = vmatprep.subr.bf16.mxu0 0
        %2869 = vmatpush1.bf16.msra.mxu0 0
        %2870 = vmatprep.mubr.bf16.mxu0 0
        %2871 = vmatmul.mubr.bf16.gmra.mrb[0].mxu0 %v2833
        %v2872 = vpop.f32.mrb[0].mxu0
        %v2873 = vadd.f32 0.0, %v2872
        %v2874 = vpop.f32.mrb[0].mxu0
        %v2875 = vpop.f32.mrb[0].mxu0
        %v2876 = vpop.f32.mrb[0].mxu0
        %2877 = vdwg.mxu0
        %v2878 = vpack.c.bf16 %v2873, %v2873
        %v2887 = vunpack.c.l.b16 %v2643
        %v2888 = vunpack.c.l.b16 %v2644
        %v2889 = vunpack.c.l.b16 %v2645
        %v2890 = vunpack.c.l.b16 %v2646
        %v2891 = vunpack.c.l.b16 %v2647
        %v2892 = vunpack.c.l.b16 %v2648
        %v2893 = vunpack.c.l.b16 %v2649
        %v2894 = vunpack.c.l.b16 %v2650
        %v2895 = vpack.c.b16 %v2888, %v2887
        %v2896 = vpack.c.b16 %v2890, %v2889
        %v2897 = vpack.c.b16 %v2892, %v2891
        %v2898 = vpack.c.b16 %v2894, %v2893
        %v2904 = vsel %vm1261, %v2878, 0
        %2906 = vmatprep.subr.bf16.mxu0 0
        %2907 = vmatpush1.bf16.msra.mxu0 %v2895
        %2908 = vmatprep.subr.bf16.mxu0 0
        %2909 = vmatpush1.bf16.msra.mxu0 %v2896
        %2910 = vmatprep.subr.bf16.mxu0 0
        %2911 = vmatpush1.bf16.msra.mxu0 %v2897
        %2912 = vmatprep.subr.bf16.mxu0 0
        %2913 = vmatpush1.bf16.msra.mxu0 %v2898
        %2914 = vmatprep.subr.bf16.mxu0 0
        %2915 = vmatpush1.bf16.msra.mxu0 0
        %2916 = vmatprep.subr.bf16.mxu0 0
        %2917 = vmatpush1.bf16.msra.mxu0 0
        %2918 = vmatprep.subr.bf16.mxu0 0
        %2919 = vmatpush1.bf16.msra.mxu0 0
        %2920 = vmatprep.subr.bf16.mxu0 0
        %2921 = vmatpush1.bf16.msra.mxu0 0
        %2922 = vmatprep.subr.bf16.mxu0 0
        %2923 = vmatpush1.bf16.msra.mxu0 0
        %2924 = vmatprep.subr.bf16.mxu0 0
        %2925 = vmatpush1.bf16.msra.mxu0 0
        %2926 = vmatprep.subr.bf16.mxu0 0
        %2927 = vmatpush1.bf16.msra.mxu0 0
        %2928 = vmatprep.subr.bf16.mxu0 0
        %2929 = vmatpush1.bf16.msra.mxu0 0
        %2930 = vmatprep.subr.bf16.mxu0 0
        %2931 = vmatpush1.bf16.msra.mxu0 0
        %2932 = vmatprep.subr.bf16.mxu0 0
        %2933 = vmatpush1.bf16.msra.mxu0 0
        %2934 = vmatprep.subr.bf16.mxu0 0
        %2935 = vmatpush1.bf16.msra.mxu0 0
        %2936 = vmatprep.subr.bf16.mxu0 0
        %2937 = vmatpush1.bf16.msra.mxu0 0
        %2938 = vmatprep.mubr.bf16.mxu0 0
        %2939 = vmatmul.mubr.bf16.gmra.mrb[0].mxu0 %v2904
        %v2940 = vpop.f32.mrb[0].mxu0
        %v2941 = vadd.f32 0.0, %v2940
        %v2942 = vpop.f32.mrb[0].mxu0
        %v2943 = vpop.f32.mrb[0].mxu0
        %v2944 = vpop.f32.mrb[0].mxu0
        %2945 = vdwg.mxu0
        %v2954 = vunpack.c.l.b16 %v2635
        %v2955 = vunpack.c.l.b16 %v2636
        %v2956 = vunpack.c.l.b16 %v2637
        %v2957 = vunpack.c.l.b16 %v2638
        %v2958 = vunpack.c.l.b16 %v2639
        %v2959 = vunpack.c.l.b16 %v2640
        %v2960 = vunpack.c.l.b16 %v2641
        %v2961 = vunpack.c.l.b16 %v2642
        %v2962 = vpack.c.b16 %v2955, %v2954
        %v2963 = vpack.c.b16 %v2957, %v2956
        %v2964 = vpack.c.b16 %v2959, %v2958
        %v2965 = vpack.c.b16 %v2961, %v2960
        %v2971 = vsel %vm1261, %v2761, 0
        %2973 = vmatprep.subr.bf16.mxu0 0
        %2974 = vmatpush1.bf16.msra.mxu0 %v2962
        %2975 = vmatprep.subr.bf16.mxu0 0
        %2976 = vmatpush1.bf16.msra.mxu0 %v2963
        %2977 = vmatprep.subr.bf16.mxu0 0
        %2978 = vmatpush1.bf16.msra.mxu0 %v2964
        %2979 = vmatprep.subr.bf16.mxu0 0
        %2980 = vmatpush1.bf16.msra.mxu0 %v2965
        %2981 = vmatprep.subr.bf16.mxu0 0
        %2982 = vmatpush1.bf16.msra.mxu0 0
        %2983 = vmatprep.subr.bf16.mxu0 0
        %2984 = vmatpush1.bf16.msra.mxu0 0
        %2985 = vmatprep.subr.bf16.mxu0 0
        %2986 = vmatpush1.bf16.msra.mxu0 0
        %2987 = vmatprep.subr.bf16.mxu0 0
        %2988 = vmatpush1.bf16.msra.mxu0 0
        %2989 = vmatprep.subr.bf16.mxu0 0
        %2990 = vmatpush1.bf16.msra.mxu0 0
        %2991 = vmatprep.subr.bf16.mxu0 0
        %2992 = vmatpush1.bf16.msra.mxu0 0
        %2993 = vmatprep.subr.bf16.mxu0 0
        %2994 = vmatpush1.bf16.msra.mxu0 0
        %2995 = vmatprep.subr.bf16.mxu0 0
        %2996 = vmatpush1.bf16.msra.mxu0 0
        %2997 = vmatprep.subr.bf16.mxu0 0
        %2998 = vmatpush1.bf16.msra.mxu0 0
        %2999 = vmatprep.subr.bf16.mxu0 0
        %3000 = vmatpush1.bf16.msra.mxu0 0
        %3001 = vmatprep.subr.bf16.mxu0 0
        %3002 = vmatpush1.bf16.msra.mxu0 0
        %3003 = vmatprep.subr.bf16.mxu0 0
        %3004 = vmatpush1.bf16.msra.mxu0 0
        %3005 = vmatprep.mubr.bf16.mxu0 0
        %3006 = vmatmul.mubr.bf16.gmra.mrb[0].mxu0 %v2971
        %v3007 = vpop.f32.mrb[0].mxu0
        %v3008 = vadd.f32 %v2941, %v3007
        %v3009 = vpop.f32.mrb[0].mxu0
        %v3010 = vpop.f32.mrb[0].mxu0
        %v3011 = vpop.f32.mrb[0].mxu0
        %3012 = vdwg.mxu0
        %s3013 = scalar_lea.vmem %s10, 1
        %v3014 = vld [vmem:[%s3013] sm:$0x1]
        %v3016 = vlaneseq
        %v3017 = vshrl.u32 %v3016, 7
        %v3018 = vsub.s32 0, %v3017
        %v3019 = vrot.slane %v3014, %v3018
        %v3021 = vadd.f32 %v3008, %v3019
        %v3022 = vadd.f32 %v3021, %v2372
        %s3023 = scalar_lea.vmem %s11, 1
        %v3024 = vld [vmem:[%s3023] sm:$0x1]
        %s3025 = scalar_lea.vmem %s12, 1
        %v3026 = vld [vmem:[%s3025] sm:$0x1]
        %3027 = vadd.xlane.f32.xlu0 %v3022
        %v3028 = vpop.xlane.xlu0 %3027
        %v3029 = vmul.f32 %v3028, %v958
        %v3030 = vsub.f32 %v3022, %v3029
        %v3031 = vmul.f32 %v3030, %v3030
        %3032 = vadd.xlane.f32.xlu0 %v3031
        %v3033 = vpop.xlane.xlu0 %3032
        %v3034 = vmul.f32 %v3033, %v958
        %v3035 = vadd.f32 %v3034, 1e-12
        %v3036 = vrsqrt.pop %v3035
        %v3037 = vmul.f32 %v3030, %v3036
        %v3039 = vlaneseq
        %v3040 = vshrl.u32 %v3039, 7
        %v3041 = vsub.s32 0, %v3040
        %v3042 = vrot.slane %v3024, %v3041
        %v3044 = vmul.f32 %v3037, %v3042
        %v3046 = vlaneseq
        %v3047 = vshrl.u32 %v3046, 7
        %v3048 = vsub.s32 0, %v3047
        %v3049 = vrot.slane %v3026, %v3048
        %v3051 = vadd.f32 %v3044, %v3049
        %s3052 = scalar_lea.vmem [#allocation11], 256
        %v3053 = vld [vmem:[%s3052] sm:$0xff]
        %v3054 = vld [vmem:[%s3052 + $0x8] sm:$0xff]
        %v3055 = vld [vmem:[%s3052 + $0x10] sm:$0xff]
        %v3056 = vld [vmem:[%s3052 + $0x18] sm:$0xff]
        %v3057 = vld [vmem:[%s3052 + $0x20] sm:$0xff]
        %v3058 = vld [vmem:[%s3052 + $0x28] sm:$0xff]
        %v3059 = vld [vmem:[%s3052 + $0x30] sm:$0xff]
        %v3060 = vld [vmem:[%s3052 + $0x38] sm:$0xff]
        %v3061 = vld [vmem:[%s3052 + $0x40] sm:$0xff]
        %v3062 = vld [vmem:[%s3052 + $0x48] sm:$0xff]
        %v3063 = vld [vmem:[%s3052 + $0x50] sm:$0xff]
        %v3064 = vld [vmem:[%s3052 + $0x58] sm:$0xff]
        %v3065 = vld [vmem:[%s3052 + $0x60] sm:$0xff]
        %v3066 = vld [vmem:[%s3052 + $0x68] sm:$0xff]
        %v3067 = vld [vmem:[%s3052 + $0x70] sm:$0xff]
        %v3068 = vld [vmem:[%s3052 + $0x78] sm:$0xff]
        %v3069 = vld [vmem:[%s3052 + $0x80] sm:$0xff]
        %v3070 = vld [vmem:[%s3052 + $0x88] sm:$0xff]
        %v3071 = vld [vmem:[%s3052 + $0x90] sm:$0xff]
        %v3072 = vld [vmem:[%s3052 + $0x98] sm:$0xff]
        %v3073 = vld [vmem:[%s3052 + $0xa0] sm:$0xff]
        %v3074 = vld [vmem:[%s3052 + $0xa8] sm:$0xff]
        %v3075 = vld [vmem:[%s3052 + $0xb0] sm:$0xff]
        %v3076 = vld [vmem:[%s3052 + $0xb8] sm:$0xff]
        %v3077 = vld [vmem:[%s3052 + $0xc0] sm:$0xff]
        %v3078 = vld [vmem:[%s3052 + $0xc8] sm:$0xff]
        %v3079 = vld [vmem:[%s3052 + $0xd0] sm:$0xff]
        %v3080 = vld [vmem:[%s3052 + $0xd8] sm:$0xff]
        %v3081 = vld [vmem:[%s3052 + $0xe0] sm:$0xff]
        %v3082 = vld [vmem:[%s3052 + $0xe8] sm:$0xff]
        %v3083 = vld [vmem:[%s3052 + $0xf0] sm:$0xff]
        %v3084 = vld [vmem:[%s3052 + $0xf8] sm:$0xff]
        %v3085 = vpack.c.bf16 %v3051, %v3051
        %s3086 = scalar_lea.vmem %s14, 4
        %v3087 = vld [vmem:[%s3086] sm:$0xf]
        %v3089 = vlaneseq
        %v3090 = vshrl.u32 %v3089, 7
        %v3091 = vsub.s32 0, %v3090
        %v3092 = vrot.slane %v3087, %v3091
        %v3093 = vlaneseq
        %v3094 = vshrl.u32 %v3093, 7
        %v3095 = vsub.s32 1, %v3094
        %v3096 = vrot.slane %v3087, %v3095
        %v3097 = vlaneseq
        %v3098 = vshrl.u32 %v3097, 7
        %v3099 = vsub.s32 2, %v3098
        %v3100 = vrot.slane %v3087, %v3099
        %v3101 = vlaneseq
        %v3102 = vshrl.u32 %v3101, 7
        %v3103 = vsub.s32 3, %v3102
        %v3104 = vrot.slane %v3087, %v3103
        %v3141 = vunpack.c.l.b16 %v3053
        %v3142 = vunpack.c.h.b16 %v3053
        %v3143 = vunpack.c.l.b16 %v3054
        %v3144 = vunpack.c.h.b16 %v3054
        %v3145 = vunpack.c.l.b16 %v3055
        %v3146 = vunpack.c.h.b16 %v3055
        %v3147 = vunpack.c.l.b16 %v3056
        %v3148 = vunpack.c.h.b16 %v3056
        %v3149 = vunpack.c.l.b16 %v3057
        %v3150 = vunpack.c.h.b16 %v3057
        %v3151 = vunpack.c.l.b16 %v3058
        %v3152 = vunpack.c.h.b16 %v3058
        %v3153 = vunpack.c.l.b16 %v3059
        %v3154 = vunpack.c.h.b16 %v3059
        %v3155 = vunpack.c.l.b16 %v3060
        %v3156 = vunpack.c.h.b16 %v3060
        %v3157 = vunpack.c.l.b16 %v3061
        %v3158 = vunpack.c.h.b16 %v3061
        %v3159 = vunpack.c.l.b16 %v3062
        %v3160 = vunpack.c.h.b16 %v3062
        %v3161 = vunpack.c.l.b16 %v3063
        %v3162 = vunpack.c.h.b16 %v3063
        %v3163 = vunpack.c.l.b16 %v3064
        %v3164 = vunpack.c.h.b16 %v3064
        %v3165 = vunpack.c.l.b16 %v3065
        %v3166 = vunpack.c.h.b16 %v3065
        %v3167 = vunpack.c.l.b16 %v3066
        %v3168 = vunpack.c.h.b16 %v3066
        %v3169 = vunpack.c.l.b16 %v3067
        %v3170 = vunpack.c.h.b16 %v3067
        %v3171 = vunpack.c.l.b16 %v3068
        %v3172 = vunpack.c.h.b16 %v3068
        %v3173 = vunpack.c.l.b16 %v3069
        %v3174 = vunpack.c.h.b16 %v3069
        %v3175 = vunpack.c.l.b16 %v3070
        %v3176 = vunpack.c.h.b16 %v3070
        %v3177 = vunpack.c.l.b16 %v3071
        %v3178 = vunpack.c.h.b16 %v3071
        %v3179 = vunpack.c.l.b16 %v3072
        %v3180 = vunpack.c.h.b16 %v3072
        %v3181 = vunpack.c.l.b16 %v3073
        %v3182 = vunpack.c.h.b16 %v3073
        %v3183 = vunpack.c.l.b16 %v3074
        %v3184 = vunpack.c.h.b16 %v3074
        %v3185 = vunpack.c.l.b16 %v3075
        %v3186 = vunpack.c.h.b16 %v3075
        %v3187 = vunpack.c.l.b16 %v3076
        %v3188 = vunpack.c.h.b16 %v3076
        %v3189 = vunpack.c.l.b16 %v3077
        %v3190 = vunpack.c.h.b16 %v3077
        %v3191 = vunpack.c.l.b16 %v3078
        %v3192 = vunpack.c.h.b16 %v3078
        %v3193 = vunpack.c.l.b16 %v3079
        %v3194 = vunpack.c.h.b16 %v3079
        %v3195 = vunpack.c.l.b16 %v3080
        %v3196 = vunpack.c.h.b16 %v3080
        %v3197 = vunpack.c.l.b16 %v3081
        %v3198 = vunpack.c.h.b16 %v3081
        %v3199 = vunpack.c.l.b16 %v3082
        %v3200 = vunpack.c.h.b16 %v3082
        %v3201 = vunpack.c.l.b16 %v3083
        %v3202 = vunpack.c.h.b16 %v3083
        %v3203 = vunpack.c.l.b16 %v3084
        %v3204 = vunpack.c.h.b16 %v3084
        %v3205 = vpack.c.b16 %v3145, %v3141
        %v3206 = vpack.c.b16 %v3146, %v3142
        %v3207 = vpack.c.b16 %v3147, %v3143
        %v3208 = vpack.c.b16 %v3148, %v3144
        %v3209 = vpack.c.b16 %v3153, %v3149
        %v3210 = vpack.c.b16 %v3154, %v3150
        %v3211 = vpack.c.b16 %v3155, %v3151
        %v3212 = vpack.c.b16 %v3156, %v3152
        %v3213 = vpack.c.b16 %v3161, %v3157
        %v3214 = vpack.c.b16 %v3162, %v3158
        %v3215 = vpack.c.b16 %v3163, %v3159
        %v3216 = vpack.c.b16 %v3164, %v3160
        %v3217 = vpack.c.b16 %v3169, %v3165
        %v3218 = vpack.c.b16 %v3170, %v3166
        %v3219 = vpack.c.b16 %v3171, %v3167
        %v3220 = vpack.c.b16 %v3172, %v3168
        %v3221 = vpack.c.b16 %v3177, %v3173
        %v3222 = vpack.c.b16 %v3178, %v3174
        %v3223 = vpack.c.b16 %v3179, %v3175
        %v3224 = vpack.c.b16 %v3180, %v3176
        %v3225 = vpack.c.b16 %v3185, %v3181
        %v3226 = vpack.c.b16 %v3186, %v3182
        %v3227 = vpack.c.b16 %v3187, %v3183
        %v3228 = vpack.c.b16 %v3188, %v3184
        %v3229 = vpack.c.b16 %v3193, %v3189
        %v3230 = vpack.c.b16 %v3194, %v3190
        %v3231 = vpack.c.b16 %v3195, %v3191
        %v3232 = vpack.c.b16 %v3196, %v3192
        %v3233 = vpack.c.b16 %v3201, %v3197
        %v3234 = vpack.c.b16 %v3202, %v3198
        %v3235 = vpack.c.b16 %v3203, %v3199
        %v3236 = vpack.c.b16 %v3204, %v3200
        %3269 = vmatprep.subr.bf16.mxu0 %v3206
        %3270 = vmatpush1.bf16.msra.mxu0 %v3205
        %3271 = vmatprep.subr.bf16.mxu0 %v3210
        %3272 = vmatpush1.bf16.msra.mxu0 %v3209
        %3273 = vmatprep.subr.bf16.mxu0 %v3214
        %3274 = vmatpush1.bf16.msra.mxu0 %v3213
        %3275 = vmatprep.subr.bf16.mxu0 %v3218
        %3276 = vmatpush1.bf16.msra.mxu0 %v3217
        %3277 = vmatprep.subr.bf16.mxu0 %v3222
        %3278 = vmatpush1.bf16.msra.mxu0 %v3221
        %3279 = vmatprep.subr.bf16.mxu0 %v3226
        %3280 = vmatpush1.bf16.msra.mxu0 %v3225
        %3281 = vmatprep.subr.bf16.mxu0 %v3230
        %3282 = vmatpush1.bf16.msra.mxu0 %v3229
        %3283 = vmatprep.subr.bf16.mxu0 %v3234
        %3284 = vmatpush1.bf16.msra.mxu0 %v3233
        %3285 = vmatprep.subr.bf16.mxu0 0
        %3286 = vmatpush1.bf16.msra.mxu0 0
        %3287 = vmatprep.subr.bf16.mxu0 0
        %3288 = vmatpush1.bf16.msra.mxu0 0
        %3289 = vmatprep.subr.bf16.mxu0 0
        %3290 = vmatpush1.bf16.msra.mxu0 0
        %3291 = vmatprep.subr.bf16.mxu0 0
        %3292 = vmatpush1.bf16.msra.mxu0 0
        %3293 = vmatprep.subr.bf16.mxu0 0
        %3294 = vmatpush1.bf16.msra.mxu0 0
        %3295 = vmatprep.subr.bf16.mxu0 0
        %3296 = vmatpush1.bf16.msra.mxu0 0
        %3297 = vmatprep.subr.bf16.mxu0 0
        %3298 = vmatpush1.bf16.msra.mxu0 0
        %3299 = vmatprep.subr.bf16.mxu0 0
        %3300 = vmatpush1.bf16.msra.mxu0 0
        %3301 = vmatprep.mubr.bf16.mxu0 0
        %3302 = vmatmul.mubr.bf16.gmra.mrb[0].mxu0 %v3085
        %v3303 = vpop.f32.mrb[0].mxu0
        %v3304 = vadd.f32 %v3092, %v3303
        %v3305 = vpop.f32.mrb[0].mxu0
        %v3306 = vadd.f32 %v3096, %v3305
        %v3307 = vpop.f32.mrb[0].mxu0
        %v3308 = vpop.f32.mrb[0].mxu0
        %3309 = vdwg.mxu0
        %3310 = vmatprep.subr.bf16.mxu0 %v3208
        %3311 = vmatpush1.bf16.msra.mxu0 %v3207
        %3312 = vmatprep.subr.bf16.mxu0 %v3212
        %3313 = vmatpush1.bf16.msra.mxu0 %v3211
        %3314 = vmatprep.subr.bf16.mxu0 %v3216
        %3315 = vmatpush1.bf16.msra.mxu0 %v3215
        %3316 = vmatprep.subr.bf16.mxu0 %v3220
        %3317 = vmatpush1.bf16.msra.mxu0 %v3219
        %3318 = vmatprep.subr.bf16.mxu0 %v3224
        %3319 = vmatpush1.bf16.msra.mxu0 %v3223
        %3320 = vmatprep.subr.bf16.mxu0 %v3228
        %3321 = vmatpush1.bf16.msra.mxu0 %v3227
        %3322 = vmatprep.subr.bf16.mxu0 %v3232
        %3323 = vmatpush1.bf16.msra.mxu0 %v3231
        %3324 = vmatprep.subr.bf16.mxu0 %v3236
        %3325 = vmatpush1.bf16.msra.mxu0 %v3235
        %3326 = vmatprep.subr.bf16.mxu0 0
        %3327 = vmatpush1.bf16.msra.mxu0 0
        %3328 = vmatprep.subr.bf16.mxu0 0
        %3329 = vmatpush1.bf16.msra.mxu0 0
        %3330 = vmatprep.subr.bf16.mxu0 0
        %3331 = vmatpush1.bf16.msra.mxu0 0
        %3332 = vmatprep.subr.bf16.mxu0 0
        %3333 = vmatpush1.bf16.msra.mxu0 0
        %3334 = vmatprep.subr.bf16.mxu0 0
        %3335 = vmatpush1.bf16.msra.mxu0 0
        %3336 = vmatprep.subr.bf16.mxu0 0
        %3337 = vmatpush1.bf16.msra.mxu0 0
        %3338 = vmatprep.subr.bf16.mxu0 0
        %3339 = vmatpush1.bf16.msra.mxu0 0
        %3340 = vmatprep.subr.bf16.mxu0 0
        %3341 = vmatpush1.bf16.msra.mxu0 0
        %3342 = vmatprep.mubr.bf16.mxu0 0
        %3343 = vmatmul.mubr.bf16.gmra.mrb[0].mxu0 %v3085
        %v3344 = vpop.f32.mrb[0].mxu0
        %v3345 = vadd.f32 %v3100, %v3344
        %v3346 = vpop.f32.mrb[0].mxu0
        %v3347 = vadd.f32 %v3104, %v3346
        %v3348 = vpop.f32.mrb[0].mxu0
        %v3349 = vpop.f32.mrb[0].mxu0
        %3350 = vdwg.mxu0
        %v3351 = vmul.f32 %v3304, %v3304
        %v3352 = vmul.f32 %v3306, %v3306
        %v3353 = vmul.f32 %v3345, %v3345
        %v3354 = vmul.f32 %v3347, %v3347
        %v3355 = vmul.f32 %v3304, %v3351
        %v3356 = vmul.f32 %v3306, %v3352
        %v3357 = vmul.f32 %v3345, %v3353
        %v3358 = vmul.f32 %v3347, %v3354
        %v3359 = vmul.f32 %v3355, 0.044715
        %v3360 = vmul.f32 %v3356, 0.044715
        %v3361 = vmul.f32 %v3357, 0.044715
        %v3362 = vmul.f32 %v3358, 0.044715
        %v3363 = vadd.f32 %v3304, %v3359
        %v3364 = vadd.f32 %v3306, %v3360
        %v3365 = vadd.f32 %v3345, %v3361
        %v3366 = vadd.f32 %v3347, %v3362
        %v3367 = vmul.f32 %v3363, 0.7978846
        %v3368 = vmul.f32 %v3364, 0.7978846
        %v3369 = vmul.f32 %v3365, 0.7978846
        %v3370 = vmul.f32 %v3366, 0.7978846
        %v3371 = vtanh.pop %v3367
        %v3372 = vtanh.pop %v3368
        %v3373 = vtanh.pop %v3369
        %v3374 = vtanh.pop %v3370
        %v3375 = vadd.f32 %v3371, 1.0
        %v3376 = vadd.f32 %v3372, 1.0
        %v3377 = vadd.f32 %v3373, 1.0
        %v3378 = vadd.f32 %v3374, 1.0
        %v3379 = vmul.f32 %v3375, 0.5
        %v3380 = vmul.f32 %v3376, 0.5
        %v3381 = vmul.f32 %v3377, 0.5
        %v3382 = vmul.f32 %v3378, 0.5
        %v3383 = vmul.f32 %v3304, %v3379
        %v3384 = vmul.f32 %v3306, %v3380
        %v3385 = vmul.f32 %v3345, %v3381
        %v3386 = vmul.f32 %v3347, %v3382
        %s3387 = scalar_lea.vmem [#allocation13], 256
        %v3388 = vld [vmem:[%s3387] sm:$0xf]
        %v3389 = vld [vmem:[%s3387 + $0x4] sm:$0xf]
        %v3390 = vld [vmem:[%s3387 + $0x8] sm:$0xf]
        %v3391 = vld [vmem:[%s3387 + $0xc] sm:$0xf]
        %v3392 = vld [vmem:[%s3387 + $0x10] sm:$0xf]
        %v3393 = vld [vmem:[%s3387 + $0x14] sm:$0xf]
        %v3394 = vld [vmem:[%s3387 + $0x18] sm:$0xf]
        %v3395 = vld [vmem:[%s3387 + $0x1c] sm:$0xf]
        %v3396 = vld [vmem:[%s3387 + $0x20] sm:$0xf]
        %v3397 = vld [vmem:[%s3387 + $0x24] sm:$0xf]
        %v3398 = vld [vmem:[%s3387 + $0x28] sm:$0xf]
        %v3399 = vld [vmem:[%s3387 + $0x2c] sm:$0xf]
        %v3400 = vld [vmem:[%s3387 + $0x30] sm:$0xf]
        %v3401 = vld [vmem:[%s3387 + $0x34] sm:$0xf]
        %v3402 = vld [vmem:[%s3387 + $0x38] sm:$0xf]
        %v3403 = vld [vmem:[%s3387 + $0x3c] sm:$0xf]
        %v3404 = vld [vmem:[%s3387 + $0x40] sm:$0xf]
        %v3405 = vld [vmem:[%s3387 + $0x44] sm:$0xf]
        %v3406 = vld [vmem:[%s3387 + $0x48] sm:$0xf]
        %v3407 = vld [vmem:[%s3387 + $0x4c] sm:$0xf]
        %v3408 = vld [vmem:[%s3387 + $0x50] sm:$0xf]
        %v3409 = vld [vmem:[%s3387 + $0x54] sm:$0xf]
        %v3410 = vld [vmem:[%s3387 + $0x58] sm:$0xf]
        %v3411 = vld [vmem:[%s3387 + $0x5c] sm:$0xf]
        %v3412 = vld [vmem:[%s3387 + $0x60] sm:$0xf]
        %v3413 = vld [vmem:[%s3387 + $0x64] sm:$0xf]
        %v3414 = vld [vmem:[%s3387 + $0x68] sm:$0xf]
        %v3415 = vld [vmem:[%s3387 + $0x6c] sm:$0xf]
        %v3416 = vld [vmem:[%s3387 + $0x70] sm:$0xf]
        %v3417 = vld [vmem:[%s3387 + $0x74] sm:$0xf]
        %v3418 = vld [vmem:[%s3387 + $0x78] sm:$0xf]
        %v3419 = vld [vmem:[%s3387 + $0x7c] sm:$0xf]
        %v3420 = vld [vmem:[%s3387 + $0x80] sm:$0xf]
        %v3421 = vld [vmem:[%s3387 + $0x84] sm:$0xf]
        %v3422 = vld [vmem:[%s3387 + $0x88] sm:$0xf]
        %v3423 = vld [vmem:[%s3387 + $0x8c] sm:$0xf]
        %v3424 = vld [vmem:[%s3387 + $0x90] sm:$0xf]
        %v3425 = vld [vmem:[%s3387 + $0x94] sm:$0xf]
        %v3426 = vld [vmem:[%s3387 + $0x98] sm:$0xf]
        %v3427 = vld [vmem:[%s3387 + $0x9c] sm:$0xf]
        %v3428 = vld [vmem:[%s3387 + $0xa0] sm:$0xf]
        %v3429 = vld [vmem:[%s3387 + $0xa4] sm:$0xf]
        %v3430 = vld [vmem:[%s3387 + $0xa8] sm:$0xf]
        %v3431 = vld [vmem:[%s3387 + $0xac] sm:$0xf]
        %v3432 = vld [vmem:[%s3387 + $0xb0] sm:$0xf]
        %v3433 = vld [vmem:[%s3387 + $0xb4] sm:$0xf]
        %v3434 = vld [vmem:[%s3387 + $0xb8] sm:$0xf]
        %v3435 = vld [vmem:[%s3387 + $0xbc] sm:$0xf]
        %v3436 = vld [vmem:[%s3387 + $0xc0] sm:$0xf]
        %v3437 = vld [vmem:[%s3387 + $0xc4] sm:$0xf]
        %v3438 = vld [vmem:[%s3387 + $0xc8] sm:$0xf]
        %v3439 = vld [vmem:[%s3387 + $0xcc] sm:$0xf]
        %v3440 = vld [vmem:[%s3387 + $0xd0] sm:$0xf]
        %v3441 = vld [vmem:[%s3387 + $0xd4] sm:$0xf]
        %v3442 = vld [vmem:[%s3387 + $0xd8] sm:$0xf]
        %v3443 = vld [vmem:[%s3387 + $0xdc] sm:$0xf]
        %v3444 = vld [vmem:[%s3387 + $0xe0] sm:$0xf]
        %v3445 = vld [vmem:[%s3387 + $0xe4] sm:$0xf]
        %v3446 = vld [vmem:[%s3387 + $0xe8] sm:$0xf]
        %v3447 = vld [vmem:[%s3387 + $0xec] sm:$0xf]
        %v3448 = vld [vmem:[%s3387 + $0xf0] sm:$0xf]
        %v3449 = vld [vmem:[%s3387 + $0xf4] sm:$0xf]
        %v3450 = vld [vmem:[%s3387 + $0xf8] sm:$0xf]
        %v3451 = vld [vmem:[%s3387 + $0xfc] sm:$0xf]
        %v3452 = vpack.c.bf16 %v3383, %v3383
        %v3453 = vpack.c.bf16 %v3384, %v3384
        %v3454 = vpack.c.bf16 %v3385, %v3385
        %v3455 = vpack.c.bf16 %v3386, %v3386
        %s3456 = scalar_lea.vmem [#allocation14], 1
        %v3457 = vld [vmem:[%s3456] sm:$0x1]
        %v3459 = vlaneseq
        %v3460 = vshrl.u32 %v3459, 7
        %v3461 = vsub.s32 0, %v3460
        %v3462 = vrot.slane %v3457, %v3461
        %v3528 = vunpack.c.l.b16 %v3388
        %v3529 = vunpack.c.l.b16 %v3389
        %v3530 = vunpack.c.l.b16 %v3390
        %v3531 = vunpack.c.l.b16 %v3391
        %v3532 = vunpack.c.l.b16 %v3392
        %v3533 = vunpack.c.l.b16 %v3393
        %v3534 = vunpack.c.l.b16 %v3394
        %v3535 = vunpack.c.l.b16 %v3395
        %v3536 = vunpack.c.l.b16 %v3396
        %v3537 = vunpack.c.l.b16 %v3397
        %v3538 = vunpack.c.l.b16 %v3398
        %v3539 = vunpack.c.l.b16 %v3399
        %v3540 = vunpack.c.l.b16 %v3400
        %v3541 = vunpack.c.l.b16 %v3401
        %v3542 = vunpack.c.l.b16 %v3402
        %v3543 = vunpack.c.l.b16 %v3403
        %v3544 = vunpack.c.l.b16 %v3404
        %v3545 = vunpack.c.l.b16 %v3405
        %v3546 = vunpack.c.l.b16 %v3406
        %v3547 = vunpack.c.l.b16 %v3407
        %v3548 = vunpack.c.l.b16 %v3408
        %v3549 = vunpack.c.l.b16 %v3409
        %v3550 = vunpack.c.l.b16 %v3410
        %v3551 = vunpack.c.l.b16 %v3411
        %v3552 = vunpack.c.l.b16 %v3412
        %v3553 = vunpack.c.l.b16 %v3413
        %v3554 = vunpack.c.l.b16 %v3414
        %v3555 = vunpack.c.l.b16 %v3415
        %v3556 = vunpack.c.l.b16 %v3416
        %v3557 = vunpack.c.l.b16 %v3417
        %v3558 = vunpack.c.l.b16 %v3418
        %v3559 = vunpack.c.l.b16 %v3419
        %v3560 = vunpack.c.l.b16 %v3420
        %v3561 = vunpack.c.l.b16 %v3421
        %v3562 = vunpack.c.l.b16 %v3422
        %v3563 = vunpack.c.l.b16 %v3423
        %v3564 = vunpack.c.l.b16 %v3424
        %v3565 = vunpack.c.l.b16 %v3425
        %v3566 = vunpack.c.l.b16 %v3426
        %v3567 = vunpack.c.l.b16 %v3427
        %v3568 = vunpack.c.l.b16 %v3428
        %v3569 = vunpack.c.l.b16 %v3429
        %v3570 = vunpack.c.l.b16 %v3430
        %v3571 = vunpack.c.l.b16 %v3431
        %v3572 = vunpack.c.l.b16 %v3432
        %v3573 = vunpack.c.l.b16 %v3433
        %v3574 = vunpack.c.l.b16 %v3434
        %v3575 = vunpack.c.l.b16 %v3435
        %v3576 = vunpack.c.l.b16 %v3436
        %v3577 = vunpack.c.l.b16 %v3437
        %v3578 = vunpack.c.l.b16 %v3438
        %v3579 = vunpack.c.l.b16 %v3439
        %v3580 = vunpack.c.l.b16 %v3440
        %v3581 = vunpack.c.l.b16 %v3441
        %v3582 = vunpack.c.l.b16 %v3442
        %v3583 = vunpack.c.l.b16 %v3443
        %v3584 = vunpack.c.l.b16 %v3444
        %v3585 = vunpack.c.l.b16 %v3445
        %v3586 = vunpack.c.l.b16 %v3446
        %v3587 = vunpack.c.l.b16 %v3447
        %v3588 = vunpack.c.l.b16 %v3448
        %v3589 = vunpack.c.l.b16 %v3449
        %v3590 = vunpack.c.l.b16 %v3450
        %v3591 = vunpack.c.l.b16 %v3451
        %v3592 = vpack.c.b16 %v3529, %v3528
        %v3593 = vpack.c.b16 %v3531, %v3530
        %v3594 = vpack.c.b16 %v3533, %v3532
        %v3595 = vpack.c.b16 %v3535, %v3534
        %v3596 = vpack.c.b16 %v3537, %v3536
        %v3597 = vpack.c.b16 %v3539, %v3538
        %v3598 = vpack.c.b16 %v3541, %v3540
        %v3599 = vpack.c.b16 %v3543, %v3542
        %v3600 = vpack.c.b16 %v3545, %v3544
        %v3601 = vpack.c.b16 %v3547, %v3546
        %v3602 = vpack.c.b16 %v3549, %v3548
        %v3603 = vpack.c.b16 %v3551, %v3550
        %v3604 = vpack.c.b16 %v3553, %v3552
        %v3605 = vpack.c.b16 %v3555, %v3554
        %v3606 = vpack.c.b16 %v3557, %v3556
        %v3607 = vpack.c.b16 %v3559, %v3558
        %v3608 = vpack.c.b16 %v3561, %v3560
        %v3609 = vpack.c.b16 %v3563, %v3562
        %v3610 = vpack.c.b16 %v3565, %v3564
        %v3611 = vpack.c.b16 %v3567, %v3566
        %v3612 = vpack.c.b16 %v3569, %v3568
        %v3613 = vpack.c.b16 %v3571, %v3570
        %v3614 = vpack.c.b16 %v3573, %v3572
        %v3615 = vpack.c.b16 %v3575, %v3574
        %v3616 = vpack.c.b16 %v3577, %v3576
        %v3617 = vpack.c.b16 %v3579, %v3578
        %v3618 = vpack.c.b16 %v3581, %v3580
        %v3619 = vpack.c.b16 %v3583, %v3582
        %v3620 = vpack.c.b16 %v3585, %v3584
        %v3621 = vpack.c.b16 %v3587, %v3586
        %v3622 = vpack.c.b16 %v3589, %v3588
        %v3623 = vpack.c.b16 %v3591, %v3590
        %3656 = vmatprep.subr.bf16.mxu0 0
        %3657 = vmatpush1.bf16.msra.mxu0 %v3592
        %3658 = vmatprep.subr.bf16.mxu0 0
        %3659 = vmatpush1.bf16.msra.mxu0 %v3593
        %3660 = vmatprep.subr.bf16.mxu0 0
        %3661 = vmatpush1.bf16.msra.mxu0 %v3594
        %3662 = vmatprep.subr.bf16.mxu0 0
        %3663 = vmatpush1.bf16.msra.mxu0 %v3595
        %3664 = vmatprep.subr.bf16.mxu0 0
        %3665 = vmatpush1.bf16.msra.mxu0 %v3596
        %3666 = vmatprep.subr.bf16.mxu0 0
        %3667 = vmatpush1.bf16.msra.mxu0 %v3597
        %3668 = vmatprep.subr.bf16.mxu0 0
        %3669 = vmatpush1.bf16.msra.mxu0 %v3598
        %3670 = vmatprep.subr.bf16.mxu0 0
        %3671 = vmatpush1.bf16.msra.mxu0 %v3599
        %3672 = vmatprep.subr.bf16.mxu0 0
        %3673 = vmatpush1.bf16.msra.mxu0 %v3600
        %3674 = vmatprep.subr.bf16.mxu0 0
        %3675 = vmatpush1.bf16.msra.mxu0 %v3601
        %3676 = vmatprep.subr.bf16.mxu0 0
        %3677 = vmatpush1.bf16.msra.mxu0 %v3602
        %3678 = vmatprep.subr.bf16.mxu0 0
        %3679 = vmatpush1.bf16.msra.mxu0 %v3603
        %3680 = vmatprep.subr.bf16.mxu0 0
        %3681 = vmatpush1.bf16.msra.mxu0 %v3604
        %3682 = vmatprep.subr.bf16.mxu0 0
        %3683 = vmatpush1.bf16.msra.mxu0 %v3605
        %3684 = vmatprep.subr.bf16.mxu0 0
        %3685 = vmatpush1.bf16.msra.mxu0 %v3606
        %3686 = vmatprep.subr.bf16.mxu0 0
        %3687 = vmatpush1.bf16.msra.mxu0 %v3607
        %3688 = vmatprep.mubr.bf16.mxu0 %v3453
        %3689 = vmatmul.mubr.bf16.gmra.mrb[0].mxu0 %v3452
        %v3690 = vpop.f32.mrb[0].mxu0
        %v3691 = vadd.f32 %v3462, %v3690
        %v3692 = vpop.f32.mrb[0].mxu0
        %v3693 = vpop.f32.mrb[0].mxu0
        %v3694 = vpop.f32.mrb[0].mxu0
        %3695 = vdwg.mxu0
        %3696 = vmatprep.subr.bf16.mxu0 0
        %3697 = vmatpush1.bf16.msra.mxu0 %v3608
        %3698 = vmatprep.subr.bf16.mxu0 0
        %3699 = vmatpush1.bf16.msra.mxu0 %v3609
        %3700 = vmatprep.subr.bf16.mxu0 0
        %3701 = vmatpush1.bf16.msra.mxu0 %v3610
        %3702 = vmatprep.subr.bf16.mxu0 0
        %3703 = vmatpush1.bf16.msra.mxu0 %v3611
        %3704 = vmatprep.subr.bf16.mxu0 0
        %3705 = vmatpush1.bf16.msra.mxu0 %v3612
        %3706 = vmatprep.subr.bf16.mxu0 0
        %3707 = vmatpush1.bf16.msra.mxu0 %v3613
        %3708 = vmatprep.subr.bf16.mxu0 0
        %3709 = vmatpush1.bf16.msra.mxu0 %v3614
        %3710 = vmatprep.subr.bf16.mxu0 0
        %3711 = vmatpush1.bf16.msra.mxu0 %v3615
        %3712 = vmatprep.subr.bf16.mxu0 0
        %3713 = vmatpush1.bf16.msra.mxu0 %v3616
        %3714 = vmatprep.subr.bf16.mxu0 0
        %3715 = vmatpush1.bf16.msra.mxu0 %v3617
        %3716 = vmatprep.subr.bf16.mxu0 0
        %3717 = vmatpush1.bf16.msra.mxu0 %v3618
        %3718 = vmatprep.subr.bf16.mxu0 0
        %3719 = vmatpush1.bf16.msra.mxu0 %v3619
        %3720 = vmatprep.subr.bf16.mxu0 0
        %3721 = vmatpush1.bf16.msra.mxu0 %v3620
        %3722 = vmatprep.subr.bf16.mxu0 0
        %3723 = vmatpush1.bf16.msra.mxu0 %v3621
        %3724 = vmatprep.subr.bf16.mxu0 0
        %3725 = vmatpush1.bf16.msra.mxu0 %v3622
        %3726 = vmatprep.subr.bf16.mxu0 0
        %3727 = vmatpush1.bf16.msra.mxu0 %v3623
        %3728 = vmatprep.mubr.bf16.mxu0 %v3455
        %3729 = vmatmul.mubr.bf16.gmra.mrb[0].mxu0 %v3454
        %v3730 = vpop.f32.mrb[0].mxu0
        %v3731 = vadd.f32 %v3691, %v3730
        %v3732 = vpop.f32.mrb[0].mxu0
        %v3733 = vpop.f32.mrb[0].mxu0
        %v3734 = vpop.f32.mrb[0].mxu0
        %3735 = vdwg.mxu0
        %v3736 = vadd.f32 %v3731, %v3051
        %s3737 = scalar_lea.vmem %s17, 1
        %v3738 = vld [vmem:[%s3737] sm:$0x1]
        %s3739 = scalar_lea.vmem %s18, 1
        %v3740 = vld [vmem:[%s3739] sm:$0x1]
        %3741 = vadd.xlane.f32.xlu0 %v3736
        %v3742 = vpop.xlane.xlu0 %3741
        %v3743 = vmul.f32 %v3742, %v958
        %v3744 = vsub.f32 %v3736, %v3743
        %v3745 = vmul.f32 %v3744, %v3744
        %3746 = vadd.xlane.f32.xlu0 %v3745
        %v3747 = vpop.xlane.xlu0 %3746
        %v3748 = vmul.f32 %v3747, %v958
        %v3749 = vadd.f32 %v3748, 1e-12
        %v3750 = vrsqrt.pop %v3749
        %v3751 = vmul.f32 %v3744, %v3750
        %v3753 = vlaneseq
        %v3754 = vshrl.u32 %v3753, 7
        %v3755 = vsub.s32 0, %v3754
        %v3756 = vrot.slane %v3738, %v3755
        %v3758 = vmul.f32 %v3751, %v3756
        %v3760 = vlaneseq
        %v3761 = vshrl.u32 %v3760, 7
        %v3762 = vsub.s32 0, %v3761
        %v3763 = vrot.slane %v3740, %v3762
        %v3765 = vadd.f32 %v3758, %v3763
        %3766 = vst [vmem:[%s823] sm:$0xff] %v3765
        %v3767 = vld [vmem:[#allocation16] sm:$0xff]
        %v3768 = vld [vmem:[#allocation16 + $0x8] sm:$0xff]
        %v3769 = vld [vmem:[#allocation16 + $0x10] sm:$0xff]
        %v3770 = vld [vmem:[#allocation16 + $0x18] sm:$0xff]
        %v3771 = vld [vmem:[#allocation16 + $0x20] sm:$0xff]
        %v3772 = vld [vmem:[#allocation16 + $0x28] sm:$0xff]
        %v3773 = vld [vmem:[#allocation16 + $0x30] sm:$0xff]
        %v3774 = vld [vmem:[#allocation16 + $0x38] sm:$0xff]
        %v3775 = vld [vmem:[#allocation16 + $0x40] sm:$0xff]
        %v3776 = vld [vmem:[#allocation16 + $0x48] sm:$0xff]
        %v3777 = vld [vmem:[#allocation16 + $0x50] sm:$0xff]
        %v3778 = vld [vmem:[#allocation16 + $0x58] sm:$0xff]
        %v3779 = vld [vmem:[#allocation16 + $0x60] sm:$0xff]
        %v3780 = vld [vmem:[#allocation16 + $0x68] sm:$0xff]
        %v3781 = vld [vmem:[#allocation16 + $0x70] sm:$0xff]
        %v3782 = vld [vmem:[#allocation16 + $0x78] sm:$0xff]
        %v3783 = vpack.c.bf16 %v3765, %v3765
        %v3784 = vld [vmem:[%s20] sm:$0x3]
        %v3786 = vlaneseq
        %v3787 = vshrl.u32 %v3786, 7
        %v3788 = vsub.s32 0, %v3787
        %v3789 = vrot.slane %v3784, %v3788
        %v3790 = vlaneseq
        %v3791 = vshrl.u32 %v3790, 7
        %v3792 = vsub.s32 1, %v3791
        %v3793 = vrot.slane %v3784, %v3792
        %v3812 = vunpack.c.l.b16 %v3767
        %v3813 = vunpack.c.h.b16 %v3767
        %v3814 = vunpack.c.l.b16 %v3768
        %v3815 = vunpack.c.h.b16 %v3768
        %v3816 = vunpack.c.l.b16 %v3769
        %v3817 = vunpack.c.h.b16 %v3769
        %v3818 = vunpack.c.l.b16 %v3770
        %v3819 = vunpack.c.h.b16 %v3770
        %v3820 = vunpack.c.l.b16 %v3771
        %v3821 = vunpack.c.h.b16 %v3771
        %v3822 = vunpack.c.l.b16 %v3772
        %v3823 = vunpack.c.h.b16 %v3772
        %v3824 = vunpack.c.l.b16 %v3773
        %v3825 = vunpack.c.h.b16 %v3773
        %v3826 = vunpack.c.l.b16 %v3774
        %v3827 = vunpack.c.h.b16 %v3774
        %v3828 = vunpack.c.l.b16 %v3775
        %v3829 = vunpack.c.h.b16 %v3775
        %v3830 = vunpack.c.l.b16 %v3776
        %v3831 = vunpack.c.h.b16 %v3776
        %v3832 = vunpack.c.l.b16 %v3777
        %v3833 = vunpack.c.h.b16 %v3777
        %v3834 = vunpack.c.l.b16 %v3778
        %v3835 = vunpack.c.h.b16 %v3778
        %v3836 = vunpack.c.l.b16 %v3779
        %v3837 = vunpack.c.h.b16 %v3779
        %v3838 = vunpack.c.l.b16 %v3780
        %v3839 = vunpack.c.h.b16 %v3780
        %v3840 = vunpack.c.l.b16 %v3781
        %v3841 = vunpack.c.h.b16 %v3781
        %v3842 = vunpack.c.l.b16 %v3782
        %v3843 = vunpack.c.h.b16 %v3782
        %v3844 = vpack.c.b16 %v3814, %v3812
        %v3845 = vpack.c.b16 %v3815, %v3813
        %v3846 = vpack.c.b16 %v3818, %v3816
        %v3847 = vpack.c.b16 %v3819, %v3817
        %v3848 = vpack.c.b16 %v3822, %v3820
        %v3849 = vpack.c.b16 %v3823, %v3821
        %v3850 = vpack.c.b16 %v3826, %v3824
        %v3851 = vpack.c.b16 %v3827, %v3825
        %v3852 = vpack.c.b16 %v3830, %v3828
        %v3853 = vpack.c.b16 %v3831, %v3829
        %v3854 = vpack.c.b16 %v3834, %v3832
        %v3855 = vpack.c.b16 %v3835, %v3833
        %v3856 = vpack.c.b16 %v3838, %v3836
        %v3857 = vpack.c.b16 %v3839, %v3837
        %v3858 = vpack.c.b16 %v3842, %v3840
        %v3859 = vpack.c.b16 %v3843, %v3841
        %3876 = vmatprep.subr.bf16.mxu0 %v3845
        %3877 = vmatpush1.bf16.msra.mxu0 %v3844
        %3878 = vmatprep.subr.bf16.mxu0 %v3847
        %3879 = vmatpush1.bf16.msra.mxu0 %v3846
        %3880 = vmatprep.subr.bf16.mxu0 %v3849
        %3881 = vmatpush1.bf16.msra.mxu0 %v3848
        %3882 = vmatprep.subr.bf16.mxu0 %v3851
        %3883 = vmatpush1.bf16.msra.mxu0 %v3850
        %3884 = vmatprep.subr.bf16.mxu0 %v3853
        %3885 = vmatpush1.bf16.msra.mxu0 %v3852
        %3886 = vmatprep.subr.bf16.mxu0 %v3855
        %3887 = vmatpush1.bf16.msra.mxu0 %v3854
        %3888 = vmatprep.subr.bf16.mxu0 %v3857
        %3889 = vmatpush1.bf16.msra.mxu0 %v3856
        %3890 = vmatprep.subr.bf16.mxu0 %v3859
        %3891 = vmatpush1.bf16.msra.mxu0 %v3858
        %3892 = vmatprep.subr.bf16.mxu0 0
        %3893 = vmatpush1.bf16.msra.mxu0 0
        %3894 = vmatprep.subr.bf16.mxu0 0
        %3895 = vmatpush1.bf16.msra.mxu0 0
        %3896 = vmatprep.subr.bf16.mxu0 0
        %3897 = vmatpush1.bf16.msra.mxu0 0
        %3898 = vmatprep.subr.bf16.mxu0 0
        %3899 = vmatpush1.bf16.msra.mxu0 0
        %3900 = vmatprep.subr.bf16.mxu0 0
        %3901 = vmatpush1.bf16.msra.mxu0 0
        %3902 = vmatprep.subr.bf16.mxu0 0
        %3903 = vmatpush1.bf16.msra.mxu0 0
        %3904 = vmatprep.subr.bf16.mxu0 0
        %3905 = vmatpush1.bf16.msra.mxu0 0
        %3906 = vmatprep.subr.bf16.mxu0 0
        %3907 = vmatpush1.bf16.msra.mxu0 0
        %3908 = vmatprep.mubr.bf16.mxu0 0
        %3909 = vmatmul.mubr.bf16.gmra.mrb[0].mxu0 %v3783
        %v3910 = vpop.f32.mrb[0].mxu0
        %v3911 = vadd.f32 %v3789, %v3910
        %v3912 = vpop.f32.mrb[0].mxu0
        %v3913 = vadd.f32 %v3793, %v3912
        %v3914 = vpop.f32.mrb[0].mxu0
        %v3915 = vpop.f32.mrb[0].mxu0
        %3916 = vdwg.mxu0
        %3917 = vst [vmem:[%s816] sm:$0xff] %v3911
        %3918 = vst [vmem:[%s816 + $0x8] sm:$0xff] %v3913
        %s3919 = sand.u32 %s504, 1
        %s3920 = scalar_lea.sflag [#allocation4], %s3919
        %s3921 = sand.u32 %s504, 1
        %s3922 = smul.addr %s3921, 16
        %s3923 = scalar_lea.vmem [#allocation17], %s3922
        %s3924 = sand.u32 %s530, 1
        %s3925 = scalar_lea.sflag [#allocation19], %s3924
        %s3926 = sand.u32 %s530, 1
        %s3927 = smul.addr %s3926, 8
        %s3928 = scalar_lea.vmem [#allocation18], %s3927
        // Predicated region
        $region141: #{bert_sentence_encoder_forward.1} parent=103 // pred_check
          %p3929 = pneg %p514
        $region142: #{bert_sentence_encoder_forward.1} parent=103 // pred_check_branch
          %3931 = sbr.rel (%p3929) target = $region144
        $region143: #{bert_sentence_encoder_forward.1} parent=103 // pred_region
          %s3933 = ssub.s32 256, 256
          %3934 = vsyncadd %s3920, %s3933
          %s3935 = smul.addr %s45, 2
          %s3936 = smul.addr %s3935, 128
          %s3937 = scalar_lea.hbm %s21, %s3936
          %s3939 = sshll.u32 %s3923, 4
          %s3940 = int_to_ptr.vmem [resolvable:$true] %s3939
          %3942 = dma.vmem_to_hbm [thread:$0]  %s3940, 256, %s3937, %s3920
        $region144: #{bert_sentence_encoder_forward.1} parent=103 // pred_fallthru
          _
        // Predicated region
        $region145: #{bert_sentence_encoder_forward.1} parent=103 // pred_check
          %p3943 = pneg %p540
        $region146: #{bert_sentence_encoder_forward.1} parent=103 // pred_check_branch
          %3945 = sbr.rel (%p3943) target = $region148
        $region147: #{bert_sentence_encoder_forward.1} parent=103 // pred_region
          %s3947 = ssub.s32 128, 128
          %3948 = vsyncadd %s3925, %s3947
          %s3949 = smul.addr %s45, 128
          %s3950 = scalar_lea.hbm %s22, %s3949
          %s3952 = sshll.u32 %s3928, 4
          %s3953 = int_to_ptr.vmem [resolvable:$true] %s3952
          %3955 = dma.vmem_to_hbm [thread:$0]  %s3953, 128, %s3950, %s3925
        $region148: #{bert_sentence_encoder_forward.1} parent=103 // pred_fallthru
          _
      $region104: #{bert_sentence_encoder_forward.1} parent=5 // pred_fallthru
        _
      %p3956 = scmp.le.s32.totalorder 2, %s40
      // Predicated region
      $region149: #{bert_sentence_encoder_forward.1} parent=5 // pred_check
        %p3957 = pneg %p3956
      $region150: #{bert_sentence_encoder_forward.1} parent=5 // pred_check_branch
        %3959 = sbr.rel (%p3957) target = $region152
      $region151: #{bert_sentence_encoder_forward.1} parent=5 // pred_region
        %s3960 = ssub.s32 %s40, 2
        // Predicated region
        $region153: #{bert_sentence_encoder_forward.1} parent=151 // pred_check
          %p3961 = pneg %p520
        $region154: #{bert_sentence_encoder_forward.1} parent=151 // pred_check_branch
          %3963 = sbr.rel (%p3961) target = $region156
        $region155: #{bert_sentence_encoder_forward.1} parent=151 // pred_region
          %s3964 = sand.u32 %s505, 1
          %s3965 = scalar_lea.sflag [#allocation4], %s3964
          %s3966 = sand.u32 %s505, 1
          %s3967 = smul.addr %s3966, 16
          %s3968 = scalar_lea.vmem [#allocation17], %s3967
          %3969 = dma.done %s3965, 256
        $region156: #{bert_sentence_encoder_forward.1} parent=151 // pred_fallthru
          _
        // Predicated region
        $region157: #{bert_sentence_encoder_forward.1} parent=151 // pred_check
          %p3970 = pneg %p546
        $region158: #{bert_sentence_encoder_forward.1} parent=151 // pred_check_branch
          %3972 = sbr.rel (%p3970) target = $region160
        $region159: #{bert_sentence_encoder_forward.1} parent=151 // pred_region
          %s3973 = sand.u32 %s531, 1
          %s3974 = scalar_lea.sflag [#allocation19], %s3973
          %s3975 = sand.u32 %s531, 1
          %s3976 = smul.addr %s3975, 8
          %s3977 = scalar_lea.vmem [#allocation18], %s3976
          %3978 = dma.done %s3974, 128
        $region160: #{bert_sentence_encoder_forward.1} parent=151 // pred_fallthru
          _
      $region152: #{bert_sentence_encoder_forward.1} parent=5 // pred_fallthru
        _
    $region6: #{bert_sentence_encoder_forward.1} parent=1 // loop_footer
      %s44 = sadd.s32 1, %s40
    $region7: #{bert_sentence_encoder_forward.1} parent=1 // loop_footer_branch
      %39 = sbr.rel target = $region3
    $region8: #{bert_sentence_encoder_forward.1} parent=1 // loop_exit
      _
    %3979 = vsyncpa [#allocation3], 1
    %s3980 = scalar_lea.sflag [#allocation3], 1
    %3981 = vsyncpa %s3980, 1
    %3982 = vsyncpa [#allocation6], 1
    %3983 = vsyncpa [#allocation9], 1
    %3984 = vsyncpa [#allocation12], 1
    %3985 = vsyncpa [#allocation15], 1
    %3986 = vsyncpa [#allocation4], 1
    %s3987 = scalar_lea.sflag [#allocation4], 1
    %3988 = vsyncpa %s3987, 1
    %3989 = vsyncpa [#allocation19], 1
    %s3990 = scalar_lea.sflag [#allocation19], 1
    %3991 = vsyncpa %s3990, 1

</llo_original>
